<compile_context>
chip_gen: v7x
topology: tpu7x:2x2x1
jax: 0.10.0
libtpu: 0.0.40
codegen_flags: <defaults>
</compile_context>

<pallas_src>
import jax
import jax.numpy as jnp
from jax.experimental import pallas as pl
from jax.experimental.pallas import tpu as pltpu


def _round_up(x, m):
    return (x + m - 1) // m * m


def _sublane_pack(itemsize):
    # values per sublane group for this dtype: f32 -> 8, bf16 -> 16, int8 -> 32
    return 8 * max(1, 4 // itemsize)


def _vmem_budget_bytes():
    """(explicit scoped-VMEM limit, budget for this kernel's buffers)."""
    try:
        phys = int(pltpu.get_tpu_info().vmem_capacity_bytes)
    except Exception:
        phys = 64 << 20            # conservative fallback: v7x has 64 MiB / TC
    limit = min(phys * 3 // 4, 100 << 20)   # v7x ~48 MiB, v5e/v6e ~96 MiB
    budget = max(limit - (2 << 20), 4 << 20)  # headroom for internal scratch
    return int(limit), int(budget)


def _pool_then_fc_kernel(x_ref, w_ref, b_ref, o_ref):
    # x_ref: (tm, C, S)   batch tile (S on lanes; only VMEM is lane-padded)
    # w_ref: (C, Kp)      fc weight, transposed to (in, out), 1/S folded in
    # b_ref: (1, Kp)      fc bias (zero-padded to Kp)
    # o_ref: (tm, Kp)
    # Global average pool == sum over S (scale folded into w); accumulate the
    # reduction in f32 without widening the whole tile first.
    pooled = jnp.sum(x_ref[...], axis=-1, dtype=jnp.float32)          # (tm, C)
    logits = jnp.dot(pooled.astype(w_ref.dtype), w_ref[...],
                     preferred_element_type=jnp.float32)              # (tm, Kp)
    o_ref[...] = (logits + b_ref[...].astype(jnp.float32)).astype(o_ref.dtype)


def _fused_fc_kernel(x_ref, w_ref, b_ref, o_ref):
    # x_ref: (tm, C*S)    lane-dense batch tile
    # w_ref: (C*S, Kp)    fc weight replicated S times along rows, 1/S folded
    # b_ref: (1, Kp)
    # o_ref: (tm, Kp)
    logits = jnp.dot(x_ref[...], w_ref[...],
                     preferred_element_type=jnp.float32)              # (tm, Kp)
    o_ref[...] = (logits + b_ref[...].astype(jnp.float32)).astype(o_ref.dtype)


def cls_head_forward(x, fc_weight, fc_bias,
                     temporal_feature_size, spatial_feature_size,
                     *, fold_pool_into_matmul=None):
    """x: (N, C, T, H, W) or (N, C, H, W) array (PyTorch NCTHW convention).
    fc_weight: (num_classes, in_channels)   (PyTorch nn.Linear convention)
    fc_bias:   (num_classes,)
    """
    if x.ndim == 4:                       # mirror x.unsqueeze(2)
        x = x[:, :, None, :, :]
    N, C, T, H, W = x.shape
    assert C == fc_weight.shape[1]
    assert T == temporal_feature_size
    assert H == spatial_feature_size and W == spatial_feature_size

    S = T * H * W
    K = fc_weight.shape[0]
    Kp = _round_up(K, 128)                # lane-dense output columns

    out_dtype = jnp.result_type(x.dtype, fc_weight.dtype)
    x_bytes = jnp.dtype(x.dtype).itemsize
    w_bytes = jnp.dtype(fc_weight.dtype).itemsize
    o_bytes = jnp.dtype(out_dtype).itemsize
    sub = _sublane_pack(x_bytes)

    vmem_limit, budget = _vmem_budget_bytes()

    # Path choice: fold the avg-pool into the matmul (x block fully lane-dense)
    # when the S-replicated weight stays small; otherwise keep the small
    # (C, Kp) weight and reduce over S inside the kernel.
    w_big_bytes = C * S * Kp * w_bytes
    if fold_pool_into_matmul is None:
        fold_pool_into_matmul = (2 * w_big_bytes) <= budget // 4

    # --- constant operands (tiny; built once per call) -----------------------
    inv_s = 1.0 / float(S)
    w_t = (fc_weight.astype(jnp.float32).T * inv_s).astype(fc_weight.dtype)   # (C, K)
    b2d = fc_bias.reshape(1, K).astype(jnp.float32)
    if Kp != K:
        w_t = jnp.pad(w_t, ((0, 0), (0, Kp - K)))
        b2d = jnp.pad(b2d, ((0, 0), (0, Kp - K)))

    # --- honest (padded) VMEM footprint per batch row ------------------------
    if fold_pool_into_matmul:
        row_bytes = _round_up(C * S, 128) * x_bytes                    # dense
        fixed_bytes = 2 * w_big_bytes + 2 * 8 * Kp * 4                 # w + bias
    else:
        row_bytes = _round_up(C, sub) * _round_up(S, 128) * x_bytes    # padded
        w_pack = _sublane_pack(w_bytes)
        fixed_bytes = 2 * _round_up(C, w_pack) * Kp * w_bytes + 2 * 8 * Kp * 4

    avail = max(budget - fixed_bytes, 0)
    per_row = 2 * row_bytes + 2 * Kp * o_bytes     # x + out double-buffers
    tm = max(sub, (avail // per_row) // sub * sub)
    tm = min(tm, 1024)
    if N > sub:
        # Keep >= 2 grid steps: pipelines the x DMA against compute and lets
        # dimension_semantics=("parallel",) split the batch across v7x's TCs.
        tm = min(tm, _round_up(pl.cdiv(N, 2), sub))
    else:
        tm = min(tm, _round_up(N, sub))
    tm = max(tm, sub)

    grid = (pl.cdiv(N, tm),)

    if fold_pool_into_matmul:
        x_in = x.reshape(N, C * S)            # free: contiguous view
        w_in = jnp.broadcast_to(w_t[:, None, :], (C, S, Kp)).reshape(C * S, Kp)
        kernel = _fused_fc_kernel
        x_spec = pl.BlockSpec((tm, C * S), lambda i: (i, 0))
        w_spec = pl.BlockSpec((C * S, Kp), lambda i: (0, 0))
    else:
        x_in = x.reshape(N, C, S)             # free: contiguous view
        w_in = w_t
        kernel = _pool_then_fc_kernel
        x_spec = pl.BlockSpec((tm, C, S), lambda i: (i, 0, 0))
        w_spec = pl.BlockSpec((C, Kp), lambda i: (0, 0))

    # TODO(synk): nn.Dropout(p=0.8) is identity in eval mode; training-mode
    # dropout (random mask + 1/(1-p) scale) is not implemented here.
    out = pl.pallas_call(
        kernel,
        out_shape=jax.ShapeDtypeStruct((N, Kp), out_dtype),
        grid=grid,
        in_specs=[
            x_spec,                                        # batch-tiled x
            w_spec,                                        # resident weight
            pl.BlockSpec((1, Kp), lambda i: (0, 0)),       # resident bias
        ],
        out_specs=pl.BlockSpec((tm, Kp), lambda i: (i, 0)),
        compiler_params=pltpu.CompilerParams(
            dimension_semantics=("parallel",),             # v7x: 2 TCs
            vmem_limit_bytes=vmem_limit,
        ),
    )(x_in, w_in, b2d)

    return out[:, :K]


if __name__ == "__main__":
    # Small but module-consistent shapes:
    #   batch=2, in_channels=128, temporal=1, spatial=7, num_classes=101
    # num_classes=101 (the module default) exercises the K -> 128 lane padding.
    N = 2
    in_channels = 128
    temporal_feature_size = 1
    spatial_feature_size = 7
    num_classes = 101
    init_std = 0.01

    key = jax.random.PRNGKey(0)
    kx, kw = jax.random.split(key)

    x = jax.random.normal(
        kx, (N, in_channels, temporal_feature_size,
             spatial_feature_size, spatial_feature_size), dtype=jnp.float32)

    # Deterministic parameter init (matches init_weights: N(0, init_std), bias=0).
    fc_weight = init_std * jax.random.normal(
        kw, (num_classes, in_channels), dtype=jnp.float32)
    fc_bias = jnp.zeros((num_classes,), dtype=jnp.float32)

    # Reference in plain JAX.
    pooled_ref = jnp.mean(x.reshape(N, in_channels, -1), axis=-1)
    ref = pooled_ref @ fc_weight.T + fc_bias

    # Exercise both kernel variants: the lane-dense fused-matmul path and the
    # in-kernel-pool path used for large in_channels.
    for fold in (True, False):
        out = cls_head_forward(x, fc_weight, fc_bias,
                               temporal_feature_size, spatial_feature_size,
                               fold_pool_into_matmul=fold)
        out = jax.block_until_ready(out)
        assert out.shape == (N, num_classes)
        assert out.dtype == ref.dtype
        # MXU f32 matmuls may run as bf16 passes depending on default
        # precision, hence the modest tolerance.
        max_err = float(jnp.max(jnp.abs(out - ref)))
        assert jnp.allclose(out, ref, atol=2e-4, rtol=2e-3), max_err

    # 4-D input path (module unsqueezes the temporal dim).
    out4 = cls_head_forward(x[:, :, 0], fc_weight, fc_bias,
                            temporal_feature_size, spatial_feature_size)
    out4 = jax.block_until_ready(out4)
    assert jnp.allclose(out4, ref, atol=2e-4, rtol=2e-3)

    print("KERNEL_OK")
</pallas_src>

<mosaic_0001>
module attributes {stable_mosaic.version = 11 : i64} {
  func.func @_fused_fc_kernel(%arg0: i32, %arg1: memref<8x6272xf32, #tpu.memory_space<vmem>>, %arg2: memref<6272x128xf32, #tpu.memory_space<vmem>>, %arg3: memref<1x128xf32, #tpu.memory_space<vmem>>, %arg4: memref<8x128xf32, #tpu.memory_space<vmem>>) attributes {dimension_semantics = [#tpu.dimension_semantics<parallel>], iteration_bounds = array<i64: 1>, scalar_prefetch = 0 : i64, scratch_operands = 0 : i64, tpu.core_type = #tpu.core_type<tc>, window_params = [{transform_indices = @transform_0, window_bounds = array<i64: 8, 6272>}, {pipeline_mode = #tpu.pipeline_mode<synchronous>, transform_indices = @transform_1, window_bounds = array<i64: 6272, 128>}, {pipeline_mode = #tpu.pipeline_mode<synchronous>, transform_indices = @transform_2, window_bounds = array<i64: 1, 128>}, {transform_indices = @transform_3, window_bounds = array<i64: 8, 128>}]} {
    %c0 = arith.constant 0 : index
    %c0_0 = arith.constant 0 : index
    %0 = vector.load %arg1[%c0, %c0_0] : memref<8x6272xf32, #tpu.memory_space<vmem>>, vector<8x6272xf32>
    %c0_1 = arith.constant 0 : index
    %c0_2 = arith.constant 0 : index
    %1 = vector.load %arg2[%c0_1, %c0_2] : memref<6272x128xf32, #tpu.memory_space<vmem>>, vector<6272x128xf32>
    %cst = arith.constant dense<0.000000e+00> : vector<8x128xf32>
    %2 = tpu.matmul %0, %1, %cst {dimension_numbers = #tpu.dot_dimension_numbers<[1], [0], [0], [1], [0, 0, 1, 1], [], []>} : vector<8x6272xf32>, vector<6272x128xf32>, vector<8x128xf32> -> vector<8x128xf32>
    %c0_3 = arith.constant 0 : index
    %c0_4 = arith.constant 0 : index
    %3 = vector.load %arg3[%c0_3, %c0_4] : memref<1x128xf32, #tpu.memory_space<vmem>>, vector<1x128xf32>
    %4 = vector.broadcast %3 : vector<1x128xf32> to vector<8x128xf32>
    %5 = arith.addf %2, %4 : vector<8x128xf32>
    %c0_5 = arith.constant 0 : index
    %c0_6 = arith.constant 0 : index
    %6 = vector.load %arg4[%c0_5, %c0_6] : memref<8x128xf32, #tpu.memory_space<vmem>>, vector<8x128xf32>
    tpu.vector_store %arg4[%c0_5, %c0_6], %5 {strides = array<i32>} : memref<8x128xf32, #tpu.memory_space<vmem>>, vector<8x128xf32>,
    return
  }
  func.func @transform_0(%arg0: i32) -> (i32, i32) {
    %c0_i32 = arith.constant 0 : i32
    %c0_i32_0 = arith.constant 0 : i32
    return %arg0, %c0_i32 : i32, i32
  }
  func.func @transform_1(%arg0: i32) -> (i32, i32) {
    %c0_i32 = arith.constant 0 : i32
    %c0_i32_0 = arith.constant 0 : i32
    %c0_i32_1 = arith.constant 0 : i32
    return %c0_i32, %c0_i32_0 : i32, i32
  }
  func.func @transform_2(%arg0: i32) -> (i32, i32) {
    %c0_i32 = arith.constant 0 : i32
    %c0_i32_0 = arith.constant 0 : i32
    %c0_i32_1 = arith.constant 0 : i32
    return %c0_i32, %c0_i32_0 : i32, i32
  }
  func.func @transform_3(%arg0: i32) -> (i32, i32) {
    %c0_i32 = arith.constant 0 : i32
    %c0_i32_0 = arith.constant 0 : i32
    return %arg0, %c0_i32 : i32, i32
  }
}

</mosaic_0001>

<llo_original>
// kernel: tpu_custom_call.1
$region0: #{tpu_custom_call.1}
  #allocation0 [shape = 'u32[]', space=smem, size = 0x4, offset = 0x4, fixed_abs, tag = 'smem constant byte address 0x4 - core index']
  #allocation1 [shape = 'u32[144,128]{1,0:T(1,128)}', space=vmem, size = 0x12000, scoped, tag = 'internal scratch']
  %s0 = inlined_call_operand.hbm [shape: f32[2,6272], index: 0, kind: input, shape index: {}]
  %s1 = inlined_call_operand.hbm [shape: f32[6272,128], index: 1, kind: input, shape index: {}]
  %s2 = inlined_call_operand.hbm [shape: f32[1,128], index: 2, kind: input, shape index: {}]
  %s3 = inlined_call_operand.hbm [shape: f32[2,128], index: 3, kind: output, shape index: {}]
  %s4 = sld [smem:[#allocation0]]
  $region34: #{tpu_custom_call.1} parent=0
    _
  %s6 = ssub.s32 1, %s4
  %s7 = scalar_select 0, %s6, %s4
  $region1: #{tpu_custom_call.1} parent=0
    #allocation2 [shape = 'u8[200704]{0}', space=vmem, size = 0x31000, scoped, tag = 'input window, operand 0, single buffered']
    #allocation3 [shape = 's32[1]{0}', space=sflag, size = 0x4, scoped, tag = 'scoped memory for tpu_custom_call.1']
    #allocation4 [shape = 's32[1]{0}', space=sflag, size = 0x4, scoped, tag = 'scoped memory for tpu_custom_call.1']
    #allocation5 [shape = 'u8[3211264]{0}', space=vmem, size = 0x310000, scoped, tag = 'input window, operand 1, single buffered']
    #allocation6 [shape = 's32[1]{0}', space=sflag, size = 0x4, scoped, tag = 'scoped memory for tpu_custom_call.1']
    #allocation7 [shape = 'u8[512]{0}', space=vmem, size = 0x400, scoped, tag = 'input window, operand 2, single buffered']
    #allocation8 [shape = 'u8[4096]{0}', space=vmem, size = 0x1000, scoped, tag = 'output window, operand 0, single buffered']
    %8 = vsyncpa [#allocation3], 0
    %9 = vsyncpa [#allocation6], 0
    %10 = vsyncpa [#allocation4], 0
    // Predicated region
    $region2: #{tpu_custom_call.1} parent=1 // pred_check
      _
    $region3: #{tpu_custom_call.1} parent=1 // pred_check_branch
      %12 = sbr.rel (0) target = $region5
    $region4: #{tpu_custom_call.1} parent=1 // pred_region
      %s14 = ssub.s32 6272, 1568
      %15 = vsyncadd [#allocation3], %s14
      %s16 = sshll.u32 [#allocation2], 4
      %s17 = int_to_ptr.vmem [resolvable:$true] %s16
      %22 = dma.hbm_to_vmem [thread:$0]  %s0, 1568, %s17, [#allocation3], 1568, 1568, 98
    $region5: #{tpu_custom_call.1} parent=1 // pred_fallthru
      _
    // Predicated region
    $region6: #{tpu_custom_call.1} parent=1 // pred_check
      _
    $region7: #{tpu_custom_call.1} parent=1 // pred_check_branch
      %24 = sbr.rel (0) target = $region9
    $region8: #{tpu_custom_call.1} parent=1 // pred_region
      %s26 = ssub.s32 100352, 100352
      %27 = vsyncadd [#allocation6], %s26
      %s28 = sshll.u32 [#allocation5], 4
      %s29 = int_to_ptr.vmem [resolvable:$true] %s28
      %34 = dma.hbm_to_vmem [thread:$0]  %s1, 100352, %s29, [#allocation6], 128, 128, 8
    $region9: #{tpu_custom_call.1} parent=1 // pred_fallthru
      _
    // Predicated region
    $region10: #{tpu_custom_call.1} parent=1 // pred_check
      _
    $region11: #{tpu_custom_call.1} parent=1 // pred_check_branch
      %36 = sbr.rel (0) target = $region13
    $region12: #{tpu_custom_call.1} parent=1 // pred_region
      %s38 = ssub.s32 16, 16
      %39 = vsyncadd [#allocation6], %s38
      %s41 = sshll.u32 [#allocation7], 4
      %s42 = int_to_ptr.vmem [resolvable:$true] %s41
      %44 = dma.hbm_to_vmem [thread:$0]  %s2, 16, %s42, [#allocation6]
    $region13: #{tpu_custom_call.1} parent=1 // pred_fallthru
      _
    // Predicated region
    $region14: #{tpu_custom_call.1} parent=1 // pred_check
      _
    $region15: #{tpu_custom_call.1} parent=1 // pred_check_branch
      %46 = sbr.rel (0) target = $region17
    $region16: #{tpu_custom_call.1} parent=1 // pred_region
      %47 = dma.done [#allocation3], 6272
    $region17: #{tpu_custom_call.1} parent=1 // pred_fallthru
      _
    // Predicated region
    $region18: #{tpu_custom_call.1} parent=1 // pred_check
      _
    $region19: #{tpu_custom_call.1} parent=1 // pred_check_branch
      %49 = sbr.rel (0) target = $region21
    $region20: #{tpu_custom_call.1} parent=1 // pred_region
      %50 = dma.done [#allocation6], 100352
    $region21: #{tpu_custom_call.1} parent=1 // pred_fallthru
      _
    // Predicated region
    $region22: #{tpu_custom_call.1} parent=1 // pred_check
      _
    $region23: #{tpu_custom_call.1} parent=1 // pred_check_branch
      %52 = sbr.rel (0) target = $region25
    $region24: #{tpu_custom_call.1} parent=1 // pred_region
      %53 = dma.done [#allocation6], 16
    $region25: #{tpu_custom_call.1} parent=1 // pred_fallthru
      _
    %v54 = vld [vmem:[#allocation2] sm:$0xff]
    %v55 = vld [vmem:[#allocation2 + $0x8] sm:$0xff]
    %v56 = vld [vmem:[#allocation2 + $0x10] sm:$0xff]
    %v57 = vld [vmem:[#allocation2 + $0x18] sm:$0xff]
    %v58 = vld [vmem:[#allocation2 + $0x20] sm:$0xff]
    %v59 = vld [vmem:[#allocation2 + $0x28] sm:$0xff]
    %v60 = vld [vmem:[#allocation2 + $0x30] sm:$0xff]
    %v61 = vld [vmem:[#allocation2 + $0x38] sm:$0xff]
    %v62 = vld [vmem:[#allocation2 + $0x40] sm:$0xff]
    %v63 = vld [vmem:[#allocation2 + $0x48] sm:$0xff]
    %v64 = vld [vmem:[#allocation2 + $0x50] sm:$0xff]
    %v65 = vld [vmem:[#allocation2 + $0x58] sm:$0xff]
    %v66 = vld [vmem:[#allocation2 + $0x60] sm:$0x3]
    %v67 = vld [vmem:[#allocation2 + $0x62] sm:$0xff]
    %v68 = vld [vmem:[#allocation2 + $0x6a] sm:$0xff]
    %v69 = vld [vmem:[#allocation2 + $0x72] sm:$0xff]
    %v70 = vld [vmem:[#allocation2 + $0x7a] sm:$0xff]
    %v71 = vld [vmem:[#allocation2 + $0x82] sm:$0xff]
    %v72 = vld [vmem:[#allocation2 + $0x8a] sm:$0xff]
    %v73 = vld [vmem:[#allocation2 + $0x92] sm:$0xff]
    %v74 = vld [vmem:[#allocation2 + $0x9a] sm:$0xff]
    %v75 = vld [vmem:[#allocation2 + $0xa2] sm:$0xff]
    %v76 = vld [vmem:[#allocation2 + $0xaa] sm:$0xff]
    %v77 = vld [vmem:[#allocation2 + $0xb2] sm:$0xff]
    %v78 = vld [vmem:[#allocation2 + $0xba] sm:$0xff]
    %v79 = vld [vmem:[#allocation2 + $0xc2] sm:$0x3]
    %v80 = vld [vmem:[#allocation2 + $0xc4] sm:$0xff]
    %v81 = vld [vmem:[#allocation2 + $0xcc] sm:$0xff]
    %v82 = vld [vmem:[#allocation2 + $0xd4] sm:$0xff]
    %v83 = vld [vmem:[#allocation2 + $0xdc] sm:$0xff]
    %v84 = vld [vmem:[#allocation2 + $0xe4] sm:$0xff]
    %v85 = vld [vmem:[#allocation2 + $0xec] sm:$0xff]
    %v86 = vld [vmem:[#allocation2 + $0xf4] sm:$0xff]
    %v87 = vld [vmem:[#allocation2 + $0xfc] sm:$0xff]
    %v88 = vld [vmem:[#allocation2 + $0x104] sm:$0xff]
    %v89 = vld [vmem:[#allocation2 + $0x10c] sm:$0xff]
    %v90 = vld [vmem:[#allocation2 + $0x114] sm:$0xff]
    %v91 = vld [vmem:[#allocation2 + $0x11c] sm:$0xff]
    %v92 = vld [vmem:[#allocation2 + $0x124] sm:$0x3]
    %v93 = vld [vmem:[#allocation2 + $0x126] sm:$0xff]
    %v94 = vld [vmem:[#allocation2 + $0x12e] sm:$0xff]
    %v95 = vld [vmem:[#allocation2 + $0x136] sm:$0xff]
    %v96 = vld [vmem:[#allocation2 + $0x13e] sm:$0xff]
    %v97 = vld [vmem:[#allocation2 + $0x146] sm:$0xff]
    %v98 = vld [vmem:[#allocation2 + $0x14e] sm:$0xff]
    %v99 = vld [vmem:[#allocation2 + $0x156] sm:$0xff]
    %v100 = vld [vmem:[#allocation2 + $0x15e] sm:$0xff]
    %v101 = vld [vmem:[#allocation2 + $0x166] sm:$0xff]
    %v102 = vld [vmem:[#allocation2 + $0x16e] sm:$0xff]
    %v103 = vld [vmem:[#allocation2 + $0x176] sm:$0xff]
    %v104 = vld [vmem:[#allocation2 + $0x17e] sm:$0xff]
    %v105 = vld [vmem:[#allocation2 + $0x186] sm:$0x3]
    %v106 = vld [vmem:[#allocation5] sm:$0xff]
    %v107 = vld [vmem:[#allocation5 + $0x8] sm:$0xff]
    %v108 = vld [vmem:[#allocation5 + $0x10] sm:$0xff]
    %v109 = vld [vmem:[#allocation5 + $0x18] sm:$0xff]
    %v110 = vld [vmem:[#allocation5 + $0x20] sm:$0xff]
    %v111 = vld [vmem:[#allocation5 + $0x28] sm:$0xff]
    %v112 = vld [vmem:[#allocation5 + $0x30] sm:$0xff]
    %v113 = vld [vmem:[#allocation5 + $0x38] sm:$0xff]
    %v114 = vld [vmem:[#allocation5 + $0x40] sm:$0xff]
    %v115 = vld [vmem:[#allocation5 + $0x48] sm:$0xff]
    %v116 = vld [vmem:[#allocation5 + $0x50] sm:$0xff]
    %v117 = vld [vmem:[#allocation5 + $0x58] sm:$0xff]
    %v118 = vld [vmem:[#allocation5 + $0x60] sm:$0xff]
    %v119 = vld [vmem:[#allocation5 + $0x68] sm:$0xff]
    %v120 = vld [vmem:[#allocation5 + $0x70] sm:$0xff]
    %v121 = vld [vmem:[#allocation5 + $0x78] sm:$0xff]
    %v122 = vld [vmem:[#allocation5 + $0x80] sm:$0xff]
    %v123 = vld [vmem:[#allocation5 + $0x88] sm:$0xff]
    %v124 = vld [vmem:[#allocation5 + $0x90] sm:$0xff]
    %v125 = vld [vmem:[#allocation5 + $0x98] sm:$0xff]
    %v126 = vld [vmem:[#allocation5 + $0xa0] sm:$0xff]
    %v127 = vld [vmem:[#allocation5 + $0xa8] sm:$0xff]
    %v128 = vld [vmem:[#allocation5 + $0xb0] sm:$0xff]
    %v129 = vld [vmem:[#allocation5 + $0xb8] sm:$0xff]
    %v130 = vld [vmem:[#allocation5 + $0xc0] sm:$0xff]
    %v131 = vld [vmem:[#allocation5 + $0xc8] sm:$0xff]
    %v132 = vld [vmem:[#allocation5 + $0xd0] sm:$0xff]
    %v133 = vld [vmem:[#allocation5 + $0xd8] sm:$0xff]
    %v134 = vld [vmem:[#allocation5 + $0xe0] sm:$0xff]
    %v135 = vld [vmem:[#allocation5 + $0xe8] sm:$0xff]
    %v136 = vld [vmem:[#allocation5 + $0xf0] sm:$0xff]
    %v137 = vld [vmem:[#allocation5 + $0xf8] sm:$0xff]
    %v138 = vld [vmem:[#allocation5 + $0x100] sm:$0xff]
    %v139 = vld [vmem:[#allocation5 + $0x108] sm:$0xff]
    %v140 = vld [vmem:[#allocation5 + $0x110] sm:$0xff]
    %v141 = vld [vmem:[#allocation5 + $0x118] sm:$0xff]
    %v142 = vld [vmem:[#allocation5 + $0x120] sm:$0xff]
    %v143 = vld [vmem:[#allocation5 + $0x128] sm:$0xff]
    %v144 = vld [vmem:[#allocation5 + $0x130] sm:$0xff]
    %v145 = vld [vmem:[#allocation5 + $0x138] sm:$0xff]
    %v146 = vld [vmem:[#allocation5 + $0x140] sm:$0xff]
    %v147 = vld [vmem:[#allocation5 + $0x148] sm:$0xff]
    %v148 = vld [vmem:[#allocation5 + $0x150] sm:$0xff]
    %v149 = vld [vmem:[#allocation5 + $0x158] sm:$0xff]
    %v150 = vld [vmem:[#allocation5 + $0x160] sm:$0xff]
    %v151 = vld [vmem:[#allocation5 + $0x168] sm:$0xff]
    %v152 = vld [vmem:[#allocation5 + $0x170] sm:$0xff]
    %v153 = vld [vmem:[#allocation5 + $0x178] sm:$0xff]
    %v154 = vld [vmem:[#allocation5 + $0x180] sm:$0xff]
    %v155 = vld [vmem:[#allocation5 + $0x188] sm:$0xff]
    %v156 = vld [vmem:[#allocation5 + $0x190] sm:$0xff]
    %v157 = vld [vmem:[#allocation5 + $0x198] sm:$0xff]
    %v158 = vld [vmem:[#allocation5 + $0x1a0] sm:$0xff]
    %v159 = vld [vmem:[#allocation5 + $0x1a8] sm:$0xff]
    %v160 = vld [vmem:[#allocation5 + $0x1b0] sm:$0xff]
    %v161 = vld [vmem:[#allocation5 + $0x1b8] sm:$0xff]
    %v162 = vld [vmem:[#allocation5 + $0x1c0] sm:$0xff]
    %v163 = vld [vmem:[#allocation5 + $0x1c8] sm:$0xff]
    %v164 = vld [vmem:[#allocation5 + $0x1d0] sm:$0xff]
    %v165 = vld [vmem:[#allocation5 + $0x1d8] sm:$0xff]
    %v166 = vld [vmem:[#allocation5 + $0x1e0] sm:$0xff]
    %v167 = vld [vmem:[#allocation5 + $0x1e8] sm:$0xff]
    %v168 = vld [vmem:[#allocation5 + $0x1f0] sm:$0xff]
    %v169 = vld [vmem:[#allocation5 + $0x1f8] sm:$0xff]
    %v170 = vld [vmem:[#allocation5 + $0x200] sm:$0xff]
    %v171 = vld [vmem:[#allocation5 + $0x208] sm:$0xff]
    %v172 = vld [vmem:[#allocation5 + $0x210] sm:$0xff]
    %v173 = vld [vmem:[#allocation5 + $0x218] sm:$0xff]
    %v174 = vld [vmem:[#allocation5 + $0x220] sm:$0xff]
    %v175 = vld [vmem:[#allocation5 + $0x228] sm:$0xff]
    %v176 = vld [vmem:[#allocation5 + $0x230] sm:$0xff]
    %v177 = vld [vmem:[#allocation5 + $0x238] sm:$0xff]
    %v178 = vld [vmem:[#allocation5 + $0x240] sm:$0xff]
    %v179 = vld [vmem:[#allocation5 + $0x248] sm:$0xff]
    %v180 = vld [vmem:[#allocation5 + $0x250] sm:$0xff]
    %v181 = vld [vmem:[#allocation5 + $0x258] sm:$0xff]
    %v182 = vld [vmem:[#allocation5 + $0x260] sm:$0xff]
    %v183 = vld [vmem:[#allocation5 + $0x268] sm:$0xff]
    %v184 = vld [vmem:[#allocation5 + $0x270] sm:$0xff]
    %v185 = vld [vmem:[#allocation5 + $0x278] sm:$0xff]
    %v186 = vld [vmem:[#allocation5 + $0x280] sm:$0xff]
    %v187 = vld [vmem:[#allocation5 + $0x288] sm:$0xff]
    %v188 = vld [vmem:[#allocation5 + $0x290] sm:$0xff]
    %v189 = vld [vmem:[#allocation5 + $0x298] sm:$0xff]
    %v190 = vld [vmem:[#allocation5 + $0x2a0] sm:$0xff]
    %v191 = vld [vmem:[#allocation5 + $0x2a8] sm:$0xff]
    %v192 = vld [vmem:[#allocation5 + $0x2b0] sm:$0xff]
    %v193 = vld [vmem:[#allocation5 + $0x2b8] sm:$0xff]
    %v194 = vld [vmem:[#allocation5 + $0x2c0] sm:$0xff]
    %v195 = vld [vmem:[#allocation5 + $0x2c8] sm:$0xff]
    %v196 = vld [vmem:[#allocation5 + $0x2d0] sm:$0xff]
    %v197 = vld [vmem:[#allocation5 + $0x2d8] sm:$0xff]
    %v198 = vld [vmem:[#allocation5 + $0x2e0] sm:$0xff]
    %v199 = vld [vmem:[#allocation5 + $0x2e8] sm:$0xff]
    %v200 = vld [vmem:[#allocation5 + $0x2f0] sm:$0xff]
    %v201 = vld [vmem:[#allocation5 + $0x2f8] sm:$0xff]
    %v202 = vld [vmem:[#allocation5 + $0x300] sm:$0xff]
    %v203 = vld [vmem:[#allocation5 + $0x308] sm:$0xff]
    %v204 = vld [vmem:[#allocation5 + $0x310] sm:$0xff]
    %v205 = vld [vmem:[#allocation5 + $0x318] sm:$0xff]
    %v206 = vld [vmem:[#allocation5 + $0x320] sm:$0xff]
    %v207 = vld [vmem:[#allocation5 + $0x328] sm:$0xff]
    %v208 = vld [vmem:[#allocation5 + $0x330] sm:$0xff]
    %v209 = vld [vmem:[#allocation5 + $0x338] sm:$0xff]
    %v210 = vld [vmem:[#allocation5 + $0x340] sm:$0xff]
    %v211 = vld [vmem:[#allocation5 + $0x348] sm:$0xff]
    %v212 = vld [vmem:[#allocation5 + $0x350] sm:$0xff]
    %v213 = vld [vmem:[#allocation5 + $0x358] sm:$0xff]
    %v214 = vld [vmem:[#allocation5 + $0x360] sm:$0xff]
    %v215 = vld [vmem:[#allocation5 + $0x368] sm:$0xff]
    %v216 = vld [vmem:[#allocation5 + $0x370] sm:$0xff]
    %v217 = vld [vmem:[#allocation5 + $0x378] sm:$0xff]
    %v218 = vld [vmem:[#allocation5 + $0x380] sm:$0xff]
    %v219 = vld [vmem:[#allocation5 + $0x388] sm:$0xff]
    %v220 = vld [vmem:[#allocation5 + $0x390] sm:$0xff]
    %v221 = vld [vmem:[#allocation5 + $0x398] sm:$0xff]
    %v222 = vld [vmem:[#allocation5 + $0x3a0] sm:$0xff]
    %v223 = vld [vmem:[#allocation5 + $0x3a8] sm:$0xff]
    %v224 = vld [vmem:[#allocation5 + $0x3b0] sm:$0xff]
    %v225 = vld [vmem:[#allocation5 + $0x3b8] sm:$0xff]
    %v226 = vld [vmem:[#allocation5 + $0x3c0] sm:$0xff]
    %v227 = vld [vmem:[#allocation5 + $0x3c8] sm:$0xff]
    %v228 = vld [vmem:[#allocation5 + $0x3d0] sm:$0xff]
    %v229 = vld [vmem:[#allocation5 + $0x3d8] sm:$0xff]
    %v230 = vld [vmem:[#allocation5 + $0x3e0] sm:$0xff]
    %v231 = vld [vmem:[#allocation5 + $0x3e8] sm:$0xff]
    %v232 = vld [vmem:[#allocation5 + $0x3f0] sm:$0xff]
    %v233 = vld [vmem:[#allocation5 + $0x3f8] sm:$0xff]
    %v234 = vld [vmem:[#allocation5 + $0x400] sm:$0xff]
    %v235 = vld [vmem:[#allocation5 + $0x408] sm:$0xff]
    %v236 = vld [vmem:[#allocation5 + $0x410] sm:$0xff]
    %v237 = vld [vmem:[#allocation5 + $0x418] sm:$0xff]
    %v238 = vld [vmem:[#allocation5 + $0x420] sm:$0xff]
    %v239 = vld [vmem:[#allocation5 + $0x428] sm:$0xff]
    %v240 = vld [vmem:[#allocation5 + $0x430] sm:$0xff]
    %v241 = vld [vmem:[#allocation5 + $0x438] sm:$0xff]
    %v242 = vld [vmem:[#allocation5 + $0x440] sm:$0xff]
    %v243 = vld [vmem:[#allocation5 + $0x448] sm:$0xff]
    %v244 = vld [vmem:[#allocation5 + $0x450] sm:$0xff]
    %v245 = vld [vmem:[#allocation5 + $0x458] sm:$0xff]
    %v246 = vld [vmem:[#allocation5 + $0x460] sm:$0xff]
    %v247 = vld [vmem:[#allocation5 + $0x468] sm:$0xff]
    %v248 = vld [vmem:[#allocation5 + $0x470] sm:$0xff]
    %v249 = vld [vmem:[#allocation5 + $0x478] sm:$0xff]
    %v250 = vld [vmem:[#allocation5 + $0x480] sm:$0xff]
    %v251 = vld [vmem:[#allocation5 + $0x488] sm:$0xff]
    %v252 = vld [vmem:[#allocation5 + $0x490] sm:$0xff]
    %v253 = vld [vmem:[#allocation5 + $0x498] sm:$0xff]
    %v254 = vld [vmem:[#allocation5 + $0x4a0] sm:$0xff]
    %v255 = vld [vmem:[#allocation5 + $0x4a8] sm:$0xff]
    %v256 = vld [vmem:[#allocation5 + $0x4b0] sm:$0xff]
    %v257 = vld [vmem:[#allocation5 + $0x4b8] sm:$0xff]
    %v258 = vld [vmem:[#allocation5 + $0x4c0] sm:$0xff]
    %v259 = vld [vmem:[#allocation5 + $0x4c8] sm:$0xff]
    %v260 = vld [vmem:[#allocation5 + $0x4d0] sm:$0xff]
    %v261 = vld [vmem:[#allocation5 + $0x4d8] sm:$0xff]
    %v262 = vld [vmem:[#allocation5 + $0x4e0] sm:$0xff]
    %v263 = vld [vmem:[#allocation5 + $0x4e8] sm:$0xff]
    %v264 = vld [vmem:[#allocation5 + $0x4f0] sm:$0xff]
    %v265 = vld [vmem:[#allocation5 + $0x4f8] sm:$0xff]
    %v266 = vld [vmem:[#allocation5 + $0x500] sm:$0xff]
    %v267 = vld [vmem:[#allocation5 + $0x508] sm:$0xff]
    %v268 = vld [vmem:[#allocation5 + $0x510] sm:$0xff]
    %v269 = vld [vmem:[#allocation5 + $0x518] sm:$0xff]
    %v270 = vld [vmem:[#allocation5 + $0x520] sm:$0xff]
    %v271 = vld [vmem:[#allocation5 + $0x528] sm:$0xff]
    %v272 = vld [vmem:[#allocation5 + $0x530] sm:$0xff]
    %v273 = vld [vmem:[#allocation5 + $0x538] sm:$0xff]
    %v274 = vld [vmem:[#allocation5 + $0x540] sm:$0xff]
    %v275 = vld [vmem:[#allocation5 + $0x548] sm:$0xff]
    %v276 = vld [vmem:[#allocation5 + $0x550] sm:$0xff]
    %v277 = vld [vmem:[#allocation5 + $0x558] sm:$0xff]
    %v278 = vld [vmem:[#allocation5 + $0x560] sm:$0xff]
    %v279 = vld [vmem:[#allocation5 + $0x568] sm:$0xff]
    %v280 = vld [vmem:[#allocation5 + $0x570] sm:$0xff]
    %v281 = vld [vmem:[#allocation5 + $0x578] sm:$0xff]
    %v282 = vld [vmem:[#allocation5 + $0x580] sm:$0xff]
    %v283 = vld [vmem:[#allocation5 + $0x588] sm:$0xff]
    %v284 = vld [vmem:[#allocation5 + $0x590] sm:$0xff]
    %v285 = vld [vmem:[#allocation5 + $0x598] sm:$0xff]
    %v286 = vld [vmem:[#allocation5 + $0x5a0] sm:$0xff]
    %v287 = vld [vmem:[#allocation5 + $0x5a8] sm:$0xff]
    %v288 = vld [vmem:[#allocation5 + $0x5b0] sm:$0xff]
    %v289 = vld [vmem:[#allocation5 + $0x5b8] sm:$0xff]
    %v290 = vld [vmem:[#allocation5 + $0x5c0] sm:$0xff]
    %v291 = vld [vmem:[#allocation5 + $0x5c8] sm:$0xff]
    %v292 = vld [vmem:[#allocation5 + $0x5d0] sm:$0xff]
    %v293 = vld [vmem:[#allocation5 + $0x5d8] sm:$0xff]
    %v294 = vld [vmem:[#allocation5 + $0x5e0] sm:$0xff]
    %v295 = vld [vmem:[#allocation5 + $0x5e8] sm:$0xff]
    %v296 = vld [vmem:[#allocation5 + $0x5f0] sm:$0xff]
    %v297 = vld [vmem:[#allocation5 + $0x5f8] sm:$0xff]
    %v298 = vld [vmem:[#allocation5 + $0x600] sm:$0xff]
    %v299 = vld [vmem:[#allocation5 + $0x608] sm:$0xff]
    %v300 = vld [vmem:[#allocation5 + $0x610] sm:$0xff]
    %v301 = vld [vmem:[#allocation5 + $0x618] sm:$0xff]
    %v302 = vld [vmem:[#allocation5 + $0x620] sm:$0xff]
    %v303 = vld [vmem:[#allocation5 + $0x628] sm:$0xff]
    %v304 = vld [vmem:[#allocation5 + $0x630] sm:$0xff]
    %v305 = vld [vmem:[#allocation5 + $0x638] sm:$0xff]
    %v306 = vld [vmem:[#allocation5 + $0x640] sm:$0xff]
    %v307 = vld [vmem:[#allocation5 + $0x648] sm:$0xff]
    %v308 = vld [vmem:[#allocation5 + $0x650] sm:$0xff]
    %v309 = vld [vmem:[#allocation5 + $0x658] sm:$0xff]
    %v310 = vld [vmem:[#allocation5 + $0x660] sm:$0xff]
    %v311 = vld [vmem:[#allocation5 + $0x668] sm:$0xff]
    %v312 = vld [vmem:[#allocation5 + $0x670] sm:$0xff]
    %v313 = vld [vmem:[#allocation5 + $0x678] sm:$0xff]
    %v314 = vld [vmem:[#allocation5 + $0x680] sm:$0xff]
    %v315 = vld [vmem:[#allocation5 + $0x688] sm:$0xff]
    %v316 = vld [vmem:[#allocation5 + $0x690] sm:$0xff]
    %v317 = vld [vmem:[#allocation5 + $0x698] sm:$0xff]
    %v318 = vld [vmem:[#allocation5 + $0x6a0] sm:$0xff]
    %v319 = vld [vmem:[#allocation5 + $0x6a8] sm:$0xff]
    %v320 = vld [vmem:[#allocation5 + $0x6b0] sm:$0xff]
    %v321 = vld [vmem:[#allocation5 + $0x6b8] sm:$0xff]
    %v322 = vld [vmem:[#allocation5 + $0x6c0] sm:$0xff]
    %v323 = vld [vmem:[#allocation5 + $0x6c8] sm:$0xff]
    %v324 = vld [vmem:[#allocation5 + $0x6d0] sm:$0xff]
    %v325 = vld [vmem:[#allocation5 + $0x6d8] sm:$0xff]
    %v326 = vld [vmem:[#allocation5 + $0x6e0] sm:$0xff]
    %v327 = vld [vmem:[#allocation5 + $0x6e8] sm:$0xff]
    %v328 = vld [vmem:[#allocation5 + $0x6f0] sm:$0xff]
    %v329 = vld [vmem:[#allocation5 + $0x6f8] sm:$0xff]
    %v330 = vld [vmem:[#allocation5 + $0x700] sm:$0xff]
    %v331 = vld [vmem:[#allocation5 + $0x708] sm:$0xff]
    %v332 = vld [vmem:[#allocation5 + $0x710] sm:$0xff]
    %v333 = vld [vmem:[#allocation5 + $0x718] sm:$0xff]
    %v334 = vld [vmem:[#allocation5 + $0x720] sm:$0xff]
    %v335 = vld [vmem:[#allocation5 + $0x728] sm:$0xff]
    %v336 = vld [vmem:[#allocation5 + $0x730] sm:$0xff]
    %v337 = vld [vmem:[#allocation5 + $0x738] sm:$0xff]
    %v338 = vld [vmem:[#allocation5 + $0x740] sm:$0xff]
    %v339 = vld [vmem:[#allocation5 + $0x748] sm:$0xff]
    %v340 = vld [vmem:[#allocation5 + $0x750] sm:$0xff]
    %v341 = vld [vmem:[#allocation5 + $0x758] sm:$0xff]
    %v342 = vld [vmem:[#allocation5 + $0x760] sm:$0xff]
    %v343 = vld [vmem:[#allocation5 + $0x768] sm:$0xff]
    %v344 = vld [vmem:[#allocation5 + $0x770] sm:$0xff]
    %v345 = vld [vmem:[#allocation5 + $0x778] sm:$0xff]
    %v346 = vld [vmem:[#allocation5 + $0x780] sm:$0xff]
    %v347 = vld [vmem:[#allocation5 + $0x788] sm:$0xff]
    %v348 = vld [vmem:[#allocation5 + $0x790] sm:$0xff]
    %v349 = vld [vmem:[#allocation5 + $0x798] sm:$0xff]
    %v350 = vld [vmem:[#allocation5 + $0x7a0] sm:$0xff]
    %v351 = vld [vmem:[#allocation5 + $0x7a8] sm:$0xff]
    %v352 = vld [vmem:[#allocation5 + $0x7b0] sm:$0xff]
    %v353 = vld [vmem:[#allocation5 + $0x7b8] sm:$0xff]
    %v354 = vld [vmem:[#allocation5 + $0x7c0] sm:$0xff]
    %v355 = vld [vmem:[#allocation5 + $0x7c8] sm:$0xff]
    %v356 = vld [vmem:[#allocation5 + $0x7d0] sm:$0xff]
    %v357 = vld [vmem:[#allocation5 + $0x7d8] sm:$0xff]
    %v358 = vld [vmem:[#allocation5 + $0x7e0] sm:$0xff]
    %v359 = vld [vmem:[#allocation5 + $0x7e8] sm:$0xff]
    %v360 = vld [vmem:[#allocation5 + $0x7f0] sm:$0xff]
    %v361 = vld [vmem:[#allocation5 + $0x7f8] sm:$0xff]
    %v362 = vld [vmem:[#allocation5 + $0x800] sm:$0xff]
    %v363 = vld [vmem:[#allocation5 + $0x808] sm:$0xff]
    %v364 = vld [vmem:[#allocation5 + $0x810] sm:$0xff]
    %v365 = vld [vmem:[#allocation5 + $0x818] sm:$0xff]
    %v366 = vld [vmem:[#allocation5 + $0x820] sm:$0xff]
    %v367 = vld [vmem:[#allocation5 + $0x828] sm:$0xff]
    %v368 = vld [vmem:[#allocation5 + $0x830] sm:$0xff]
    %v369 = vld [vmem:[#allocation5 + $0x838] sm:$0xff]
    %v370 = vld [vmem:[#allocation5 + $0x840] sm:$0xff]
    %v371 = vld [vmem:[#allocation5 + $0x848] sm:$0xff]
    %v372 = vld [vmem:[#allocation5 + $0x850] sm:$0xff]
    %v373 = vld [vmem:[#allocation5 + $0x858] sm:$0xff]
    %v374 = vld [vmem:[#allocation5 + $0x860] sm:$0xff]
    %v375 = vld [vmem:[#allocation5 + $0x868] sm:$0xff]
    %v376 = vld [vmem:[#allocation5 + $0x870] sm:$0xff]
    %v377 = vld [vmem:[#allocation5 + $0x878] sm:$0xff]
    %v378 = vld [vmem:[#allocation5 + $0x880] sm:$0xff]
    %v379 = vld [vmem:[#allocation5 + $0x888] sm:$0xff]
    %v380 = vld [vmem:[#allocation5 + $0x890] sm:$0xff]
    %v381 = vld [vmem:[#allocation5 + $0x898] sm:$0xff]
    %v382 = vld [vmem:[#allocation5 + $0x8a0] sm:$0xff]
    %v383 = vld [vmem:[#allocation5 + $0x8a8] sm:$0xff]
    %v384 = vld [vmem:[#allocation5 + $0x8b0] sm:$0xff]
    %v385 = vld [vmem:[#allocation5 + $0x8b8] sm:$0xff]
    %v386 = vld [vmem:[#allocation5 + $0x8c0] sm:$0xff]
    %v387 = vld [vmem:[#allocation5 + $0x8c8] sm:$0xff]
    %v388 = vld [vmem:[#allocation5 + $0x8d0] sm:$0xff]
    %v389 = vld [vmem:[#allocation5 + $0x8d8] sm:$0xff]
    %v390 = vld [vmem:[#allocation5 + $0x8e0] sm:$0xff]
    %v391 = vld [vmem:[#allocation5 + $0x8e8] sm:$0xff]
    %v392 = vld [vmem:[#allocation5 + $0x8f0] sm:$0xff]
    %v393 = vld [vmem:[#allocation5 + $0x8f8] sm:$0xff]
    %v394 = vld [vmem:[#allocation5 + $0x900] sm:$0xff]
    %v395 = vld [vmem:[#allocation5 + $0x908] sm:$0xff]
    %v396 = vld [vmem:[#allocation5 + $0x910] sm:$0xff]
    %v397 = vld [vmem:[#allocation5 + $0x918] sm:$0xff]
    %v398 = vld [vmem:[#allocation5 + $0x920] sm:$0xff]
    %v399 = vld [vmem:[#allocation5 + $0x928] sm:$0xff]
    %v400 = vld [vmem:[#allocation5 + $0x930] sm:$0xff]
    %v401 = vld [vmem:[#allocation5 + $0x938] sm:$0xff]
    %v402 = vld [vmem:[#allocation5 + $0x940] sm:$0xff]
    %v403 = vld [vmem:[#allocation5 + $0x948] sm:$0xff]
    %v404 = vld [vmem:[#allocation5 + $0x950] sm:$0xff]
    %v405 = vld [vmem:[#allocation5 + $0x958] sm:$0xff]
    %v406 = vld [vmem:[#allocation5 + $0x960] sm:$0xff]
    %v407 = vld [vmem:[#allocation5 + $0x968] sm:$0xff]
    %v408 = vld [vmem:[#allocation5 + $0x970] sm:$0xff]
    %v409 = vld [vmem:[#allocation5 + $0x978] sm:$0xff]
    %v410 = vld [vmem:[#allocation5 + $0x980] sm:$0xff]
    %v411 = vld [vmem:[#allocation5 + $0x988] sm:$0xff]
    %v412 = vld [vmem:[#allocation5 + $0x990] sm:$0xff]
    %v413 = vld [vmem:[#allocation5 + $0x998] sm:$0xff]
    %v414 = vld [vmem:[#allocation5 + $0x9a0] sm:$0xff]
    %v415 = vld [vmem:[#allocation5 + $0x9a8] sm:$0xff]
    %v416 = vld [vmem:[#allocation5 + $0x9b0] sm:$0xff]
    %v417 = vld [vmem:[#allocation5 + $0x9b8] sm:$0xff]
    %v418 = vld [vmem:[#allocation5 + $0x9c0] sm:$0xff]
    %v419 = vld [vmem:[#allocation5 + $0x9c8] sm:$0xff]
    %v420 = vld [vmem:[#allocation5 + $0x9d0] sm:$0xff]
    %v421 = vld [vmem:[#allocation5 + $0x9d8] sm:$0xff]
    %v422 = vld [vmem:[#allocation5 + $0x9e0] sm:$0xff]
    %v423 = vld [vmem:[#allocation5 + $0x9e8] sm:$0xff]
    %v424 = vld [vmem:[#allocation5 + $0x9f0] sm:$0xff]
    %v425 = vld [vmem:[#allocation5 + $0x9f8] sm:$0xff]
    %v426 = vld [vmem:[#allocation5 + $0xa00] sm:$0xff]
    %v427 = vld [vmem:[#allocation5 + $0xa08] sm:$0xff]
    %v428 = vld [vmem:[#allocation5 + $0xa10] sm:$0xff]
    %v429 = vld [vmem:[#allocation5 + $0xa18] sm:$0xff]
    %v430 = vld [vmem:[#allocation5 + $0xa20] sm:$0xff]
    %v431 = vld [vmem:[#allocation5 + $0xa28] sm:$0xff]
    %v432 = vld [vmem:[#allocation5 + $0xa30] sm:$0xff]
    %v433 = vld [vmem:[#allocation5 + $0xa38] sm:$0xff]
    %v434 = vld [vmem:[#allocation5 + $0xa40] sm:$0xff]
    %v435 = vld [vmem:[#allocation5 + $0xa48] sm:$0xff]
    %v436 = vld [vmem:[#allocation5 + $0xa50] sm:$0xff]
    %v437 = vld [vmem:[#allocation5 + $0xa58] sm:$0xff]
    %v438 = vld [vmem:[#allocation5 + $0xa60] sm:$0xff]
    %v439 = vld [vmem:[#allocation5 + $0xa68] sm:$0xff]
    %v440 = vld [vmem:[#allocation5 + $0xa70] sm:$0xff]
    %v441 = vld [vmem:[#allocation5 + $0xa78] sm:$0xff]
    %v442 = vld [vmem:[#allocation5 + $0xa80] sm:$0xff]
    %v443 = vld [vmem:[#allocation5 + $0xa88] sm:$0xff]
    %v444 = vld [vmem:[#allocation5 + $0xa90] sm:$0xff]
    %v445 = vld [vmem:[#allocation5 + $0xa98] sm:$0xff]
    %v446 = vld [vmem:[#allocation5 + $0xaa0] sm:$0xff]
    %v447 = vld [vmem:[#allocation5 + $0xaa8] sm:$0xff]
    %v448 = vld [vmem:[#allocation5 + $0xab0] sm:$0xff]
    %v449 = vld [vmem:[#allocation5 + $0xab8] sm:$0xff]
    %v450 = vld [vmem:[#allocation5 + $0xac0] sm:$0xff]
    %v451 = vld [vmem:[#allocation5 + $0xac8] sm:$0xff]
    %v452 = vld [vmem:[#allocation5 + $0xad0] sm:$0xff]
    %v453 = vld [vmem:[#allocation5 + $0xad8] sm:$0xff]
    %v454 = vld [vmem:[#allocation5 + $0xae0] sm:$0xff]
    %v455 = vld [vmem:[#allocation5 + $0xae8] sm:$0xff]
    %v456 = vld [vmem:[#allocation5 + $0xaf0] sm:$0xff]
    %v457 = vld [vmem:[#allocation5 + $0xaf8] sm:$0xff]
    %v458 = vld [vmem:[#allocation5 + $0xb00] sm:$0xff]
    %v459 = vld [vmem:[#allocation5 + $0xb08] sm:$0xff]
    %v460 = vld [vmem:[#allocation5 + $0xb10] sm:$0xff]
    %v461 = vld [vmem:[#allocation5 + $0xb18] sm:$0xff]
    %v462 = vld [vmem:[#allocation5 + $0xb20] sm:$0xff]
    %v463 = vld [vmem:[#allocation5 + $0xb28] sm:$0xff]
    %v464 = vld [vmem:[#allocation5 + $0xb30] sm:$0xff]
    %v465 = vld [vmem:[#allocation5 + $0xb38] sm:$0xff]
    %v466 = vld [vmem:[#allocation5 + $0xb40] sm:$0xff]
    %v467 = vld [vmem:[#allocation5 + $0xb48] sm:$0xff]
    %v468 = vld [vmem:[#allocation5 + $0xb50] sm:$0xff]
    %v469 = vld [vmem:[#allocation5 + $0xb58] sm:$0xff]
    %v470 = vld [vmem:[#allocation5 + $0xb60] sm:$0xff]
    %v471 = vld [vmem:[#allocation5 + $0xb68] sm:$0xff]
    %v472 = vld [vmem:[#allocation5 + $0xb70] sm:$0xff]
    %v473 = vld [vmem:[#allocation5 + $0xb78] sm:$0xff]
    %v474 = vld [vmem:[#allocation5 + $0xb80] sm:$0xff]
    %v475 = vld [vmem:[#allocation5 + $0xb88] sm:$0xff]
    %v476 = vld [vmem:[#allocation5 + $0xb90] sm:$0xff]
    %v477 = vld [vmem:[#allocation5 + $0xb98] sm:$0xff]
    %v478 = vld [vmem:[#allocation5 + $0xba0] sm:$0xff]
    %v479 = vld [vmem:[#allocation5 + $0xba8] sm:$0xff]
    %v480 = vld [vmem:[#allocation5 + $0xbb0] sm:$0xff]
    %v481 = vld [vmem:[#allocation5 + $0xbb8] sm:$0xff]
    %v482 = vld [vmem:[#allocation5 + $0xbc0] sm:$0xff]
    %v483 = vld [vmem:[#allocation5 + $0xbc8] sm:$0xff]
    %v484 = vld [vmem:[#allocation5 + $0xbd0] sm:$0xff]
    %v485 = vld [vmem:[#allocation5 + $0xbd8] sm:$0xff]
    %v486 = vld [vmem:[#allocation5 + $0xbe0] sm:$0xff]
    %v487 = vld [vmem:[#allocation5 + $0xbe8] sm:$0xff]
    %v488 = vld [vmem:[#allocation5 + $0xbf0] sm:$0xff]
    %v489 = vld [vmem:[#allocation5 + $0xbf8] sm:$0xff]
    %v490 = vld [vmem:[#allocation5 + $0xc00] sm:$0xff]
    %v491 = vld [vmem:[#allocation5 + $0xc08] sm:$0xff]
    %v492 = vld [vmem:[#allocation5 + $0xc10] sm:$0xff]
    %v493 = vld [vmem:[#allocation5 + $0xc18] sm:$0xff]
    %v494 = vld [vmem:[#allocation5 + $0xc20] sm:$0xff]
    %v495 = vld [vmem:[#allocation5 + $0xc28] sm:$0xff]
    %v496 = vld [vmem:[#allocation5 + $0xc30] sm:$0xff]
    %v497 = vld [vmem:[#allocation5 + $0xc38] sm:$0xff]
    %v498 = vld [vmem:[#allocation5 + $0xc40] sm:$0xff]
    %v499 = vld [vmem:[#allocation5 + $0xc48] sm:$0xff]
    %v500 = vld [vmem:[#allocation5 + $0xc50] sm:$0xff]
    %v501 = vld [vmem:[#allocation5 + $0xc58] sm:$0xff]
    %v502 = vld [vmem:[#allocation5 + $0xc60] sm:$0xff]
    %v503 = vld [vmem:[#allocation5 + $0xc68] sm:$0xff]
    %v504 = vld [vmem:[#allocation5 + $0xc70] sm:$0xff]
    %v505 = vld [vmem:[#allocation5 + $0xc78] sm:$0xff]
    %v506 = vld [vmem:[#allocation5 + $0xc80] sm:$0xff]
    %v507 = vld [vmem:[#allocation5 + $0xc88] sm:$0xff]
    %v508 = vld [vmem:[#allocation5 + $0xc90] sm:$0xff]
    %v509 = vld [vmem:[#allocation5 + $0xc98] sm:$0xff]
    %v510 = vld [vmem:[#allocation5 + $0xca0] sm:$0xff]
    %v511 = vld [vmem:[#allocation5 + $0xca8] sm:$0xff]
    %v512 = vld [vmem:[#allocation5 + $0xcb0] sm:$0xff]
    %v513 = vld [vmem:[#allocation5 + $0xcb8] sm:$0xff]
    %v514 = vld [vmem:[#allocation5 + $0xcc0] sm:$0xff]
    %v515 = vld [vmem:[#allocation5 + $0xcc8] sm:$0xff]
    %v516 = vld [vmem:[#allocation5 + $0xcd0] sm:$0xff]
    %v517 = vld [vmem:[#allocation5 + $0xcd8] sm:$0xff]
    %v518 = vld [vmem:[#allocation5 + $0xce0] sm:$0xff]
    %v519 = vld [vmem:[#allocation5 + $0xce8] sm:$0xff]
    %v520 = vld [vmem:[#allocation5 + $0xcf0] sm:$0xff]
    %v521 = vld [vmem:[#allocation5 + $0xcf8] sm:$0xff]
    %v522 = vld [vmem:[#allocation5 + $0xd00] sm:$0xff]
    %v523 = vld [vmem:[#allocation5 + $0xd08] sm:$0xff]
    %v524 = vld [vmem:[#allocation5 + $0xd10] sm:$0xff]
    %v525 = vld [vmem:[#allocation5 + $0xd18] sm:$0xff]
    %v526 = vld [vmem:[#allocation5 + $0xd20] sm:$0xff]
    %v527 = vld [vmem:[#allocation5 + $0xd28] sm:$0xff]
    %v528 = vld [vmem:[#allocation5 + $0xd30] sm:$0xff]
    %v529 = vld [vmem:[#allocation5 + $0xd38] sm:$0xff]
    %v530 = vld [vmem:[#allocation5 + $0xd40] sm:$0xff]
    %v531 = vld [vmem:[#allocation5 + $0xd48] sm:$0xff]
    %v532 = vld [vmem:[#allocation5 + $0xd50] sm:$0xff]
    %v533 = vld [vmem:[#allocation5 + $0xd58] sm:$0xff]
    %v534 = vld [vmem:[#allocation5 + $0xd60] sm:$0xff]
    %v535 = vld [vmem:[#allocation5 + $0xd68] sm:$0xff]
    %v536 = vld [vmem:[#allocation5 + $0xd70] sm:$0xff]
    %v537 = vld [vmem:[#allocation5 + $0xd78] sm:$0xff]
    %v538 = vld [vmem:[#allocation5 + $0xd80] sm:$0xff]
    %v539 = vld [vmem:[#allocation5 + $0xd88] sm:$0xff]
    %v540 = vld [vmem:[#allocation5 + $0xd90] sm:$0xff]
    %v541 = vld [vmem:[#allocation5 + $0xd98] sm:$0xff]
    %v542 = vld [vmem:[#allocation5 + $0xda0] sm:$0xff]
    %v543 = vld [vmem:[#allocation5 + $0xda8] sm:$0xff]
    %v544 = vld [vmem:[#allocation5 + $0xdb0] sm:$0xff]
    %v545 = vld [vmem:[#allocation5 + $0xdb8] sm:$0xff]
    %v546 = vld [vmem:[#allocation5 + $0xdc0] sm:$0xff]
    %v547 = vld [vmem:[#allocation5 + $0xdc8] sm:$0xff]
    %v548 = vld [vmem:[#allocation5 + $0xdd0] sm:$0xff]
    %v549 = vld [vmem:[#allocation5 + $0xdd8] sm:$0xff]
    %v550 = vld [vmem:[#allocation5 + $0xde0] sm:$0xff]
    %v551 = vld [vmem:[#allocation5 + $0xde8] sm:$0xff]
    %v552 = vld [vmem:[#allocation5 + $0xdf0] sm:$0xff]
    %v553 = vld [vmem:[#allocation5 + $0xdf8] sm:$0xff]
    %v554 = vld [vmem:[#allocation5 + $0xe00] sm:$0xff]
    %v555 = vld [vmem:[#allocation5 + $0xe08] sm:$0xff]
    %v556 = vld [vmem:[#allocation5 + $0xe10] sm:$0xff]
    %v557 = vld [vmem:[#allocation5 + $0xe18] sm:$0xff]
    %v558 = vld [vmem:[#allocation5 + $0xe20] sm:$0xff]
    %v559 = vld [vmem:[#allocation5 + $0xe28] sm:$0xff]
    %v560 = vld [vmem:[#allocation5 + $0xe30] sm:$0xff]
    %v561 = vld [vmem:[#allocation5 + $0xe38] sm:$0xff]
    %v562 = vld [vmem:[#allocation5 + $0xe40] sm:$0xff]
    %v563 = vld [vmem:[#allocation5 + $0xe48] sm:$0xff]
    %v564 = vld [vmem:[#allocation5 + $0xe50] sm:$0xff]
    %v565 = vld [vmem:[#allocation5 + $0xe58] sm:$0xff]
    %v566 = vld [vmem:[#allocation5 + $0xe60] sm:$0xff]
    %v567 = vld [vmem:[#allocation5 + $0xe68] sm:$0xff]
    %v568 = vld [vmem:[#allocation5 + $0xe70] sm:$0xff]
    %v569 = vld [vmem:[#allocation5 + $0xe78] sm:$0xff]
    %v570 = vld [vmem:[#allocation5 + $0xe80] sm:$0xff]
    %v571 = vld [vmem:[#allocation5 + $0xe88] sm:$0xff]
    %v572 = vld [vmem:[#allocation5 + $0xe90] sm:$0xff]
    %v573 = vld [vmem:[#allocation5 + $0xe98] sm:$0xff]
    %v574 = vld [vmem:[#allocation5 + $0xea0] sm:$0xff]
    %v575 = vld [vmem:[#allocation5 + $0xea8] sm:$0xff]
    %v576 = vld [vmem:[#allocation5 + $0xeb0] sm:$0xff]
    %v577 = vld [vmem:[#allocation5 + $0xeb8] sm:$0xff]
    %v578 = vld [vmem:[#allocation5 + $0xec0] sm:$0xff]
    %v579 = vld [vmem:[#allocation5 + $0xec8] sm:$0xff]
    %v580 = vld [vmem:[#allocation5 + $0xed0] sm:$0xff]
    %v581 = vld [vmem:[#allocation5 + $0xed8] sm:$0xff]
    %v582 = vld [vmem:[#allocation5 + $0xee0] sm:$0xff]
    %v583 = vld [vmem:[#allocation5 + $0xee8] sm:$0xff]
    %v584 = vld [vmem:[#allocation5 + $0xef0] sm:$0xff]
    %v585 = vld [vmem:[#allocation5 + $0xef8] sm:$0xff]
    %v586 = vld [vmem:[#allocation5 + $0xf00] sm:$0xff]
    %v587 = vld [vmem:[#allocation5 + $0xf08] sm:$0xff]
    %v588 = vld [vmem:[#allocation5 + $0xf10] sm:$0xff]
    %v589 = vld [vmem:[#allocation5 + $0xf18] sm:$0xff]
    %v590 = vld [vmem:[#allocation5 + $0xf20] sm:$0xff]
    %v591 = vld [vmem:[#allocation5 + $0xf28] sm:$0xff]
    %v592 = vld [vmem:[#allocation5 + $0xf30] sm:$0xff]
    %v593 = vld [vmem:[#allocation5 + $0xf38] sm:$0xff]
    %v594 = vld [vmem:[#allocation5 + $0xf40] sm:$0xff]
    %v595 = vld [vmem:[#allocation5 + $0xf48] sm:$0xff]
    %v596 = vld [vmem:[#allocation5 + $0xf50] sm:$0xff]
    %v597 = vld [vmem:[#allocation5 + $0xf58] sm:$0xff]
    %v598 = vld [vmem:[#allocation5 + $0xf60] sm:$0xff]
    %v599 = vld [vmem:[#allocation5 + $0xf68] sm:$0xff]
    %v600 = vld [vmem:[#allocation5 + $0xf70] sm:$0xff]
    %v601 = vld [vmem:[#allocation5 + $0xf78] sm:$0xff]
    %v602 = vld [vmem:[#allocation5 + $0xf80] sm:$0xff]
    %v603 = vld [vmem:[#allocation5 + $0xf88] sm:$0xff]
    %v604 = vld [vmem:[#allocation5 + $0xf90] sm:$0xff]
    %v605 = vld [vmem:[#allocation5 + $0xf98] sm:$0xff]
    %v606 = vld [vmem:[#allocation5 + $0xfa0] sm:$0xff]
    %v607 = vld [vmem:[#allocation5 + $0xfa8] sm:$0xff]
    %v608 = vld [vmem:[#allocation5 + $0xfb0] sm:$0xff]
    %v609 = vld [vmem:[#allocation5 + $0xfb8] sm:$0xff]
    %v610 = vld [vmem:[#allocation5 + $0xfc0] sm:$0xff]
    %v611 = vld [vmem:[#allocation5 + $0xfc8] sm:$0xff]
    %v612 = vld [vmem:[#allocation5 + $0xfd0] sm:$0xff]
    %v613 = vld [vmem:[#allocation5 + $0xfd8] sm:$0xff]
    %v614 = vld [vmem:[#allocation5 + $0xfe0] sm:$0xff]
    %v615 = vld [vmem:[#allocation5 + $0xfe8] sm:$0xff]
    %v616 = vld [vmem:[#allocation5 + $0xff0] sm:$0xff]
    %v617 = vld [vmem:[#allocation5 + $0xff8] sm:$0xff]
    %v618 = vld [vmem:[#allocation5 + $0x1000] sm:$0xff]
    %v619 = vld [vmem:[#allocation5 + $0x1008] sm:$0xff]
    %v620 = vld [vmem:[#allocation5 + $0x1010] sm:$0xff]
    %v621 = vld [vmem:[#allocation5 + $0x1018] sm:$0xff]
    %v622 = vld [vmem:[#allocation5 + $0x1020] sm:$0xff]
    %v623 = vld [vmem:[#allocation5 + $0x1028] sm:$0xff]
    %v624 = vld [vmem:[#allocation5 + $0x1030] sm:$0xff]
    %v625 = vld [vmem:[#allocation5 + $0x1038] sm:$0xff]
    %v626 = vld [vmem:[#allocation5 + $0x1040] sm:$0xff]
    %v627 = vld [vmem:[#allocation5 + $0x1048] sm:$0xff]
    %v628 = vld [vmem:[#allocation5 + $0x1050] sm:$0xff]
    %v629 = vld [vmem:[#allocation5 + $0x1058] sm:$0xff]
    %v630 = vld [vmem:[#allocation5 + $0x1060] sm:$0xff]
    %v631 = vld [vmem:[#allocation5 + $0x1068] sm:$0xff]
    %v632 = vld [vmem:[#allocation5 + $0x1070] sm:$0xff]
    %v633 = vld [vmem:[#allocation5 + $0x1078] sm:$0xff]
    %v634 = vld [vmem:[#allocation5 + $0x1080] sm:$0xff]
    %v635 = vld [vmem:[#allocation5 + $0x1088] sm:$0xff]
    %v636 = vld [vmem:[#allocation5 + $0x1090] sm:$0xff]
    %v637 = vld [vmem:[#allocation5 + $0x1098] sm:$0xff]
    %v638 = vld [vmem:[#allocation5 + $0x10a0] sm:$0xff]
    %v639 = vld [vmem:[#allocation5 + $0x10a8] sm:$0xff]
    %v640 = vld [vmem:[#allocation5 + $0x10b0] sm:$0xff]
    %v641 = vld [vmem:[#allocation5 + $0x10b8] sm:$0xff]
    %v642 = vld [vmem:[#allocation5 + $0x10c0] sm:$0xff]
    %v643 = vld [vmem:[#allocation5 + $0x10c8] sm:$0xff]
    %v644 = vld [vmem:[#allocation5 + $0x10d0] sm:$0xff]
    %v645 = vld [vmem:[#allocation5 + $0x10d8] sm:$0xff]
    %v646 = vld [vmem:[#allocation5 + $0x10e0] sm:$0xff]
    %v647 = vld [vmem:[#allocation5 + $0x10e8] sm:$0xff]
    %v648 = vld [vmem:[#allocation5 + $0x10f0] sm:$0xff]
    %v649 = vld [vmem:[#allocation5 + $0x10f8] sm:$0xff]
    %v650 = vld [vmem:[#allocation5 + $0x1100] sm:$0xff]
    %v651 = vld [vmem:[#allocation5 + $0x1108] sm:$0xff]
    %v652 = vld [vmem:[#allocation5 + $0x1110] sm:$0xff]
    %v653 = vld [vmem:[#allocation5 + $0x1118] sm:$0xff]
    %v654 = vld [vmem:[#allocation5 + $0x1120] sm:$0xff]
    %v655 = vld [vmem:[#allocation5 + $0x1128] sm:$0xff]
    %v656 = vld [vmem:[#allocation5 + $0x1130] sm:$0xff]
    %v657 = vld [vmem:[#allocation5 + $0x1138] sm:$0xff]
    %v658 = vld [vmem:[#allocation5 + $0x1140] sm:$0xff]
    %v659 = vld [vmem:[#allocation5 + $0x1148] sm:$0xff]
    %v660 = vld [vmem:[#allocation5 + $0x1150] sm:$0xff]
    %v661 = vld [vmem:[#allocation5 + $0x1158] sm:$0xff]
    %v662 = vld [vmem:[#allocation5 + $0x1160] sm:$0xff]
    %v663 = vld [vmem:[#allocation5 + $0x1168] sm:$0xff]
    %v664 = vld [vmem:[#allocation5 + $0x1170] sm:$0xff]
    %v665 = vld [vmem:[#allocation5 + $0x1178] sm:$0xff]
    %v666 = vld [vmem:[#allocation5 + $0x1180] sm:$0xff]
    %v667 = vld [vmem:[#allocation5 + $0x1188] sm:$0xff]
    %v668 = vld [vmem:[#allocation5 + $0x1190] sm:$0xff]
    %v669 = vld [vmem:[#allocation5 + $0x1198] sm:$0xff]
    %v670 = vld [vmem:[#allocation5 + $0x11a0] sm:$0xff]
    %v671 = vld [vmem:[#allocation5 + $0x11a8] sm:$0xff]
    %v672 = vld [vmem:[#allocation5 + $0x11b0] sm:$0xff]
    %v673 = vld [vmem:[#allocation5 + $0x11b8] sm:$0xff]
    %v674 = vld [vmem:[#allocation5 + $0x11c0] sm:$0xff]
    %v675 = vld [vmem:[#allocation5 + $0x11c8] sm:$0xff]
    %v676 = vld [vmem:[#allocation5 + $0x11d0] sm:$0xff]
    %v677 = vld [vmem:[#allocation5 + $0x11d8] sm:$0xff]
    %v678 = vld [vmem:[#allocation5 + $0x11e0] sm:$0xff]
    %v679 = vld [vmem:[#allocation5 + $0x11e8] sm:$0xff]
    %v680 = vld [vmem:[#allocation5 + $0x11f0] sm:$0xff]
    %v681 = vld [vmem:[#allocation5 + $0x11f8] sm:$0xff]
    %v682 = vld [vmem:[#allocation5 + $0x1200] sm:$0xff]
    %v683 = vld [vmem:[#allocation5 + $0x1208] sm:$0xff]
    %v684 = vld [vmem:[#allocation5 + $0x1210] sm:$0xff]
    %v685 = vld [vmem:[#allocation5 + $0x1218] sm:$0xff]
    %v686 = vld [vmem:[#allocation5 + $0x1220] sm:$0xff]
    %v687 = vld [vmem:[#allocation5 + $0x1228] sm:$0xff]
    %v688 = vld [vmem:[#allocation5 + $0x1230] sm:$0xff]
    %v689 = vld [vmem:[#allocation5 + $0x1238] sm:$0xff]
    %v690 = vld [vmem:[#allocation5 + $0x1240] sm:$0xff]
    %v691 = vld [vmem:[#allocation5 + $0x1248] sm:$0xff]
    %v692 = vld [vmem:[#allocation5 + $0x1250] sm:$0xff]
    %v693 = vld [vmem:[#allocation5 + $0x1258] sm:$0xff]
    %v694 = vld [vmem:[#allocation5 + $0x1260] sm:$0xff]
    %v695 = vld [vmem:[#allocation5 + $0x1268] sm:$0xff]
    %v696 = vld [vmem:[#allocation5 + $0x1270] sm:$0xff]
    %v697 = vld [vmem:[#allocation5 + $0x1278] sm:$0xff]
    %v698 = vld [vmem:[#allocation5 + $0x1280] sm:$0xff]
    %v699 = vld [vmem:[#allocation5 + $0x1288] sm:$0xff]
    %v700 = vld [vmem:[#allocation5 + $0x1290] sm:$0xff]
    %v701 = vld [vmem:[#allocation5 + $0x1298] sm:$0xff]
    %v702 = vld [vmem:[#allocation5 + $0x12a0] sm:$0xff]
    %v703 = vld [vmem:[#allocation5 + $0x12a8] sm:$0xff]
    %v704 = vld [vmem:[#allocation5 + $0x12b0] sm:$0xff]
    %v705 = vld [vmem:[#allocation5 + $0x12b8] sm:$0xff]
    %v706 = vld [vmem:[#allocation5 + $0x12c0] sm:$0xff]
    %v707 = vld [vmem:[#allocation5 + $0x12c8] sm:$0xff]
    %v708 = vld [vmem:[#allocation5 + $0x12d0] sm:$0xff]
    %v709 = vld [vmem:[#allocation5 + $0x12d8] sm:$0xff]
    %v710 = vld [vmem:[#allocation5 + $0x12e0] sm:$0xff]
    %v711 = vld [vmem:[#allocation5 + $0x12e8] sm:$0xff]
    %v712 = vld [vmem:[#allocation5 + $0x12f0] sm:$0xff]
    %v713 = vld [vmem:[#allocation5 + $0x12f8] sm:$0xff]
    %v714 = vld [vmem:[#allocation5 + $0x1300] sm:$0xff]
    %v715 = vld [vmem:[#allocation5 + $0x1308] sm:$0xff]
    %v716 = vld [vmem:[#allocation5 + $0x1310] sm:$0xff]
    %v717 = vld [vmem:[#allocation5 + $0x1318] sm:$0xff]
    %v718 = vld [vmem:[#allocation5 + $0x1320] sm:$0xff]
    %v719 = vld [vmem:[#allocation5 + $0x1328] sm:$0xff]
    %v720 = vld [vmem:[#allocation5 + $0x1330] sm:$0xff]
    %v721 = vld [vmem:[#allocation5 + $0x1338] sm:$0xff]
    %v722 = vld [vmem:[#allocation5 + $0x1340] sm:$0xff]
    %v723 = vld [vmem:[#allocation5 + $0x1348] sm:$0xff]
    %v724 = vld [vmem:[#allocation5 + $0x1350] sm:$0xff]
    %v725 = vld [vmem:[#allocation5 + $0x1358] sm:$0xff]
    %v726 = vld [vmem:[#allocation5 + $0x1360] sm:$0xff]
    %v727 = vld [vmem:[#allocation5 + $0x1368] sm:$0xff]
    %v728 = vld [vmem:[#allocation5 + $0x1370] sm:$0xff]
    %v729 = vld [vmem:[#allocation5 + $0x1378] sm:$0xff]
    %v730 = vld [vmem:[#allocation5 + $0x1380] sm:$0xff]
    %v731 = vld [vmem:[#allocation5 + $0x1388] sm:$0xff]
    %v732 = vld [vmem:[#allocation5 + $0x1390] sm:$0xff]
    %v733 = vld [vmem:[#allocation5 + $0x1398] sm:$0xff]
    %v734 = vld [vmem:[#allocation5 + $0x13a0] sm:$0xff]
    %v735 = vld [vmem:[#allocation5 + $0x13a8] sm:$0xff]
    %v736 = vld [vmem:[#allocation5 + $0x13b0] sm:$0xff]
    %v737 = vld [vmem:[#allocation5 + $0x13b8] sm:$0xff]
    %v738 = vld [vmem:[#allocation5 + $0x13c0] sm:$0xff]
    %v739 = vld [vmem:[#allocation5 + $0x13c8] sm:$0xff]
    %v740 = vld [vmem:[#allocation5 + $0x13d0] sm:$0xff]
    %v741 = vld [vmem:[#allocation5 + $0x13d8] sm:$0xff]
    %v742 = vld [vmem:[#allocation5 + $0x13e0] sm:$0xff]
    %v743 = vld [vmem:[#allocation5 + $0x13e8] sm:$0xff]
    %v744 = vld [vmem:[#allocation5 + $0x13f0] sm:$0xff]
    %v745 = vld [vmem:[#allocation5 + $0x13f8] sm:$0xff]
    %v746 = vld [vmem:[#allocation5 + $0x1400] sm:$0xff]
    %v747 = vld [vmem:[#allocation5 + $0x1408] sm:$0xff]
    %v748 = vld [vmem:[#allocation5 + $0x1410] sm:$0xff]
    %v749 = vld [vmem:[#allocation5 + $0x1418] sm:$0xff]
    %v750 = vld [vmem:[#allocation5 + $0x1420] sm:$0xff]
    %v751 = vld [vmem:[#allocation5 + $0x1428] sm:$0xff]
    %v752 = vld [vmem:[#allocation5 + $0x1430] sm:$0xff]
    %v753 = vld [vmem:[#allocation5 + $0x1438] sm:$0xff]
    %v754 = vld [vmem:[#allocation5 + $0x1440] sm:$0xff]
    %v755 = vld [vmem:[#allocation5 + $0x1448] sm:$0xff]
    %v756 = vld [vmem:[#allocation5 + $0x1450] sm:$0xff]
    %v757 = vld [vmem:[#allocation5 + $0x1458] sm:$0xff]
    %v758 = vld [vmem:[#allocation5 + $0x1460] sm:$0xff]
    %v759 = vld [vmem:[#allocation5 + $0x1468] sm:$0xff]
    %v760 = vld [vmem:[#allocation5 + $0x1470] sm:$0xff]
    %v761 = vld [vmem:[#allocation5 + $0x1478] sm:$0xff]
    %v762 = vld [vmem:[#allocation5 + $0x1480] sm:$0xff]
    %v763 = vld [vmem:[#allocation5 + $0x1488] sm:$0xff]
    %v764 = vld [vmem:[#allocation5 + $0x1490] sm:$0xff]
    %v765 = vld [vmem:[#allocation5 + $0x1498] sm:$0xff]
    %v766 = vld [vmem:[#allocation5 + $0x14a0] sm:$0xff]
    %v767 = vld [vmem:[#allocation5 + $0x14a8] sm:$0xff]
    %v768 = vld [vmem:[#allocation5 + $0x14b0] sm:$0xff]
    %v769 = vld [vmem:[#allocation5 + $0x14b8] sm:$0xff]
    %v770 = vld [vmem:[#allocation5 + $0x14c0] sm:$0xff]
    %v771 = vld [vmem:[#allocation5 + $0x14c8] sm:$0xff]
    %v772 = vld [vmem:[#allocation5 + $0x14d0] sm:$0xff]
    %v773 = vld [vmem:[#allocation5 + $0x14d8] sm:$0xff]
    %v774 = vld [vmem:[#allocation5 + $0x14e0] sm:$0xff]
    %v775 = vld [vmem:[#allocation5 + $0x14e8] sm:$0xff]
    %v776 = vld [vmem:[#allocation5 + $0x14f0] sm:$0xff]
    %v777 = vld [vmem:[#allocation5 + $0x14f8] sm:$0xff]
    %v778 = vld [vmem:[#allocation5 + $0x1500] sm:$0xff]
    %v779 = vld [vmem:[#allocation5 + $0x1508] sm:$0xff]
    %v780 = vld [vmem:[#allocation5 + $0x1510] sm:$0xff]
    %v781 = vld [vmem:[#allocation5 + $0x1518] sm:$0xff]
    %v782 = vld [vmem:[#allocation5 + $0x1520] sm:$0xff]
    %v783 = vld [vmem:[#allocation5 + $0x1528] sm:$0xff]
    %v784 = vld [vmem:[#allocation5 + $0x1530] sm:$0xff]
    %v785 = vld [vmem:[#allocation5 + $0x1538] sm:$0xff]
    %v786 = vld [vmem:[#allocation5 + $0x1540] sm:$0xff]
    %v787 = vld [vmem:[#allocation5 + $0x1548] sm:$0xff]
    %v788 = vld [vmem:[#allocation5 + $0x1550] sm:$0xff]
    %v789 = vld [vmem:[#allocation5 + $0x1558] sm:$0xff]
    %v790 = vld [vmem:[#allocation5 + $0x1560] sm:$0xff]
    %v791 = vld [vmem:[#allocation5 + $0x1568] sm:$0xff]
    %v792 = vld [vmem:[#allocation5 + $0x1570] sm:$0xff]
    %v793 = vld [vmem:[#allocation5 + $0x1578] sm:$0xff]
    %v794 = vld [vmem:[#allocation5 + $0x1580] sm:$0xff]
    %v795 = vld [vmem:[#allocation5 + $0x1588] sm:$0xff]
    %v796 = vld [vmem:[#allocation5 + $0x1590] sm:$0xff]
    %v797 = vld [vmem:[#allocation5 + $0x1598] sm:$0xff]
    %v798 = vld [vmem:[#allocation5 + $0x15a0] sm:$0xff]
    %v799 = vld [vmem:[#allocation5 + $0x15a8] sm:$0xff]
    %v800 = vld [vmem:[#allocation5 + $0x15b0] sm:$0xff]
    %v801 = vld [vmem:[#allocation5 + $0x15b8] sm:$0xff]
    %v802 = vld [vmem:[#allocation5 + $0x15c0] sm:$0xff]
    %v803 = vld [vmem:[#allocation5 + $0x15c8] sm:$0xff]
    %v804 = vld [vmem:[#allocation5 + $0x15d0] sm:$0xff]
    %v805 = vld [vmem:[#allocation5 + $0x15d8] sm:$0xff]
    %v806 = vld [vmem:[#allocation5 + $0x15e0] sm:$0xff]
    %v807 = vld [vmem:[#allocation5 + $0x15e8] sm:$0xff]
    %v808 = vld [vmem:[#allocation5 + $0x15f0] sm:$0xff]
    %v809 = vld [vmem:[#allocation5 + $0x15f8] sm:$0xff]
    %v810 = vld [vmem:[#allocation5 + $0x1600] sm:$0xff]
    %v811 = vld [vmem:[#allocation5 + $0x1608] sm:$0xff]
    %v812 = vld [vmem:[#allocation5 + $0x1610] sm:$0xff]
    %v813 = vld [vmem:[#allocation5 + $0x1618] sm:$0xff]
    %v814 = vld [vmem:[#allocation5 + $0x1620] sm:$0xff]
    %v815 = vld [vmem:[#allocation5 + $0x1628] sm:$0xff]
    %v816 = vld [vmem:[#allocation5 + $0x1630] sm:$0xff]
    %v817 = vld [vmem:[#allocation5 + $0x1638] sm:$0xff]
    %v818 = vld [vmem:[#allocation5 + $0x1640] sm:$0xff]
    %v819 = vld [vmem:[#allocation5 + $0x1648] sm:$0xff]
    %v820 = vld [vmem:[#allocation5 + $0x1650] sm:$0xff]
    %v821 = vld [vmem:[#allocation5 + $0x1658] sm:$0xff]
    %v822 = vld [vmem:[#allocation5 + $0x1660] sm:$0xff]
    %v823 = vld [vmem:[#allocation5 + $0x1668] sm:$0xff]
    %v824 = vld [vmem:[#allocation5 + $0x1670] sm:$0xff]
    %v825 = vld [vmem:[#allocation5 + $0x1678] sm:$0xff]
    %v826 = vld [vmem:[#allocation5 + $0x1680] sm:$0xff]
    %v827 = vld [vmem:[#allocation5 + $0x1688] sm:$0xff]
    %v828 = vld [vmem:[#allocation5 + $0x1690] sm:$0xff]
    %v829 = vld [vmem:[#allocation5 + $0x1698] sm:$0xff]
    %v830 = vld [vmem:[#allocation5 + $0x16a0] sm:$0xff]
    %v831 = vld [vmem:[#allocation5 + $0x16a8] sm:$0xff]
    %v832 = vld [vmem:[#allocation5 + $0x16b0] sm:$0xff]
    %v833 = vld [vmem:[#allocation5 + $0x16b8] sm:$0xff]
    %v834 = vld [vmem:[#allocation5 + $0x16c0] sm:$0xff]
    %v835 = vld [vmem:[#allocation5 + $0x16c8] sm:$0xff]
    %v836 = vld [vmem:[#allocation5 + $0x16d0] sm:$0xff]
    %v837 = vld [vmem:[#allocation5 + $0x16d8] sm:$0xff]
    %v838 = vld [vmem:[#allocation5 + $0x16e0] sm:$0xff]
    %v839 = vld [vmem:[#allocation5 + $0x16e8] sm:$0xff]
    %v840 = vld [vmem:[#allocation5 + $0x16f0] sm:$0xff]
    %v841 = vld [vmem:[#allocation5 + $0x16f8] sm:$0xff]
    %v842 = vld [vmem:[#allocation5 + $0x1700] sm:$0xff]
    %v843 = vld [vmem:[#allocation5 + $0x1708] sm:$0xff]
    %v844 = vld [vmem:[#allocation5 + $0x1710] sm:$0xff]
    %v845 = vld [vmem:[#allocation5 + $0x1718] sm:$0xff]
    %v846 = vld [vmem:[#allocation5 + $0x1720] sm:$0xff]
    %v847 = vld [vmem:[#allocation5 + $0x1728] sm:$0xff]
    %v848 = vld [vmem:[#allocation5 + $0x1730] sm:$0xff]
    %v849 = vld [vmem:[#allocation5 + $0x1738] sm:$0xff]
    %v850 = vld [vmem:[#allocation5 + $0x1740] sm:$0xff]
    %v851 = vld [vmem:[#allocation5 + $0x1748] sm:$0xff]
    %v852 = vld [vmem:[#allocation5 + $0x1750] sm:$0xff]
    %v853 = vld [vmem:[#allocation5 + $0x1758] sm:$0xff]
    %v854 = vld [vmem:[#allocation5 + $0x1760] sm:$0xff]
    %v855 = vld [vmem:[#allocation5 + $0x1768] sm:$0xff]
    %v856 = vld [vmem:[#allocation5 + $0x1770] sm:$0xff]
    %v857 = vld [vmem:[#allocation5 + $0x1778] sm:$0xff]
    %v858 = vld [vmem:[#allocation5 + $0x1780] sm:$0xff]
    %v859 = vld [vmem:[#allocation5 + $0x1788] sm:$0xff]
    %v860 = vld [vmem:[#allocation5 + $0x1790] sm:$0xff]
    %v861 = vld [vmem:[#allocation5 + $0x1798] sm:$0xff]
    %v862 = vld [vmem:[#allocation5 + $0x17a0] sm:$0xff]
    %v863 = vld [vmem:[#allocation5 + $0x17a8] sm:$0xff]
    %v864 = vld [vmem:[#allocation5 + $0x17b0] sm:$0xff]
    %v865 = vld [vmem:[#allocation5 + $0x17b8] sm:$0xff]
    %v866 = vld [vmem:[#allocation5 + $0x17c0] sm:$0xff]
    %v867 = vld [vmem:[#allocation5 + $0x17c8] sm:$0xff]
    %v868 = vld [vmem:[#allocation5 + $0x17d0] sm:$0xff]
    %v869 = vld [vmem:[#allocation5 + $0x17d8] sm:$0xff]
    %v870 = vld [vmem:[#allocation5 + $0x17e0] sm:$0xff]
    %v871 = vld [vmem:[#allocation5 + $0x17e8] sm:$0xff]
    %v872 = vld [vmem:[#allocation5 + $0x17f0] sm:$0xff]
    %v873 = vld [vmem:[#allocation5 + $0x17f8] sm:$0xff]
    %v874 = vld [vmem:[#allocation5 + $0x1800] sm:$0xff]
    %v875 = vld [vmem:[#allocation5 + $0x1808] sm:$0xff]
    %v876 = vld [vmem:[#allocation5 + $0x1810] sm:$0xff]
    %v877 = vld [vmem:[#allocation5 + $0x1818] sm:$0xff]
    %v878 = vld [vmem:[#allocation5 + $0x1820] sm:$0xff]
    %v879 = vld [vmem:[#allocation5 + $0x1828] sm:$0xff]
    %v880 = vld [vmem:[#allocation5 + $0x1830] sm:$0xff]
    %v881 = vld [vmem:[#allocation5 + $0x1838] sm:$0xff]
    %v882 = vld [vmem:[#allocation5 + $0x1840] sm:$0xff]
    %v883 = vld [vmem:[#allocation5 + $0x1848] sm:$0xff]
    %v884 = vld [vmem:[#allocation5 + $0x1850] sm:$0xff]
    %v885 = vld [vmem:[#allocation5 + $0x1858] sm:$0xff]
    %v886 = vld [vmem:[#allocation5 + $0x1860] sm:$0xff]
    %v887 = vld [vmem:[#allocation5 + $0x1868] sm:$0xff]
    %v888 = vld [vmem:[#allocation5 + $0x1870] sm:$0xff]
    %v889 = vld [vmem:[#allocation5 + $0x1878] sm:$0xff]
    %v890 = vld [vmem:[#allocation7] sm:$0x1]
    %v892 = vlaneseq
    %v893 = vshrl.u32 %v892, 7
    %v894 = vsub.s32 0, %v893
    %v895 = vrot.slane %v890, %v894
    %v949 = vcombine.low %v54, %v67
    %v950 = vcombine.high %v54, %v67
    %v951 = vcombine.low %v80, %v93
    %v952 = vcombine.high %v80, %v93
    %v954 = vunpack.c.l.s4 1983009808
    %v955 = vunpack.c.0.s8 %v954
    %v956 = vlaneseq
    %v957 = vshrl.u32 %v956, 7
    %v958 = vsub.s32 %v955, %v957
    %v959 = vrot.slane %v949, %v958
    %v961 = vunpack.c.l.s4 1983009808
    %v962 = vunpack.c.0.s8 %v961
    %v963 = vlaneseq
    %v964 = vshrl.u32 %v963, 7
    %v965 = vsub.s32 %v962, %v964
    %v966 = vrot.slane %v950, %v965
    %v968 = vunpack.c.l.s4 1983009808
    %v969 = vunpack.c.0.s8 %v968
    %v970 = vlaneseq
    %v971 = vshrl.u32 %v970, 7
    %v972 = vsub.s32 %v969, %v971
    %v973 = vrot.slane %v951, %v972
    %v975 = vunpack.c.l.s4 1983009808
    %v976 = vunpack.c.0.s8 %v975
    %v977 = vlaneseq
    %v978 = vshrl.u32 %v977, 7
    %v979 = vsub.s32 %v976, %v978
    %v980 = vrot.slane %v952, %v979
    %v981 = vcombine.low %v959, %v973
    %v982 = vcombine.high %v959, %v973
    %v983 = vcombine.low %v966, %v980
    %v984 = vcombine.high %v966, %v980
    %v985 = vcombine.low %v55, %v68
    %v986 = vcombine.high %v55, %v68
    %v987 = vcombine.low %v81, %v94
    %v988 = vcombine.high %v81, %v94
    %v990 = vunpack.c.l.s4 1983009808
    %v991 = vunpack.c.0.s8 %v990
    %v992 = vlaneseq
    %v993 = vshrl.u32 %v992, 7
    %v994 = vsub.s32 %v991, %v993
    %v995 = vrot.slane %v985, %v994
    %v997 = vunpack.c.l.s4 1983009808
    %v998 = vunpack.c.0.s8 %v997
    %v999 = vlaneseq
    %v1000 = vshrl.u32 %v999, 7
    %v1001 = vsub.s32 %v998, %v1000
    %v1002 = vrot.slane %v986, %v1001
    %v1004 = vunpack.c.l.s4 1983009808
    %v1005 = vunpack.c.0.s8 %v1004
    %v1006 = vlaneseq
    %v1007 = vshrl.u32 %v1006, 7
    %v1008 = vsub.s32 %v1005, %v1007
    %v1009 = vrot.slane %v987, %v1008
    %v1011 = vunpack.c.l.s4 1983009808
    %v1012 = vunpack.c.0.s8 %v1011
    %v1013 = vlaneseq
    %v1014 = vshrl.u32 %v1013, 7
    %v1015 = vsub.s32 %v1012, %v1014
    %v1016 = vrot.slane %v988, %v1015
    %v1017 = vcombine.low %v995, %v1009
    %v1018 = vcombine.high %v995, %v1009
    %v1019 = vcombine.low %v1002, %v1016
    %v1020 = vcombine.high %v1002, %v1016
    %v1021 = vcombine.low %v56, %v69
    %v1022 = vcombine.high %v56, %v69
    %v1023 = vcombine.low %v82, %v95
    %v1024 = vcombine.high %v82, %v95
    %v1026 = vunpack.c.l.s4 1983009808
    %v1027 = vunpack.c.0.s8 %v1026
    %v1028 = vlaneseq
    %v1029 = vshrl.u32 %v1028, 7
    %v1030 = vsub.s32 %v1027, %v1029
    %v1031 = vrot.slane %v1021, %v1030
    %v1033 = vunpack.c.l.s4 1983009808
    %v1034 = vunpack.c.0.s8 %v1033
    %v1035 = vlaneseq
    %v1036 = vshrl.u32 %v1035, 7
    %v1037 = vsub.s32 %v1034, %v1036
    %v1038 = vrot.slane %v1022, %v1037
    %v1040 = vunpack.c.l.s4 1983009808
    %v1041 = vunpack.c.0.s8 %v1040
    %v1042 = vlaneseq
    %v1043 = vshrl.u32 %v1042, 7
    %v1044 = vsub.s32 %v1041, %v1043
    %v1045 = vrot.slane %v1023, %v1044
    %v1047 = vunpack.c.l.s4 1983009808
    %v1048 = vunpack.c.0.s8 %v1047
    %v1049 = vlaneseq
    %v1050 = vshrl.u32 %v1049, 7
    %v1051 = vsub.s32 %v1048, %v1050
    %v1052 = vrot.slane %v1024, %v1051
    %v1053 = vcombine.low %v1031, %v1045
    %v1054 = vcombine.high %v1031, %v1045
    %v1055 = vcombine.low %v1038, %v1052
    %v1056 = vcombine.high %v1038, %v1052
    %v1057 = vcombine.low %v57, %v70
    %v1058 = vcombine.high %v57, %v70
    %v1059 = vcombine.low %v83, %v96
    %v1060 = vcombine.high %v83, %v96
    %v1062 = vunpack.c.l.s4 1983009808
    %v1063 = vunpack.c.0.s8 %v1062
    %v1064 = vlaneseq
    %v1065 = vshrl.u32 %v1064, 7
    %v1066 = vsub.s32 %v1063, %v1065
    %v1067 = vrot.slane %v1057, %v1066
    %v1069 = vunpack.c.l.s4 1983009808
    %v1070 = vunpack.c.0.s8 %v1069
    %v1071 = vlaneseq
    %v1072 = vshrl.u32 %v1071, 7
    %v1073 = vsub.s32 %v1070, %v1072
    %v1074 = vrot.slane %v1058, %v1073
    %v1076 = vunpack.c.l.s4 1983009808
    %v1077 = vunpack.c.0.s8 %v1076
    %v1078 = vlaneseq
    %v1079 = vshrl.u32 %v1078, 7
    %v1080 = vsub.s32 %v1077, %v1079
    %v1081 = vrot.slane %v1059, %v1080
    %v1083 = vunpack.c.l.s4 1983009808
    %v1084 = vunpack.c.0.s8 %v1083
    %v1085 = vlaneseq
    %v1086 = vshrl.u32 %v1085, 7
    %v1087 = vsub.s32 %v1084, %v1086
    %v1088 = vrot.slane %v1060, %v1087
    %v1089 = vcombine.low %v1067, %v1081
    %v1090 = vcombine.high %v1067, %v1081
    %v1091 = vcombine.low %v1074, %v1088
    %v1092 = vcombine.high %v1074, %v1088
    %v1093 = vcombine.low %v58, %v71
    %v1094 = vcombine.high %v58, %v71
    %v1095 = vcombine.low %v84, %v97
    %v1096 = vcombine.high %v84, %v97
    %v1098 = vunpack.c.l.s4 1983009808
    %v1099 = vunpack.c.0.s8 %v1098
    %v1100 = vlaneseq
    %v1101 = vshrl.u32 %v1100, 7
    %v1102 = vsub.s32 %v1099, %v1101
    %v1103 = vrot.slane %v1093, %v1102
    %v1105 = vunpack.c.l.s4 1983009808
    %v1106 = vunpack.c.0.s8 %v1105
    %v1107 = vlaneseq
    %v1108 = vshrl.u32 %v1107, 7
    %v1109 = vsub.s32 %v1106, %v1108
    %v1110 = vrot.slane %v1094, %v1109
    %v1112 = vunpack.c.l.s4 1983009808
    %v1113 = vunpack.c.0.s8 %v1112
    %v1114 = vlaneseq
    %v1115 = vshrl.u32 %v1114, 7
    %v1116 = vsub.s32 %v1113, %v1115
    %v1117 = vrot.slane %v1095, %v1116
    %v1119 = vunpack.c.l.s4 1983009808
    %v1120 = vunpack.c.0.s8 %v1119
    %v1121 = vlaneseq
    %v1122 = vshrl.u32 %v1121, 7
    %v1123 = vsub.s32 %v1120, %v1122
    %v1124 = vrot.slane %v1096, %v1123
    %v1125 = vcombine.low %v1103, %v1117
    %v1126 = vcombine.high %v1103, %v1117
    %v1127 = vcombine.low %v1110, %v1124
    %v1128 = vcombine.high %v1110, %v1124
    %v1129 = vcombine.low %v59, %v72
    %v1130 = vcombine.high %v59, %v72
    %v1131 = vcombine.low %v85, %v98
    %v1132 = vcombine.high %v85, %v98
    %v1134 = vunpack.c.l.s4 1983009808
    %v1135 = vunpack.c.0.s8 %v1134
    %v1136 = vlaneseq
    %v1137 = vshrl.u32 %v1136, 7
    %v1138 = vsub.s32 %v1135, %v1137
    %v1139 = vrot.slane %v1129, %v1138
    %v1141 = vunpack.c.l.s4 1983009808
    %v1142 = vunpack.c.0.s8 %v1141
    %v1143 = vlaneseq
    %v1144 = vshrl.u32 %v1143, 7
    %v1145 = vsub.s32 %v1142, %v1144
    %v1146 = vrot.slane %v1130, %v1145
    %v1148 = vunpack.c.l.s4 1983009808
    %v1149 = vunpack.c.0.s8 %v1148
    %v1150 = vlaneseq
    %v1151 = vshrl.u32 %v1150, 7
    %v1152 = vsub.s32 %v1149, %v1151
    %v1153 = vrot.slane %v1131, %v1152
    %v1155 = vunpack.c.l.s4 1983009808
    %v1156 = vunpack.c.0.s8 %v1155
    %v1157 = vlaneseq
    %v1158 = vshrl.u32 %v1157, 7
    %v1159 = vsub.s32 %v1156, %v1158
    %v1160 = vrot.slane %v1132, %v1159
    %v1161 = vcombine.low %v1139, %v1153
    %v1162 = vcombine.high %v1139, %v1153
    %v1163 = vcombine.low %v1146, %v1160
    %v1164 = vcombine.high %v1146, %v1160
    %v1165 = vcombine.low %v60, %v73
    %v1166 = vcombine.high %v60, %v73
    %v1167 = vcombine.low %v86, %v99
    %v1168 = vcombine.high %v86, %v99
    %v1170 = vunpack.c.l.s4 1983009808
    %v1171 = vunpack.c.0.s8 %v1170
    %v1172 = vlaneseq
    %v1173 = vshrl.u32 %v1172, 7
    %v1174 = vsub.s32 %v1171, %v1173
    %v1175 = vrot.slane %v1165, %v1174
    %v1177 = vunpack.c.l.s4 1983009808
    %v1178 = vunpack.c.0.s8 %v1177
    %v1179 = vlaneseq
    %v1180 = vshrl.u32 %v1179, 7
    %v1181 = vsub.s32 %v1178, %v1180
    %v1182 = vrot.slane %v1166, %v1181
    %v1184 = vunpack.c.l.s4 1983009808
    %v1185 = vunpack.c.0.s8 %v1184
    %v1186 = vlaneseq
    %v1187 = vshrl.u32 %v1186, 7
    %v1188 = vsub.s32 %v1185, %v1187
    %v1189 = vrot.slane %v1167, %v1188
    %v1191 = vunpack.c.l.s4 1983009808
    %v1192 = vunpack.c.0.s8 %v1191
    %v1193 = vlaneseq
    %v1194 = vshrl.u32 %v1193, 7
    %v1195 = vsub.s32 %v1192, %v1194
    %v1196 = vrot.slane %v1168, %v1195
    %v1197 = vcombine.low %v1175, %v1189
    %v1198 = vcombine.high %v1175, %v1189
    %v1199 = vcombine.low %v1182, %v1196
    %v1200 = vcombine.high %v1182, %v1196
    %v1201 = vcombine.low %v61, %v74
    %v1202 = vcombine.high %v61, %v74
    %v1203 = vcombine.low %v87, %v100
    %v1204 = vcombine.high %v87, %v100
    %v1206 = vunpack.c.l.s4 1983009808
    %v1207 = vunpack.c.0.s8 %v1206
    %v1208 = vlaneseq
    %v1209 = vshrl.u32 %v1208, 7
    %v1210 = vsub.s32 %v1207, %v1209
    %v1211 = vrot.slane %v1201, %v1210
    %v1213 = vunpack.c.l.s4 1983009808
    %v1214 = vunpack.c.0.s8 %v1213
    %v1215 = vlaneseq
    %v1216 = vshrl.u32 %v1215, 7
    %v1217 = vsub.s32 %v1214, %v1216
    %v1218 = vrot.slane %v1202, %v1217
    %v1220 = vunpack.c.l.s4 1983009808
    %v1221 = vunpack.c.0.s8 %v1220
    %v1222 = vlaneseq
    %v1223 = vshrl.u32 %v1222, 7
    %v1224 = vsub.s32 %v1221, %v1223
    %v1225 = vrot.slane %v1203, %v1224
    %v1227 = vunpack.c.l.s4 1983009808
    %v1228 = vunpack.c.0.s8 %v1227
    %v1229 = vlaneseq
    %v1230 = vshrl.u32 %v1229, 7
    %v1231 = vsub.s32 %v1228, %v1230
    %v1232 = vrot.slane %v1204, %v1231
    %v1233 = vcombine.low %v1211, %v1225
    %v1234 = vcombine.high %v1211, %v1225
    %v1235 = vcombine.low %v1218, %v1232
    %v1236 = vcombine.high %v1218, %v1232
    %v1237 = vcombine.low %v62, %v75
    %v1238 = vcombine.high %v62, %v75
    %v1239 = vcombine.low %v88, %v101
    %v1240 = vcombine.high %v88, %v101
    %v1242 = vunpack.c.l.s4 1983009808
    %v1243 = vunpack.c.0.s8 %v1242
    %v1244 = vlaneseq
    %v1245 = vshrl.u32 %v1244, 7
    %v1246 = vsub.s32 %v1243, %v1245
    %v1247 = vrot.slane %v1237, %v1246
    %v1249 = vunpack.c.l.s4 1983009808
    %v1250 = vunpack.c.0.s8 %v1249
    %v1251 = vlaneseq
    %v1252 = vshrl.u32 %v1251, 7
    %v1253 = vsub.s32 %v1250, %v1252
    %v1254 = vrot.slane %v1238, %v1253
    %v1256 = vunpack.c.l.s4 1983009808
    %v1257 = vunpack.c.0.s8 %v1256
    %v1258 = vlaneseq
    %v1259 = vshrl.u32 %v1258, 7
    %v1260 = vsub.s32 %v1257, %v1259
    %v1261 = vrot.slane %v1239, %v1260
    %v1263 = vunpack.c.l.s4 1983009808
    %v1264 = vunpack.c.0.s8 %v1263
    %v1265 = vlaneseq
    %v1266 = vshrl.u32 %v1265, 7
    %v1267 = vsub.s32 %v1264, %v1266
    %v1268 = vrot.slane %v1240, %v1267
    %v1269 = vcombine.low %v1247, %v1261
    %v1270 = vcombine.high %v1247, %v1261
    %v1271 = vcombine.low %v1254, %v1268
    %v1272 = vcombine.high %v1254, %v1268
    %v1273 = vcombine.low %v63, %v76
    %v1274 = vcombine.high %v63, %v76
    %v1275 = vcombine.low %v89, %v102
    %v1276 = vcombine.high %v89, %v102
    %v1278 = vunpack.c.l.s4 1983009808
    %v1279 = vunpack.c.0.s8 %v1278
    %v1280 = vlaneseq
    %v1281 = vshrl.u32 %v1280, 7
    %v1282 = vsub.s32 %v1279, %v1281
    %v1283 = vrot.slane %v1273, %v1282
    %v1285 = vunpack.c.l.s4 1983009808
    %v1286 = vunpack.c.0.s8 %v1285
    %v1287 = vlaneseq
    %v1288 = vshrl.u32 %v1287, 7
    %v1289 = vsub.s32 %v1286, %v1288
    %v1290 = vrot.slane %v1274, %v1289
    %v1292 = vunpack.c.l.s4 1983009808
    %v1293 = vunpack.c.0.s8 %v1292
    %v1294 = vlaneseq
    %v1295 = vshrl.u32 %v1294, 7
    %v1296 = vsub.s32 %v1293, %v1295
    %v1297 = vrot.slane %v1275, %v1296
    %v1299 = vunpack.c.l.s4 1983009808
    %v1300 = vunpack.c.0.s8 %v1299
    %v1301 = vlaneseq
    %v1302 = vshrl.u32 %v1301, 7
    %v1303 = vsub.s32 %v1300, %v1302
    %v1304 = vrot.slane %v1276, %v1303
    %v1305 = vcombine.low %v1283, %v1297
    %v1306 = vcombine.high %v1283, %v1297
    %v1307 = vcombine.low %v1290, %v1304
    %v1308 = vcombine.high %v1290, %v1304
    %v1309 = vcombine.low %v64, %v77
    %v1310 = vcombine.high %v64, %v77
    %v1311 = vcombine.low %v90, %v103
    %v1312 = vcombine.high %v90, %v103
    %v1314 = vunpack.c.l.s4 1983009808
    %v1315 = vunpack.c.0.s8 %v1314
    %v1316 = vlaneseq
    %v1317 = vshrl.u32 %v1316, 7
    %v1318 = vsub.s32 %v1315, %v1317
    %v1319 = vrot.slane %v1309, %v1318
    %v1321 = vunpack.c.l.s4 1983009808
    %v1322 = vunpack.c.0.s8 %v1321
    %v1323 = vlaneseq
    %v1324 = vshrl.u32 %v1323, 7
    %v1325 = vsub.s32 %v1322, %v1324
    %v1326 = vrot.slane %v1310, %v1325
    %v1328 = vunpack.c.l.s4 1983009808
    %v1329 = vunpack.c.0.s8 %v1328
    %v1330 = vlaneseq
    %v1331 = vshrl.u32 %v1330, 7
    %v1332 = vsub.s32 %v1329, %v1331
    %v1333 = vrot.slane %v1311, %v1332
    %v1335 = vunpack.c.l.s4 1983009808
    %v1336 = vunpack.c.0.s8 %v1335
    %v1337 = vlaneseq
    %v1338 = vshrl.u32 %v1337, 7
    %v1339 = vsub.s32 %v1336, %v1338
    %v1340 = vrot.slane %v1312, %v1339
    %v1341 = vcombine.low %v1319, %v1333
    %v1342 = vcombine.high %v1319, %v1333
    %v1343 = vcombine.low %v1326, %v1340
    %v1344 = vcombine.high %v1326, %v1340
    %v1345 = vcombine.low %v65, %v78
    %v1346 = vcombine.high %v65, %v78
    %v1347 = vcombine.low %v91, %v104
    %v1348 = vcombine.high %v91, %v104
    %v1350 = vunpack.c.l.s4 1983009808
    %v1351 = vunpack.c.0.s8 %v1350
    %v1352 = vlaneseq
    %v1353 = vshrl.u32 %v1352, 7
    %v1354 = vsub.s32 %v1351, %v1353
    %v1355 = vrot.slane %v1345, %v1354
    %v1357 = vunpack.c.l.s4 1983009808
    %v1358 = vunpack.c.0.s8 %v1357
    %v1359 = vlaneseq
    %v1360 = vshrl.u32 %v1359, 7
    %v1361 = vsub.s32 %v1358, %v1360
    %v1362 = vrot.slane %v1346, %v1361
    %v1364 = vunpack.c.l.s4 1983009808
    %v1365 = vunpack.c.0.s8 %v1364
    %v1366 = vlaneseq
    %v1367 = vshrl.u32 %v1366, 7
    %v1368 = vsub.s32 %v1365, %v1367
    %v1369 = vrot.slane %v1347, %v1368
    %v1371 = vunpack.c.l.s4 1983009808
    %v1372 = vunpack.c.0.s8 %v1371
    %v1373 = vlaneseq
    %v1374 = vshrl.u32 %v1373, 7
    %v1375 = vsub.s32 %v1372, %v1374
    %v1376 = vrot.slane %v1348, %v1375
    %v1377 = vcombine.low %v1355, %v1369
    %v1378 = vcombine.high %v1355, %v1369
    %v1379 = vcombine.low %v1362, %v1376
    %v1380 = vcombine.high %v1362, %v1376
    %v1381 = vcombine.low %v66, %v79
    %v1382 = vcombine.low %v92, %v105
    %v1384 = vunpack.c.l.s4 1983009808
    %v1385 = vunpack.c.0.s8 %v1384
    %v1386 = vlaneseq
    %v1387 = vshrl.u32 %v1386, 7
    %v1388 = vsub.s32 %v1385, %v1387
    %v1389 = vrot.slane %v1381, %v1388
    %v1391 = vunpack.c.l.s4 1983009808
    %v1392 = vunpack.c.0.s8 %v1391
    %v1393 = vlaneseq
    %v1394 = vshrl.u32 %v1393, 7
    %v1395 = vsub.s32 %v1392, %v1394
    %v1396 = vrot.slane %v1382, %v1395
    %v1397 = vcombine.low %v1389, %v1396
    %1447 = vmatprep.subr.mxu0 0.0
    %1448 = vmatpush1.msra.mxu0 %v106
    %1449 = vmatprep.subr.mxu0 0.0
    %1450 = vmatpush1.msra.mxu0 %v107
    %1451 = vmatprep.subr.mxu0 0.0
    %1452 = vmatpush1.msra.mxu0 %v108
    %1453 = vmatprep.subr.mxu0 0.0
    %1454 = vmatpush1.msra.mxu0 %v109
    %1455 = vmatprep.subr.mxu0 0.0
    %1456 = vmatpush1.msra.mxu0 %v110
    %1457 = vmatprep.subr.mxu0 0.0
    %1458 = vmatpush1.msra.mxu0 %v111
    %1459 = vmatprep.subr.mxu0 0.0
    %1460 = vmatpush1.msra.mxu0 %v112
    %1461 = vmatprep.subr.mxu0 0.0
    %1462 = vmatpush1.msra.mxu0 %v113
    %1463 = vmatprep.subr.mxu0 0.0
    %1464 = vmatpush1.msra.mxu0 %v114
    %1465 = vmatprep.subr.mxu0 0.0
    %1466 = vmatpush1.msra.mxu0 %v115
    %1467 = vmatprep.subr.mxu0 0.0
    %1468 = vmatpush1.msra.mxu0 %v116
    %1469 = vmatprep.subr.mxu0 0.0
    %1470 = vmatpush1.msra.mxu0 %v117
    %1471 = vmatprep.subr.mxu0 0.0
    %1472 = vmatpush1.msra.mxu0 %v118
    %1473 = vmatprep.subr.mxu0 0.0
    %1474 = vmatpush1.msra.mxu0 %v119
    %1475 = vmatprep.subr.mxu0 0.0
    %1476 = vmatpush1.msra.mxu0 %v120
    %1477 = vmatprep.subr.mxu0 0.0
    %1478 = vmatpush1.msra.mxu0 %v121
    %1479 = vmatprep.subr.mxu0 0.0
    %1480 = vmatpush1.msra.mxu0 %v122
    %1481 = vmatprep.subr.mxu0 0.0
    %1482 = vmatpush1.msra.mxu0 %v123
    %1483 = vmatprep.subr.mxu0 0.0
    %1484 = vmatpush1.msra.mxu0 %v124
    %1485 = vmatprep.subr.mxu0 0.0
    %1486 = vmatpush1.msra.mxu0 %v125
    %1487 = vmatprep.subr.mxu0 0.0
    %1488 = vmatpush1.msra.mxu0 %v126
    %1489 = vmatprep.subr.mxu0 0.0
    %1490 = vmatpush1.msra.mxu0 %v127
    %1491 = vmatprep.subr.mxu0 0.0
    %1492 = vmatpush1.msra.mxu0 %v128
    %1493 = vmatprep.subr.mxu0 0.0
    %1494 = vmatpush1.msra.mxu0 %v129
    %1495 = vmatprep.subr.mxu0 0.0
    %1496 = vmatpush1.msra.mxu0 %v130
    %1497 = vmatprep.subr.mxu0 0.0
    %1498 = vmatpush1.msra.mxu0 %v131
    %1499 = vmatprep.subr.mxu0 0.0
    %1500 = vmatpush1.msra.mxu0 %v132
    %1501 = vmatprep.subr.mxu0 0.0
    %1502 = vmatpush1.msra.mxu0 %v133
    %1503 = vmatprep.subr.mxu0 0.0
    %1504 = vmatpush1.msra.mxu0 %v134
    %1505 = vmatprep.subr.mxu0 0.0
    %1506 = vmatpush1.msra.mxu0 %v135
    %1507 = vmatprep.subr.mxu0 0.0
    %1508 = vmatpush1.msra.mxu0 %v136
    %1509 = vmatprep.subr.mxu0 0.0
    %1510 = vmatpush1.msra.mxu0 %v137
    %1511 = vmatprep.mubr.f32.mxu0 %v982
    %1512 = vmatmul.mubr.f32.gmra.mrb[0].mxu0 %v981
    %v1513 = vpop.f32.mrb[0].mxu0
    %v1514 = vadd.f32 %v895, %v1513
    %v1515 = vpop.f32.mrb[0].mxu0
    %1516 = vdwg.mxu0
    %1517 = vmatprep.subr.mxu0 0.0
    %1518 = vmatpush1.msra.mxu0 %v138
    %1519 = vmatprep.subr.mxu0 0.0
    %1520 = vmatpush1.msra.mxu0 %v139
    %1521 = vmatprep.subr.mxu0 0.0
    %1522 = vmatpush1.msra.mxu0 %v140
    %1523 = vmatprep.subr.mxu0 0.0
    %1524 = vmatpush1.msra.mxu0 %v141
    %1525 = vmatprep.subr.mxu0 0.0
    %1526 = vmatpush1.msra.mxu0 %v142
    %1527 = vmatprep.subr.mxu0 0.0
    %1528 = vmatpush1.msra.mxu0 %v143
    %1529 = vmatprep.subr.mxu0 0.0
    %1530 = vmatpush1.msra.mxu0 %v144
    %1531 = vmatprep.subr.mxu0 0.0
    %1532 = vmatpush1.msra.mxu0 %v145
    %1533 = vmatprep.subr.mxu0 0.0
    %1534 = vmatpush1.msra.mxu0 %v146
    %1535 = vmatprep.subr.mxu0 0.0
    %1536 = vmatpush1.msra.mxu0 %v147
    %1537 = vmatprep.subr.mxu0 0.0
    %1538 = vmatpush1.msra.mxu0 %v148
    %1539 = vmatprep.subr.mxu0 0.0
    %1540 = vmatpush1.msra.mxu0 %v149
    %1541 = vmatprep.subr.mxu0 0.0
    %1542 = vmatpush1.msra.mxu0 %v150
    %1543 = vmatprep.subr.mxu0 0.0
    %1544 = vmatpush1.msra.mxu0 %v151
    %1545 = vmatprep.subr.mxu0 0.0
    %1546 = vmatpush1.msra.mxu0 %v152
    %1547 = vmatprep.subr.mxu0 0.0
    %1548 = vmatpush1.msra.mxu0 %v153
    %1549 = vmatprep.subr.mxu0 0.0
    %1550 = vmatpush1.msra.mxu0 %v154
    %1551 = vmatprep.subr.mxu0 0.0
    %1552 = vmatpush1.msra.mxu0 %v155
    %1553 = vmatprep.subr.mxu0 0.0
    %1554 = vmatpush1.msra.mxu0 %v156
    %1555 = vmatprep.subr.mxu0 0.0
    %1556 = vmatpush1.msra.mxu0 %v157
    %1557 = vmatprep.subr.mxu0 0.0
    %1558 = vmatpush1.msra.mxu0 %v158
    %1559 = vmatprep.subr.mxu0 0.0
    %1560 = vmatpush1.msra.mxu0 %v159
    %1561 = vmatprep.subr.mxu0 0.0
    %1562 = vmatpush1.msra.mxu0 %v160
    %1563 = vmatprep.subr.mxu0 0.0
    %1564 = vmatpush1.msra.mxu0 %v161
    %1565 = vmatprep.subr.mxu0 0.0
    %1566 = vmatpush1.msra.mxu0 %v162
    %1567 = vmatprep.subr.mxu0 0.0
    %1568 = vmatpush1.msra.mxu0 %v163
    %1569 = vmatprep.subr.mxu0 0.0
    %1570 = vmatpush1.msra.mxu0 %v164
    %1571 = vmatprep.subr.mxu0 0.0
    %1572 = vmatpush1.msra.mxu0 %v165
    %1573 = vmatprep.subr.mxu0 0.0
    %1574 = vmatpush1.msra.mxu0 %v166
    %1575 = vmatprep.subr.mxu0 0.0
    %1576 = vmatpush1.msra.mxu0 %v167
    %1577 = vmatprep.subr.mxu0 0.0
    %1578 = vmatpush1.msra.mxu0 %v168
    %1579 = vmatprep.subr.mxu0 0.0
    %1580 = vmatpush1.msra.mxu0 %v169
    %1581 = vmatprep.mubr.f32.mxu0 %v984
    %1582 = vmatmul.mubr.f32.gmra.mrb[0].mxu0 %v983
    %v1583 = vpop.f32.mrb[0].mxu0
    %v1584 = vadd.f32 %v1514, %v1583
    %v1585 = vpop.f32.mrb[0].mxu0
    %1586 = vdwg.mxu0
    %1587 = vmatprep.subr.mxu0 0.0
    %1588 = vmatpush1.msra.mxu0 %v170
    %1589 = vmatprep.subr.mxu0 0.0
    %1590 = vmatpush1.msra.mxu0 %v171
    %1591 = vmatprep.subr.mxu0 0.0
    %1592 = vmatpush1.msra.mxu0 %v172
    %1593 = vmatprep.subr.mxu0 0.0
    %1594 = vmatpush1.msra.mxu0 %v173
    %1595 = vmatprep.subr.mxu0 0.0
    %1596 = vmatpush1.msra.mxu0 %v174
    %1597 = vmatprep.subr.mxu0 0.0
    %1598 = vmatpush1.msra.mxu0 %v175
    %1599 = vmatprep.subr.mxu0 0.0
    %1600 = vmatpush1.msra.mxu0 %v176
    %1601 = vmatprep.subr.mxu0 0.0
    %1602 = vmatpush1.msra.mxu0 %v177
    %1603 = vmatprep.subr.mxu0 0.0
    %1604 = vmatpush1.msra.mxu0 %v178
    %1605 = vmatprep.subr.mxu0 0.0
    %1606 = vmatpush1.msra.mxu0 %v179
    %1607 = vmatprep.subr.mxu0 0.0
    %1608 = vmatpush1.msra.mxu0 %v180
    %1609 = vmatprep.subr.mxu0 0.0
    %1610 = vmatpush1.msra.mxu0 %v181
    %1611 = vmatprep.subr.mxu0 0.0
    %1612 = vmatpush1.msra.mxu0 %v182
    %1613 = vmatprep.subr.mxu0 0.0
    %1614 = vmatpush1.msra.mxu0 %v183
    %1615 = vmatprep.subr.mxu0 0.0
    %1616 = vmatpush1.msra.mxu0 %v184
    %1617 = vmatprep.subr.mxu0 0.0
    %1618 = vmatpush1.msra.mxu0 %v185
    %1619 = vmatprep.subr.mxu0 0.0
    %1620 = vmatpush1.msra.mxu0 %v186
    %1621 = vmatprep.subr.mxu0 0.0
    %1622 = vmatpush1.msra.mxu0 %v187
    %1623 = vmatprep.subr.mxu0 0.0
    %1624 = vmatpush1.msra.mxu0 %v188
    %1625 = vmatprep.subr.mxu0 0.0
    %1626 = vmatpush1.msra.mxu0 %v189
    %1627 = vmatprep.subr.mxu0 0.0
    %1628 = vmatpush1.msra.mxu0 %v190
    %1629 = vmatprep.subr.mxu0 0.0
    %1630 = vmatpush1.msra.mxu0 %v191
    %1631 = vmatprep.subr.mxu0 0.0
    %1632 = vmatpush1.msra.mxu0 %v192
    %1633 = vmatprep.subr.mxu0 0.0
    %1634 = vmatpush1.msra.mxu0 %v193
    %1635 = vmatprep.subr.mxu0 0.0
    %1636 = vmatpush1.msra.mxu0 %v194
    %1637 = vmatprep.subr.mxu0 0.0
    %1638 = vmatpush1.msra.mxu0 %v195
    %1639 = vmatprep.subr.mxu0 0.0
    %1640 = vmatpush1.msra.mxu0 %v196
    %1641 = vmatprep.subr.mxu0 0.0
    %1642 = vmatpush1.msra.mxu0 %v197
    %1643 = vmatprep.subr.mxu0 0.0
    %1644 = vmatpush1.msra.mxu0 %v198
    %1645 = vmatprep.subr.mxu0 0.0
    %1646 = vmatpush1.msra.mxu0 %v199
    %1647 = vmatprep.subr.mxu0 0.0
    %1648 = vmatpush1.msra.mxu0 %v200
    %1649 = vmatprep.subr.mxu0 0.0
    %1650 = vmatpush1.msra.mxu0 %v201
    %1651 = vmatprep.mubr.f32.mxu0 %v1018
    %1652 = vmatmul.mubr.f32.gmra.mrb[0].mxu0 %v1017
    %v1653 = vpop.f32.mrb[0].mxu0
    %v1654 = vadd.f32 %v1584, %v1653
    %v1655 = vpop.f32.mrb[0].mxu0
    %1656 = vdwg.mxu0
    %1657 = vmatprep.subr.mxu0 0.0
    %1658 = vmatpush1.msra.mxu0 %v202
    %1659 = vmatprep.subr.mxu0 0.0
    %1660 = vmatpush1.msra.mxu0 %v203
    %1661 = vmatprep.subr.mxu0 0.0
    %1662 = vmatpush1.msra.mxu0 %v204
    %1663 = vmatprep.subr.mxu0 0.0
    %1664 = vmatpush1.msra.mxu0 %v205
    %1665 = vmatprep.subr.mxu0 0.0
    %1666 = vmatpush1.msra.mxu0 %v206
    %1667 = vmatprep.subr.mxu0 0.0
    %1668 = vmatpush1.msra.mxu0 %v207
    %1669 = vmatprep.subr.mxu0 0.0
    %1670 = vmatpush1.msra.mxu0 %v208
    %1671 = vmatprep.subr.mxu0 0.0
    %1672 = vmatpush1.msra.mxu0 %v209
    %1673 = vmatprep.subr.mxu0 0.0
    %1674 = vmatpush1.msra.mxu0 %v210
    %1675 = vmatprep.subr.mxu0 0.0
    %1676 = vmatpush1.msra.mxu0 %v211
    %1677 = vmatprep.subr.mxu0 0.0
    %1678 = vmatpush1.msra.mxu0 %v212
    %1679 = vmatprep.subr.mxu0 0.0
    %1680 = vmatpush1.msra.mxu0 %v213
    %1681 = vmatprep.subr.mxu0 0.0
    %1682 = vmatpush1.msra.mxu0 %v214
    %1683 = vmatprep.subr.mxu0 0.0
    %1684 = vmatpush1.msra.mxu0 %v215
    %1685 = vmatprep.subr.mxu0 0.0
    %1686 = vmatpush1.msra.mxu0 %v216
    %1687 = vmatprep.subr.mxu0 0.0
    %1688 = vmatpush1.msra.mxu0 %v217
    %1689 = vmatprep.subr.mxu0 0.0
    %1690 = vmatpush1.msra.mxu0 %v218
    %1691 = vmatprep.subr.mxu0 0.0
    %1692 = vmatpush1.msra.mxu0 %v219
    %1693 = vmatprep.subr.mxu0 0.0
    %1694 = vmatpush1.msra.mxu0 %v220
    %1695 = vmatprep.subr.mxu0 0.0
    %1696 = vmatpush1.msra.mxu0 %v221
    %1697 = vmatprep.subr.mxu0 0.0
    %1698 = vmatpush1.msra.mxu0 %v222
    %1699 = vmatprep.subr.mxu0 0.0
    %1700 = vmatpush1.msra.mxu0 %v223
    %1701 = vmatprep.subr.mxu0 0.0
    %1702 = vmatpush1.msra.mxu0 %v224
    %1703 = vmatprep.subr.mxu0 0.0
    %1704 = vmatpush1.msra.mxu0 %v225
    %1705 = vmatprep.subr.mxu0 0.0
    %1706 = vmatpush1.msra.mxu0 %v226
    %1707 = vmatprep.subr.mxu0 0.0
    %1708 = vmatpush1.msra.mxu0 %v227
    %1709 = vmatprep.subr.mxu0 0.0
    %1710 = vmatpush1.msra.mxu0 %v228
    %1711 = vmatprep.subr.mxu0 0.0
    %1712 = vmatpush1.msra.mxu0 %v229
    %1713 = vmatprep.subr.mxu0 0.0
    %1714 = vmatpush1.msra.mxu0 %v230
    %1715 = vmatprep.subr.mxu0 0.0
    %1716 = vmatpush1.msra.mxu0 %v231
    %1717 = vmatprep.subr.mxu0 0.0
    %1718 = vmatpush1.msra.mxu0 %v232
    %1719 = vmatprep.subr.mxu0 0.0
    %1720 = vmatpush1.msra.mxu0 %v233
    %1721 = vmatprep.mubr.f32.mxu0 %v1020
    %1722 = vmatmul.mubr.f32.gmra.mrb[0].mxu0 %v1019
    %v1723 = vpop.f32.mrb[0].mxu0
    %v1724 = vadd.f32 %v1654, %v1723
    %v1725 = vpop.f32.mrb[0].mxu0
    %1726 = vdwg.mxu0
    %1727 = vmatprep.subr.mxu0 0.0
    %1728 = vmatpush1.msra.mxu0 %v234
    %1729 = vmatprep.subr.mxu0 0.0
    %1730 = vmatpush1.msra.mxu0 %v235
    %1731 = vmatprep.subr.mxu0 0.0
    %1732 = vmatpush1.msra.mxu0 %v236
    %1733 = vmatprep.subr.mxu0 0.0
    %1734 = vmatpush1.msra.mxu0 %v237
    %1735 = vmatprep.subr.mxu0 0.0
    %1736 = vmatpush1.msra.mxu0 %v238
    %1737 = vmatprep.subr.mxu0 0.0
    %1738 = vmatpush1.msra.mxu0 %v239
    %1739 = vmatprep.subr.mxu0 0.0
    %1740 = vmatpush1.msra.mxu0 %v240
    %1741 = vmatprep.subr.mxu0 0.0
    %1742 = vmatpush1.msra.mxu0 %v241
    %1743 = vmatprep.subr.mxu0 0.0
    %1744 = vmatpush1.msra.mxu0 %v242
    %1745 = vmatprep.subr.mxu0 0.0
    %1746 = vmatpush1.msra.mxu0 %v243
    %1747 = vmatprep.subr.mxu0 0.0
    %1748 = vmatpush1.msra.mxu0 %v244
    %1749 = vmatprep.subr.mxu0 0.0
    %1750 = vmatpush1.msra.mxu0 %v245
    %1751 = vmatprep.subr.mxu0 0.0
    %1752 = vmatpush1.msra.mxu0 %v246
    %1753 = vmatprep.subr.mxu0 0.0
    %1754 = vmatpush1.msra.mxu0 %v247
    %1755 = vmatprep.subr.mxu0 0.0
    %1756 = vmatpush1.msra.mxu0 %v248
    %1757 = vmatprep.subr.mxu0 0.0
    %1758 = vmatpush1.msra.mxu0 %v249
    %1759 = vmatprep.subr.mxu0 0.0
    %1760 = vmatpush1.msra.mxu0 %v250
    %1761 = vmatprep.subr.mxu0 0.0
    %1762 = vmatpush1.msra.mxu0 %v251
    %1763 = vmatprep.subr.mxu0 0.0
    %1764 = vmatpush1.msra.mxu0 %v252
    %1765 = vmatprep.subr.mxu0 0.0
    %1766 = vmatpush1.msra.mxu0 %v253
    %1767 = vmatprep.subr.mxu0 0.0
    %1768 = vmatpush1.msra.mxu0 %v254
    %1769 = vmatprep.subr.mxu0 0.0
    %1770 = vmatpush1.msra.mxu0 %v255
    %1771 = vmatprep.subr.mxu0 0.0
    %1772 = vmatpush1.msra.mxu0 %v256
    %1773 = vmatprep.subr.mxu0 0.0
    %1774 = vmatpush1.msra.mxu0 %v257
    %1775 = vmatprep.subr.mxu0 0.0
    %1776 = vmatpush1.msra.mxu0 %v258
    %1777 = vmatprep.subr.mxu0 0.0
    %1778 = vmatpush1.msra.mxu0 %v259
    %1779 = vmatprep.subr.mxu0 0.0
    %1780 = vmatpush1.msra.mxu0 %v260
    %1781 = vmatprep.subr.mxu0 0.0
    %1782 = vmatpush1.msra.mxu0 %v261
    %1783 = vmatprep.subr.mxu0 0.0
    %1784 = vmatpush1.msra.mxu0 %v262
    %1785 = vmatprep.subr.mxu0 0.0
    %1786 = vmatpush1.msra.mxu0 %v263
    %1787 = vmatprep.subr.mxu0 0.0
    %1788 = vmatpush1.msra.mxu0 %v264
    %1789 = vmatprep.subr.mxu0 0.0
    %1790 = vmatpush1.msra.mxu0 %v265
    %1791 = vmatprep.mubr.f32.mxu0 %v1054
    %1792 = vmatmul.mubr.f32.gmra.mrb[0].mxu0 %v1053
    %v1793 = vpop.f32.mrb[0].mxu0
    %v1794 = vadd.f32 %v1724, %v1793
    %v1795 = vpop.f32.mrb[0].mxu0
    %1796 = vdwg.mxu0
    %1797 = vmatprep.subr.mxu0 0.0
    %1798 = vmatpush1.msra.mxu0 %v266
    %1799 = vmatprep.subr.mxu0 0.0
    %1800 = vmatpush1.msra.mxu0 %v267
    %1801 = vmatprep.subr.mxu0 0.0
    %1802 = vmatpush1.msra.mxu0 %v268
    %1803 = vmatprep.subr.mxu0 0.0
    %1804 = vmatpush1.msra.mxu0 %v269
    %1805 = vmatprep.subr.mxu0 0.0
    %1806 = vmatpush1.msra.mxu0 %v270
    %1807 = vmatprep.subr.mxu0 0.0
    %1808 = vmatpush1.msra.mxu0 %v271
    %1809 = vmatprep.subr.mxu0 0.0
    %1810 = vmatpush1.msra.mxu0 %v272
    %1811 = vmatprep.subr.mxu0 0.0
    %1812 = vmatpush1.msra.mxu0 %v273
    %1813 = vmatprep.subr.mxu0 0.0
    %1814 = vmatpush1.msra.mxu0 %v274
    %1815 = vmatprep.subr.mxu0 0.0
    %1816 = vmatpush1.msra.mxu0 %v275
    %1817 = vmatprep.subr.mxu0 0.0
    %1818 = vmatpush1.msra.mxu0 %v276
    %1819 = vmatprep.subr.mxu0 0.0
    %1820 = vmatpush1.msra.mxu0 %v277
    %1821 = vmatprep.subr.mxu0 0.0
    %1822 = vmatpush1.msra.mxu0 %v278
    %1823 = vmatprep.subr.mxu0 0.0
    %1824 = vmatpush1.msra.mxu0 %v279
    %1825 = vmatprep.subr.mxu0 0.0
    %1826 = vmatpush1.msra.mxu0 %v280
    %1827 = vmatprep.subr.mxu0 0.0
    %1828 = vmatpush1.msra.mxu0 %v281
    %1829 = vmatprep.subr.mxu0 0.0
    %1830 = vmatpush1.msra.mxu0 %v282
    %1831 = vmatprep.subr.mxu0 0.0
    %1832 = vmatpush1.msra.mxu0 %v283
    %1833 = vmatprep.subr.mxu0 0.0
    %1834 = vmatpush1.msra.mxu0 %v284
    %1835 = vmatprep.subr.mxu0 0.0
    %1836 = vmatpush1.msra.mxu0 %v285
    %1837 = vmatprep.subr.mxu0 0.0
    %1838 = vmatpush1.msra.mxu0 %v286
    %1839 = vmatprep.subr.mxu0 0.0
    %1840 = vmatpush1.msra.mxu0 %v287
    %1841 = vmatprep.subr.mxu0 0.0
    %1842 = vmatpush1.msra.mxu0 %v288
    %1843 = vmatprep.subr.mxu0 0.0
    %1844 = vmatpush1.msra.mxu0 %v289
    %1845 = vmatprep.subr.mxu0 0.0
    %1846 = vmatpush1.msra.mxu0 %v290
    %1847 = vmatprep.subr.mxu0 0.0
    %1848 = vmatpush1.msra.mxu0 %v291
    %1849 = vmatprep.subr.mxu0 0.0
    %1850 = vmatpush1.msra.mxu0 %v292
    %1851 = vmatprep.subr.mxu0 0.0
    %1852 = vmatpush1.msra.mxu0 %v293
    %1853 = vmatprep.subr.mxu0 0.0
    %1854 = vmatpush1.msra.mxu0 %v294
    %1855 = vmatprep.subr.mxu0 0.0
    %1856 = vmatpush1.msra.mxu0 %v295
    %1857 = vmatprep.subr.mxu0 0.0
    %1858 = vmatpush1.msra.mxu0 %v296
    %1859 = vmatprep.subr.mxu0 0.0
    %1860 = vmatpush1.msra.mxu0 %v297
    %1861 = vmatprep.mubr.f32.mxu0 %v1056
    %1862 = vmatmul.mubr.f32.gmra.mrb[0].mxu0 %v1055
    %v1863 = vpop.f32.mrb[0].mxu0
    %v1864 = vadd.f32 %v1794, %v1863
    %v1865 = vpop.f32.mrb[0].mxu0
    %1866 = vdwg.mxu0
    %1867 = vmatprep.subr.mxu0 0.0
    %1868 = vmatpush1.msra.mxu0 %v298
    %1869 = vmatprep.subr.mxu0 0.0
    %1870 = vmatpush1.msra.mxu0 %v299
    %1871 = vmatprep.subr.mxu0 0.0
    %1872 = vmatpush1.msra.mxu0 %v300
    %1873 = vmatprep.subr.mxu0 0.0
    %1874 = vmatpush1.msra.mxu0 %v301
    %1875 = vmatprep.subr.mxu0 0.0
    %1876 = vmatpush1.msra.mxu0 %v302
    %1877 = vmatprep.subr.mxu0 0.0
    %1878 = vmatpush1.msra.mxu0 %v303
    %1879 = vmatprep.subr.mxu0 0.0
    %1880 = vmatpush1.msra.mxu0 %v304
    %1881 = vmatprep.subr.mxu0 0.0
    %1882 = vmatpush1.msra.mxu0 %v305
    %1883 = vmatprep.subr.mxu0 0.0
    %1884 = vmatpush1.msra.mxu0 %v306
    %1885 = vmatprep.subr.mxu0 0.0
    %1886 = vmatpush1.msra.mxu0 %v307
    %1887 = vmatprep.subr.mxu0 0.0
    %1888 = vmatpush1.msra.mxu0 %v308
    %1889 = vmatprep.subr.mxu0 0.0
    %1890 = vmatpush1.msra.mxu0 %v309
    %1891 = vmatprep.subr.mxu0 0.0
    %1892 = vmatpush1.msra.mxu0 %v310
    %1893 = vmatprep.subr.mxu0 0.0
    %1894 = vmatpush1.msra.mxu0 %v311
    %1895 = vmatprep.subr.mxu0 0.0
    %1896 = vmatpush1.msra.mxu0 %v312
    %1897 = vmatprep.subr.mxu0 0.0
    %1898 = vmatpush1.msra.mxu0 %v313
    %1899 = vmatprep.subr.mxu0 0.0
    %1900 = vmatpush1.msra.mxu0 %v314
    %1901 = vmatprep.subr.mxu0 0.0
    %1902 = vmatpush1.msra.mxu0 %v315
    %1903 = vmatprep.subr.mxu0 0.0
    %1904 = vmatpush1.msra.mxu0 %v316
    %1905 = vmatprep.subr.mxu0 0.0
    %1906 = vmatpush1.msra.mxu0 %v317
    %1907 = vmatprep.subr.mxu0 0.0
    %1908 = vmatpush1.msra.mxu0 %v318
    %1909 = vmatprep.subr.mxu0 0.0
    %1910 = vmatpush1.msra.mxu0 %v319
    %1911 = vmatprep.subr.mxu0 0.0
    %1912 = vmatpush1.msra.mxu0 %v320
    %1913 = vmatprep.subr.mxu0 0.0
    %1914 = vmatpush1.msra.mxu0 %v321
    %1915 = vmatprep.subr.mxu0 0.0
    %1916 = vmatpush1.msra.mxu0 %v322
    %1917 = vmatprep.subr.mxu0 0.0
    %1918 = vmatpush1.msra.mxu0 %v323
    %1919 = vmatprep.subr.mxu0 0.0
    %1920 = vmatpush1.msra.mxu0 %v324
    %1921 = vmatprep.subr.mxu0 0.0
    %1922 = vmatpush1.msra.mxu0 %v325
    %1923 = vmatprep.subr.mxu0 0.0
    %1924 = vmatpush1.msra.mxu0 %v326
    %1925 = vmatprep.subr.mxu0 0.0
    %1926 = vmatpush1.msra.mxu0 %v327
    %1927 = vmatprep.subr.mxu0 0.0
    %1928 = vmatpush1.msra.mxu0 %v328
    %1929 = vmatprep.subr.mxu0 0.0
    %1930 = vmatpush1.msra.mxu0 %v329
    %1931 = vmatprep.mubr.f32.mxu0 %v1090
    %1932 = vmatmul.mubr.f32.gmra.mrb[0].mxu0 %v1089
    %v1933 = vpop.f32.mrb[0].mxu0
    %v1934 = vadd.f32 %v1864, %v1933
    %v1935 = vpop.f32.mrb[0].mxu0
    %1936 = vdwg.mxu0
    %1937 = vmatprep.subr.mxu0 0.0
    %1938 = vmatpush1.msra.mxu0 %v330
    %1939 = vmatprep.subr.mxu0 0.0
    %1940 = vmatpush1.msra.mxu0 %v331
    %1941 = vmatprep.subr.mxu0 0.0
    %1942 = vmatpush1.msra.mxu0 %v332
    %1943 = vmatprep.subr.mxu0 0.0
    %1944 = vmatpush1.msra.mxu0 %v333
    %1945 = vmatprep.subr.mxu0 0.0
    %1946 = vmatpush1.msra.mxu0 %v334
    %1947 = vmatprep.subr.mxu0 0.0
    %1948 = vmatpush1.msra.mxu0 %v335
    %1949 = vmatprep.subr.mxu0 0.0
    %1950 = vmatpush1.msra.mxu0 %v336
    %1951 = vmatprep.subr.mxu0 0.0
    %1952 = vmatpush1.msra.mxu0 %v337
    %1953 = vmatprep.subr.mxu0 0.0
    %1954 = vmatpush1.msra.mxu0 %v338
    %1955 = vmatprep.subr.mxu0 0.0
    %1956 = vmatpush1.msra.mxu0 %v339
    %1957 = vmatprep.subr.mxu0 0.0
    %1958 = vmatpush1.msra.mxu0 %v340
    %1959 = vmatprep.subr.mxu0 0.0
    %1960 = vmatpush1.msra.mxu0 %v341
    %1961 = vmatprep.subr.mxu0 0.0
    %1962 = vmatpush1.msra.mxu0 %v342
    %1963 = vmatprep.subr.mxu0 0.0
    %1964 = vmatpush1.msra.mxu0 %v343
    %1965 = vmatprep.subr.mxu0 0.0
    %1966 = vmatpush1.msra.mxu0 %v344
    %1967 = vmatprep.subr.mxu0 0.0
    %1968 = vmatpush1.msra.mxu0 %v345
    %1969 = vmatprep.subr.mxu0 0.0
    %1970 = vmatpush1.msra.mxu0 %v346
    %1971 = vmatprep.subr.mxu0 0.0
    %1972 = vmatpush1.msra.mxu0 %v347
    %1973 = vmatprep.subr.mxu0 0.0
    %1974 = vmatpush1.msra.mxu0 %v348
    %1975 = vmatprep.subr.mxu0 0.0
    %1976 = vmatpush1.msra.mxu0 %v349
    %1977 = vmatprep.subr.mxu0 0.0
    %1978 = vmatpush1.msra.mxu0 %v350
    %1979 = vmatprep.subr.mxu0 0.0
    %1980 = vmatpush1.msra.mxu0 %v351
    %1981 = vmatprep.subr.mxu0 0.0
    %1982 = vmatpush1.msra.mxu0 %v352
    %1983 = vmatprep.subr.mxu0 0.0
    %1984 = vmatpush1.msra.mxu0 %v353
    %1985 = vmatprep.subr.mxu0 0.0
    %1986 = vmatpush1.msra.mxu0 %v354
    %1987 = vmatprep.subr.mxu0 0.0
    %1988 = vmatpush1.msra.mxu0 %v355
    %1989 = vmatprep.subr.mxu0 0.0
    %1990 = vmatpush1.msra.mxu0 %v356
    %1991 = vmatprep.subr.mxu0 0.0
    %1992 = vmatpush1.msra.mxu0 %v357
    %1993 = vmatprep.subr.mxu0 0.0
    %1994 = vmatpush1.msra.mxu0 %v358
    %1995 = vmatprep.subr.mxu0 0.0
    %1996 = vmatpush1.msra.mxu0 %v359
    %1997 = vmatprep.subr.mxu0 0.0
    %1998 = vmatpush1.msra.mxu0 %v360
    %1999 = vmatprep.subr.mxu0 0.0
    %2000 = vmatpush1.msra.mxu0 %v361
    %2001 = vmatprep.mubr.f32.mxu0 %v1092
    %2002 = vmatmul.mubr.f32.gmra.mrb[0].mxu0 %v1091
    %v2003 = vpop.f32.mrb[0].mxu0
    %v2004 = vadd.f32 %v1934, %v2003
    %v2005 = vpop.f32.mrb[0].mxu0
    %2006 = vdwg.mxu0
    %2007 = vmatprep.subr.mxu0 0.0
    %2008 = vmatpush1.msra.mxu0 %v362
    %2009 = vmatprep.subr.mxu0 0.0
    %2010 = vmatpush1.msra.mxu0 %v363
    %2011 = vmatprep.subr.mxu0 0.0
    %2012 = vmatpush1.msra.mxu0 %v364
    %2013 = vmatprep.subr.mxu0 0.0
    %2014 = vmatpush1.msra.mxu0 %v365
    %2015 = vmatprep.subr.mxu0 0.0
    %2016 = vmatpush1.msra.mxu0 %v366
    %2017 = vmatprep.subr.mxu0 0.0
    %2018 = vmatpush1.msra.mxu0 %v367
    %2019 = vmatprep.subr.mxu0 0.0
    %2020 = vmatpush1.msra.mxu0 %v368
    %2021 = vmatprep.subr.mxu0 0.0
    %2022 = vmatpush1.msra.mxu0 %v369
    %2023 = vmatprep.subr.mxu0 0.0
    %2024 = vmatpush1.msra.mxu0 %v370
    %2025 = vmatprep.subr.mxu0 0.0
    %2026 = vmatpush1.msra.mxu0 %v371
    %2027 = vmatprep.subr.mxu0 0.0
    %2028 = vmatpush1.msra.mxu0 %v372
    %2029 = vmatprep.subr.mxu0 0.0
    %2030 = vmatpush1.msra.mxu0 %v373
    %2031 = vmatprep.subr.mxu0 0.0
    %2032 = vmatpush1.msra.mxu0 %v374
    %2033 = vmatprep.subr.mxu0 0.0
    %2034 = vmatpush1.msra.mxu0 %v375
    %2035 = vmatprep.subr.mxu0 0.0
    %2036 = vmatpush1.msra.mxu0 %v376
    %2037 = vmatprep.subr.mxu0 0.0
    %2038 = vmatpush1.msra.mxu0 %v377
    %2039 = vmatprep.subr.mxu0 0.0
    %2040 = vmatpush1.msra.mxu0 %v378
    %2041 = vmatprep.subr.mxu0 0.0
    %2042 = vmatpush1.msra.mxu0 %v379
    %2043 = vmatprep.subr.mxu0 0.0
    %2044 = vmatpush1.msra.mxu0 %v380
    %2045 = vmatprep.subr.mxu0 0.0
    %2046 = vmatpush1.msra.mxu0 %v381
    %2047 = vmatprep.subr.mxu0 0.0
    %2048 = vmatpush1.msra.mxu0 %v382
    %2049 = vmatprep.subr.mxu0 0.0
    %2050 = vmatpush1.msra.mxu0 %v383
    %2051 = vmatprep.subr.mxu0 0.0
    %2052 = vmatpush1.msra.mxu0 %v384
    %2053 = vmatprep.subr.mxu0 0.0
    %2054 = vmatpush1.msra.mxu0 %v385
    %2055 = vmatprep.subr.mxu0 0.0
    %2056 = vmatpush1.msra.mxu0 %v386
    %2057 = vmatprep.subr.mxu0 0.0
    %2058 = vmatpush1.msra.mxu0 %v387
    %2059 = vmatprep.subr.mxu0 0.0
    %2060 = vmatpush1.msra.mxu0 %v388
    %2061 = vmatprep.subr.mxu0 0.0
    %2062 = vmatpush1.msra.mxu0 %v389
    %2063 = vmatprep.subr.mxu0 0.0
    %2064 = vmatpush1.msra.mxu0 %v390
    %2065 = vmatprep.subr.mxu0 0.0
    %2066 = vmatpush1.msra.mxu0 %v391
    %2067 = vmatprep.subr.mxu0 0.0
    %2068 = vmatpush1.msra.mxu0 %v392
    %2069 = vmatprep.subr.mxu0 0.0
    %2070 = vmatpush1.msra.mxu0 %v393
    %2071 = vmatprep.mubr.f32.mxu0 %v1126
    %2072 = vmatmul.mubr.f32.gmra.mrb[0].mxu0 %v1125
    %v2073 = vpop.f32.mrb[0].mxu0
    %v2074 = vadd.f32 %v2004, %v2073
    %v2075 = vpop.f32.mrb[0].mxu0
    %2076 = vdwg.mxu0
    %2077 = vmatprep.subr.mxu0 0.0
    %2078 = vmatpush1.msra.mxu0 %v394
    %2079 = vmatprep.subr.mxu0 0.0
    %2080 = vmatpush1.msra.mxu0 %v395
    %2081 = vmatprep.subr.mxu0 0.0
    %2082 = vmatpush1.msra.mxu0 %v396
    %2083 = vmatprep.subr.mxu0 0.0
    %2084 = vmatpush1.msra.mxu0 %v397
    %2085 = vmatprep.subr.mxu0 0.0
    %2086 = vmatpush1.msra.mxu0 %v398
    %2087 = vmatprep.subr.mxu0 0.0
    %2088 = vmatpush1.msra.mxu0 %v399
    %2089 = vmatprep.subr.mxu0 0.0
    %2090 = vmatpush1.msra.mxu0 %v400
    %2091 = vmatprep.subr.mxu0 0.0
    %2092 = vmatpush1.msra.mxu0 %v401
    %2093 = vmatprep.subr.mxu0 0.0
    %2094 = vmatpush1.msra.mxu0 %v402
    %2095 = vmatprep.subr.mxu0 0.0
    %2096 = vmatpush1.msra.mxu0 %v403
    %2097 = vmatprep.subr.mxu0 0.0
    %2098 = vmatpush1.msra.mxu0 %v404
    %2099 = vmatprep.subr.mxu0 0.0
    %2100 = vmatpush1.msra.mxu0 %v405
    %2101 = vmatprep.subr.mxu0 0.0
    %2102 = vmatpush1.msra.mxu0 %v406
    %2103 = vmatprep.subr.mxu0 0.0
    %2104 = vmatpush1.msra.mxu0 %v407
    %2105 = vmatprep.subr.mxu0 0.0
    %2106 = vmatpush1.msra.mxu0 %v408
    %2107 = vmatprep.subr.mxu0 0.0
    %2108 = vmatpush1.msra.mxu0 %v409
    %2109 = vmatprep.subr.mxu0 0.0
    %2110 = vmatpush1.msra.mxu0 %v410
    %2111 = vmatprep.subr.mxu0 0.0
    %2112 = vmatpush1.msra.mxu0 %v411
    %2113 = vmatprep.subr.mxu0 0.0
    %2114 = vmatpush1.msra.mxu0 %v412
    %2115 = vmatprep.subr.mxu0 0.0
    %2116 = vmatpush1.msra.mxu0 %v413
    %2117 = vmatprep.subr.mxu0 0.0
    %2118 = vmatpush1.msra.mxu0 %v414
    %2119 = vmatprep.subr.mxu0 0.0
    %2120 = vmatpush1.msra.mxu0 %v415
    %2121 = vmatprep.subr.mxu0 0.0
    %2122 = vmatpush1.msra.mxu0 %v416
    %2123 = vmatprep.subr.mxu0 0.0
    %2124 = vmatpush1.msra.mxu0 %v417
    %2125 = vmatprep.subr.mxu0 0.0
    %2126 = vmatpush1.msra.mxu0 %v418
    %2127 = vmatprep.subr.mxu0 0.0
    %2128 = vmatpush1.msra.mxu0 %v419
    %2129 = vmatprep.subr.mxu0 0.0
    %2130 = vmatpush1.msra.mxu0 %v420
    %2131 = vmatprep.subr.mxu0 0.0
    %2132 = vmatpush1.msra.mxu0 %v421
    %2133 = vmatprep.subr.mxu0 0.0
    %2134 = vmatpush1.msra.mxu0 %v422
    %2135 = vmatprep.subr.mxu0 0.0
    %2136 = vmatpush1.msra.mxu0 %v423
    %2137 = vmatprep.subr.mxu0 0.0
    %2138 = vmatpush1.msra.mxu0 %v424
    %2139 = vmatprep.subr.mxu0 0.0
    %2140 = vmatpush1.msra.mxu0 %v425
    %2141 = vmatprep.mubr.f32.mxu0 %v1128
    %2142 = vmatmul.mubr.f32.gmra.mrb[0].mxu0 %v1127
    %v2143 = vpop.f32.mrb[0].mxu0
    %v2144 = vadd.f32 %v2074, %v2143
    %v2145 = vpop.f32.mrb[0].mxu0
    %2146 = vdwg.mxu0
    %2147 = vmatprep.subr.mxu0 0.0
    %2148 = vmatpush1.msra.mxu0 %v426
    %2149 = vmatprep.subr.mxu0 0.0
    %2150 = vmatpush1.msra.mxu0 %v427
    %2151 = vmatprep.subr.mxu0 0.0
    %2152 = vmatpush1.msra.mxu0 %v428
    %2153 = vmatprep.subr.mxu0 0.0
    %2154 = vmatpush1.msra.mxu0 %v429
    %2155 = vmatprep.subr.mxu0 0.0
    %2156 = vmatpush1.msra.mxu0 %v430
    %2157 = vmatprep.subr.mxu0 0.0
    %2158 = vmatpush1.msra.mxu0 %v431
    %2159 = vmatprep.subr.mxu0 0.0
    %2160 = vmatpush1.msra.mxu0 %v432
    %2161 = vmatprep.subr.mxu0 0.0
    %2162 = vmatpush1.msra.mxu0 %v433
    %2163 = vmatprep.subr.mxu0 0.0
    %2164 = vmatpush1.msra.mxu0 %v434
    %2165 = vmatprep.subr.mxu0 0.0
    %2166 = vmatpush1.msra.mxu0 %v435
    %2167 = vmatprep.subr.mxu0 0.0
    %2168 = vmatpush1.msra.mxu0 %v436
    %2169 = vmatprep.subr.mxu0 0.0
    %2170 = vmatpush1.msra.mxu0 %v437
    %2171 = vmatprep.subr.mxu0 0.0
    %2172 = vmatpush1.msra.mxu0 %v438
    %2173 = vmatprep.subr.mxu0 0.0
    %2174 = vmatpush1.msra.mxu0 %v439
    %2175 = vmatprep.subr.mxu0 0.0
    %2176 = vmatpush1.msra.mxu0 %v440
    %2177 = vmatprep.subr.mxu0 0.0
    %2178 = vmatpush1.msra.mxu0 %v441
    %2179 = vmatprep.subr.mxu0 0.0
    %2180 = vmatpush1.msra.mxu0 %v442
    %2181 = vmatprep.subr.mxu0 0.0
    %2182 = vmatpush1.msra.mxu0 %v443
    %2183 = vmatprep.subr.mxu0 0.0
    %2184 = vmatpush1.msra.mxu0 %v444
    %2185 = vmatprep.subr.mxu0 0.0
    %2186 = vmatpush1.msra.mxu0 %v445
    %2187 = vmatprep.subr.mxu0 0.0
    %2188 = vmatpush1.msra.mxu0 %v446
    %2189 = vmatprep.subr.mxu0 0.0
    %2190 = vmatpush1.msra.mxu0 %v447
    %2191 = vmatprep.subr.mxu0 0.0
    %2192 = vmatpush1.msra.mxu0 %v448
    %2193 = vmatprep.subr.mxu0 0.0
    %2194 = vmatpush1.msra.mxu0 %v449
    %2195 = vmatprep.subr.mxu0 0.0
    %2196 = vmatpush1.msra.mxu0 %v450
    %2197 = vmatprep.subr.mxu0 0.0
    %2198 = vmatpush1.msra.mxu0 %v451
    %2199 = vmatprep.subr.mxu0 0.0
    %2200 = vmatpush1.msra.mxu0 %v452
    %2201 = vmatprep.subr.mxu0 0.0
    %2202 = vmatpush1.msra.mxu0 %v453
    %2203 = vmatprep.subr.mxu0 0.0
    %2204 = vmatpush1.msra.mxu0 %v454
    %2205 = vmatprep.subr.mxu0 0.0
    %2206 = vmatpush1.msra.mxu0 %v455
    %2207 = vmatprep.subr.mxu0 0.0
    %2208 = vmatpush1.msra.mxu0 %v456
    %2209 = vmatprep.subr.mxu0 0.0
    %2210 = vmatpush1.msra.mxu0 %v457
    %2211 = vmatprep.mubr.f32.mxu0 %v1162
    %2212 = vmatmul.mubr.f32.gmra.mrb[0].mxu0 %v1161
    %v2213 = vpop.f32.mrb[0].mxu0
    %v2214 = vadd.f32 %v2144, %v2213
    %v2215 = vpop.f32.mrb[0].mxu0
    %2216 = vdwg.mxu0
    %2217 = vmatprep.subr.mxu0 0.0
    %2218 = vmatpush1.msra.mxu0 %v458
    %2219 = vmatprep.subr.mxu0 0.0
    %2220 = vmatpush1.msra.mxu0 %v459
    %2221 = vmatprep.subr.mxu0 0.0
    %2222 = vmatpush1.msra.mxu0 %v460
    %2223 = vmatprep.subr.mxu0 0.0
    %2224 = vmatpush1.msra.mxu0 %v461
    %2225 = vmatprep.subr.mxu0 0.0
    %2226 = vmatpush1.msra.mxu0 %v462
    %2227 = vmatprep.subr.mxu0 0.0
    %2228 = vmatpush1.msra.mxu0 %v463
    %2229 = vmatprep.subr.mxu0 0.0
    %2230 = vmatpush1.msra.mxu0 %v464
    %2231 = vmatprep.subr.mxu0 0.0
    %2232 = vmatpush1.msra.mxu0 %v465
    %2233 = vmatprep.subr.mxu0 0.0
    %2234 = vmatpush1.msra.mxu0 %v466
    %2235 = vmatprep.subr.mxu0 0.0
    %2236 = vmatpush1.msra.mxu0 %v467
    %2237 = vmatprep.subr.mxu0 0.0
    %2238 = vmatpush1.msra.mxu0 %v468
    %2239 = vmatprep.subr.mxu0 0.0
    %2240 = vmatpush1.msra.mxu0 %v469
    %2241 = vmatprep.subr.mxu0 0.0
    %2242 = vmatpush1.msra.mxu0 %v470
    %2243 = vmatprep.subr.mxu0 0.0
    %2244 = vmatpush1.msra.mxu0 %v471
    %2245 = vmatprep.subr.mxu0 0.0
    %2246 = vmatpush1.msra.mxu0 %v472
    %2247 = vmatprep.subr.mxu0 0.0
    %2248 = vmatpush1.msra.mxu0 %v473
    %2249 = vmatprep.subr.mxu0 0.0
    %2250 = vmatpush1.msra.mxu0 %v474
    %2251 = vmatprep.subr.mxu0 0.0
    %2252 = vmatpush1.msra.mxu0 %v475
    %2253 = vmatprep.subr.mxu0 0.0
    %2254 = vmatpush1.msra.mxu0 %v476
    %2255 = vmatprep.subr.mxu0 0.0
    %2256 = vmatpush1.msra.mxu0 %v477
    %2257 = vmatprep.subr.mxu0 0.0
    %2258 = vmatpush1.msra.mxu0 %v478
    %2259 = vmatprep.subr.mxu0 0.0
    %2260 = vmatpush1.msra.mxu0 %v479
    %2261 = vmatprep.subr.mxu0 0.0
    %2262 = vmatpush1.msra.mxu0 %v480
    %2263 = vmatprep.subr.mxu0 0.0
    %2264 = vmatpush1.msra.mxu0 %v481
    %2265 = vmatprep.subr.mxu0 0.0
    %2266 = vmatpush1.msra.mxu0 %v482
    %2267 = vmatprep.subr.mxu0 0.0
    %2268 = vmatpush1.msra.mxu0 %v483
    %2269 = vmatprep.subr.mxu0 0.0
    %2270 = vmatpush1.msra.mxu0 %v484
    %2271 = vmatprep.subr.mxu0 0.0
    %2272 = vmatpush1.msra.mxu0 %v485
    %2273 = vmatprep.subr.mxu0 0.0
    %2274 = vmatpush1.msra.mxu0 %v486
    %2275 = vmatprep.subr.mxu0 0.0
    %2276 = vmatpush1.msra.mxu0 %v487
    %2277 = vmatprep.subr.mxu0 0.0
    %2278 = vmatpush1.msra.mxu0 %v488
    %2279 = vmatprep.subr.mxu0 0.0
    %2280 = vmatpush1.msra.mxu0 %v489
    %2281 = vmatprep.mubr.f32.mxu0 %v1164
    %2282 = vmatmul.mubr.f32.gmra.mrb[0].mxu0 %v1163
    %v2283 = vpop.f32.mrb[0].mxu0
    %v2284 = vadd.f32 %v2214, %v2283
    %v2285 = vpop.f32.mrb[0].mxu0
    %2286 = vdwg.mxu0
    %2287 = vmatprep.subr.mxu0 0.0
    %2288 = vmatpush1.msra.mxu0 %v490
    %2289 = vmatprep.subr.mxu0 0.0
    %2290 = vmatpush1.msra.mxu0 %v491
    %2291 = vmatprep.subr.mxu0 0.0
    %2292 = vmatpush1.msra.mxu0 %v492
    %2293 = vmatprep.subr.mxu0 0.0
    %2294 = vmatpush1.msra.mxu0 %v493
    %2295 = vmatprep.subr.mxu0 0.0
    %2296 = vmatpush1.msra.mxu0 %v494
    %2297 = vmatprep.subr.mxu0 0.0
    %2298 = vmatpush1.msra.mxu0 %v495
    %2299 = vmatprep.subr.mxu0 0.0
    %2300 = vmatpush1.msra.mxu0 %v496
    %2301 = vmatprep.subr.mxu0 0.0
    %2302 = vmatpush1.msra.mxu0 %v497
    %2303 = vmatprep.subr.mxu0 0.0
    %2304 = vmatpush1.msra.mxu0 %v498
    %2305 = vmatprep.subr.mxu0 0.0
    %2306 = vmatpush1.msra.mxu0 %v499
    %2307 = vmatprep.subr.mxu0 0.0
    %2308 = vmatpush1.msra.mxu0 %v500
    %2309 = vmatprep.subr.mxu0 0.0
    %2310 = vmatpush1.msra.mxu0 %v501
    %2311 = vmatprep.subr.mxu0 0.0
    %2312 = vmatpush1.msra.mxu0 %v502
    %2313 = vmatprep.subr.mxu0 0.0
    %2314 = vmatpush1.msra.mxu0 %v503
    %2315 = vmatprep.subr.mxu0 0.0
    %2316 = vmatpush1.msra.mxu0 %v504
    %2317 = vmatprep.subr.mxu0 0.0
    %2318 = vmatpush1.msra.mxu0 %v505
    %2319 = vmatprep.subr.mxu0 0.0
    %2320 = vmatpush1.msra.mxu0 %v506
    %2321 = vmatprep.subr.mxu0 0.0
    %2322 = vmatpush1.msra.mxu0 %v507
    %2323 = vmatprep.subr.mxu0 0.0
    %2324 = vmatpush1.msra.mxu0 %v508
    %2325 = vmatprep.subr.mxu0 0.0
    %2326 = vmatpush1.msra.mxu0 %v509
    %2327 = vmatprep.subr.mxu0 0.0
    %2328 = vmatpush1.msra.mxu0 %v510
    %2329 = vmatprep.subr.mxu0 0.0
    %2330 = vmatpush1.msra.mxu0 %v511
    %2331 = vmatprep.subr.mxu0 0.0
    %2332 = vmatpush1.msra.mxu0 %v512
    %2333 = vmatprep.subr.mxu0 0.0
    %2334 = vmatpush1.msra.mxu0 %v513
    %2335 = vmatprep.subr.mxu0 0.0
    %2336 = vmatpush1.msra.mxu0 %v514
    %2337 = vmatprep.subr.mxu0 0.0
    %2338 = vmatpush1.msra.mxu0 %v515
    %2339 = vmatprep.subr.mxu0 0.0
    %2340 = vmatpush1.msra.mxu0 %v516
    %2341 = vmatprep.subr.mxu0 0.0
    %2342 = vmatpush1.msra.mxu0 %v517
    %2343 = vmatprep.subr.mxu0 0.0
    %2344 = vmatpush1.msra.mxu0 %v518
    %2345 = vmatprep.subr.mxu0 0.0
    %2346 = vmatpush1.msra.mxu0 %v519
    %2347 = vmatprep.subr.mxu0 0.0
    %2348 = vmatpush1.msra.mxu0 %v520
    %2349 = vmatprep.subr.mxu0 0.0
    %2350 = vmatpush1.msra.mxu0 %v521
    %2351 = vmatprep.mubr.f32.mxu0 %v1198
    %2352 = vmatmul.mubr.f32.gmra.mrb[0].mxu0 %v1197
    %v2353 = vpop.f32.mrb[0].mxu0
    %v2354 = vadd.f32 %v2284, %v2353
    %v2355 = vpop.f32.mrb[0].mxu0
    %2356 = vdwg.mxu0
    %2357 = vmatprep.subr.mxu0 0.0
    %2358 = vmatpush1.msra.mxu0 %v522
    %2359 = vmatprep.subr.mxu0 0.0
    %2360 = vmatpush1.msra.mxu0 %v523
    %2361 = vmatprep.subr.mxu0 0.0
    %2362 = vmatpush1.msra.mxu0 %v524
    %2363 = vmatprep.subr.mxu0 0.0
    %2364 = vmatpush1.msra.mxu0 %v525
    %2365 = vmatprep.subr.mxu0 0.0
    %2366 = vmatpush1.msra.mxu0 %v526
    %2367 = vmatprep.subr.mxu0 0.0
    %2368 = vmatpush1.msra.mxu0 %v527
    %2369 = vmatprep.subr.mxu0 0.0
    %2370 = vmatpush1.msra.mxu0 %v528
    %2371 = vmatprep.subr.mxu0 0.0
    %2372 = vmatpush1.msra.mxu0 %v529
    %2373 = vmatprep.subr.mxu0 0.0
    %2374 = vmatpush1.msra.mxu0 %v530
    %2375 = vmatprep.subr.mxu0 0.0
    %2376 = vmatpush1.msra.mxu0 %v531
    %2377 = vmatprep.subr.mxu0 0.0
    %2378 = vmatpush1.msra.mxu0 %v532
    %2379 = vmatprep.subr.mxu0 0.0
    %2380 = vmatpush1.msra.mxu0 %v533
    %2381 = vmatprep.subr.mxu0 0.0
    %2382 = vmatpush1.msra.mxu0 %v534
    %2383 = vmatprep.subr.mxu0 0.0
    %2384 = vmatpush1.msra.mxu0 %v535
    %2385 = vmatprep.subr.mxu0 0.0
    %2386 = vmatpush1.msra.mxu0 %v536
    %2387 = vmatprep.subr.mxu0 0.0
    %2388 = vmatpush1.msra.mxu0 %v537
    %2389 = vmatprep.subr.mxu0 0.0
    %2390 = vmatpush1.msra.mxu0 %v538
    %2391 = vmatprep.subr.mxu0 0.0
    %2392 = vmatpush1.msra.mxu0 %v539
    %2393 = vmatprep.subr.mxu0 0.0
    %2394 = vmatpush1.msra.mxu0 %v540
    %2395 = vmatprep.subr.mxu0 0.0
    %2396 = vmatpush1.msra.mxu0 %v541
    %2397 = vmatprep.subr.mxu0 0.0
    %2398 = vmatpush1.msra.mxu0 %v542
    %2399 = vmatprep.subr.mxu0 0.0
    %2400 = vmatpush1.msra.mxu0 %v543
    %2401 = vmatprep.subr.mxu0 0.0
    %2402 = vmatpush1.msra.mxu0 %v544
    %2403 = vmatprep.subr.mxu0 0.0
    %2404 = vmatpush1.msra.mxu0 %v545
    %2405 = vmatprep.subr.mxu0 0.0
    %2406 = vmatpush1.msra.mxu0 %v546
    %2407 = vmatprep.subr.mxu0 0.0
    %2408 = vmatpush1.msra.mxu0 %v547
    %2409 = vmatprep.subr.mxu0 0.0
    %2410 = vmatpush1.msra.mxu0 %v548
    %2411 = vmatprep.subr.mxu0 0.0
    %2412 = vmatpush1.msra.mxu0 %v549
    %2413 = vmatprep.subr.mxu0 0.0
    %2414 = vmatpush1.msra.mxu0 %v550
    %2415 = vmatprep.subr.mxu0 0.0
    %2416 = vmatpush1.msra.mxu0 %v551
    %2417 = vmatprep.subr.mxu0 0.0
    %2418 = vmatpush1.msra.mxu0 %v552
    %2419 = vmatprep.subr.mxu0 0.0
    %2420 = vmatpush1.msra.mxu0 %v553
    %2421 = vmatprep.mubr.f32.mxu0 %v1200
    %2422 = vmatmul.mubr.f32.gmra.mrb[0].mxu0 %v1199
    %v2423 = vpop.f32.mrb[0].mxu0
    %v2424 = vadd.f32 %v2354, %v2423
    %v2425 = vpop.f32.mrb[0].mxu0
    %2426 = vdwg.mxu0
    %2427 = vmatprep.subr.mxu0 0.0
    %2428 = vmatpush1.msra.mxu0 %v554
    %2429 = vmatprep.subr.mxu0 0.0
    %2430 = vmatpush1.msra.mxu0 %v555
    %2431 = vmatprep.subr.mxu0 0.0
    %2432 = vmatpush1.msra.mxu0 %v556
    %2433 = vmatprep.subr.mxu0 0.0
    %2434 = vmatpush1.msra.mxu0 %v557
    %2435 = vmatprep.subr.mxu0 0.0
    %2436 = vmatpush1.msra.mxu0 %v558
    %2437 = vmatprep.subr.mxu0 0.0
    %2438 = vmatpush1.msra.mxu0 %v559
    %2439 = vmatprep.subr.mxu0 0.0
    %2440 = vmatpush1.msra.mxu0 %v560
    %2441 = vmatprep.subr.mxu0 0.0
    %2442 = vmatpush1.msra.mxu0 %v561
    %2443 = vmatprep.subr.mxu0 0.0
    %2444 = vmatpush1.msra.mxu0 %v562
    %2445 = vmatprep.subr.mxu0 0.0
    %2446 = vmatpush1.msra.mxu0 %v563
    %2447 = vmatprep.subr.mxu0 0.0
    %2448 = vmatpush1.msra.mxu0 %v564
    %2449 = vmatprep.subr.mxu0 0.0
    %2450 = vmatpush1.msra.mxu0 %v565
    %2451 = vmatprep.subr.mxu0 0.0
    %2452 = vmatpush1.msra.mxu0 %v566
    %2453 = vmatprep.subr.mxu0 0.0
    %2454 = vmatpush1.msra.mxu0 %v567
    %2455 = vmatprep.subr.mxu0 0.0
    %2456 = vmatpush1.msra.mxu0 %v568
    %2457 = vmatprep.subr.mxu0 0.0
    %2458 = vmatpush1.msra.mxu0 %v569
    %2459 = vmatprep.subr.mxu0 0.0
    %2460 = vmatpush1.msra.mxu0 %v570
    %2461 = vmatprep.subr.mxu0 0.0
    %2462 = vmatpush1.msra.mxu0 %v571
    %2463 = vmatprep.subr.mxu0 0.0
    %2464 = vmatpush1.msra.mxu0 %v572
    %2465 = vmatprep.subr.mxu0 0.0
    %2466 = vmatpush1.msra.mxu0 %v573
    %2467 = vmatprep.subr.mxu0 0.0
    %2468 = vmatpush1.msra.mxu0 %v574
    %2469 = vmatprep.subr.mxu0 0.0
    %2470 = vmatpush1.msra.mxu0 %v575
    %2471 = vmatprep.subr.mxu0 0.0
    %2472 = vmatpush1.msra.mxu0 %v576
    %2473 = vmatprep.subr.mxu0 0.0
    %2474 = vmatpush1.msra.mxu0 %v577
    %2475 = vmatprep.subr.mxu0 0.0
    %2476 = vmatpush1.msra.mxu0 %v578
    %2477 = vmatprep.subr.mxu0 0.0
    %2478 = vmatpush1.msra.mxu0 %v579
    %2479 = vmatprep.subr.mxu0 0.0
    %2480 = vmatpush1.msra.mxu0 %v580
    %2481 = vmatprep.subr.mxu0 0.0
    %2482 = vmatpush1.msra.mxu0 %v581
    %2483 = vmatprep.subr.mxu0 0.0
    %2484 = vmatpush1.msra.mxu0 %v582
    %2485 = vmatprep.subr.mxu0 0.0
    %2486 = vmatpush1.msra.mxu0 %v583
    %2487 = vmatprep.subr.mxu0 0.0
    %2488 = vmatpush1.msra.mxu0 %v584
    %2489 = vmatprep.subr.mxu0 0.0
    %2490 = vmatpush1.msra.mxu0 %v585
    %2491 = vmatprep.mubr.f32.mxu0 %v1234
    %2492 = vmatmul.mubr.f32.gmra.mrb[0].mxu0 %v1233
    %v2493 = vpop.f32.mrb[0].mxu0
    %v2494 = vadd.f32 %v2424, %v2493
    %v2495 = vpop.f32.mrb[0].mxu0
    %2496 = vdwg.mxu0
    %2497 = vmatprep.subr.mxu0 0.0
    %2498 = vmatpush1.msra.mxu0 %v586
    %2499 = vmatprep.subr.mxu0 0.0
    %2500 = vmatpush1.msra.mxu0 %v587
    %2501 = vmatprep.subr.mxu0 0.0
    %2502 = vmatpush1.msra.mxu0 %v588
    %2503 = vmatprep.subr.mxu0 0.0
    %2504 = vmatpush1.msra.mxu0 %v589
    %2505 = vmatprep.subr.mxu0 0.0
    %2506 = vmatpush1.msra.mxu0 %v590
    %2507 = vmatprep.subr.mxu0 0.0
    %2508 = vmatpush1.msra.mxu0 %v591
    %2509 = vmatprep.subr.mxu0 0.0
    %2510 = vmatpush1.msra.mxu0 %v592
    %2511 = vmatprep.subr.mxu0 0.0
    %2512 = vmatpush1.msra.mxu0 %v593
    %2513 = vmatprep.subr.mxu0 0.0
    %2514 = vmatpush1.msra.mxu0 %v594
    %2515 = vmatprep.subr.mxu0 0.0
    %2516 = vmatpush1.msra.mxu0 %v595
    %2517 = vmatprep.subr.mxu0 0.0
    %2518 = vmatpush1.msra.mxu0 %v596
    %2519 = vmatprep.subr.mxu0 0.0
    %2520 = vmatpush1.msra.mxu0 %v597
    %2521 = vmatprep.subr.mxu0 0.0
    %2522 = vmatpush1.msra.mxu0 %v598
    %2523 = vmatprep.subr.mxu0 0.0
    %2524 = vmatpush1.msra.mxu0 %v599
    %2525 = vmatprep.subr.mxu0 0.0
    %2526 = vmatpush1.msra.mxu0 %v600
    %2527 = vmatprep.subr.mxu0 0.0
    %2528 = vmatpush1.msra.mxu0 %v601
    %2529 = vmatprep.subr.mxu0 0.0
    %2530 = vmatpush1.msra.mxu0 %v602
    %2531 = vmatprep.subr.mxu0 0.0
    %2532 = vmatpush1.msra.mxu0 %v603
    %2533 = vmatprep.subr.mxu0 0.0
    %2534 = vmatpush1.msra.mxu0 %v604
    %2535 = vmatprep.subr.mxu0 0.0
    %2536 = vmatpush1.msra.mxu0 %v605
    %2537 = vmatprep.subr.mxu0 0.0
    %2538 = vmatpush1.msra.mxu0 %v606
    %2539 = vmatprep.subr.mxu0 0.0
    %2540 = vmatpush1.msra.mxu0 %v607
    %2541 = vmatprep.subr.mxu0 0.0
    %2542 = vmatpush1.msra.mxu0 %v608
    %2543 = vmatprep.subr.mxu0 0.0
    %2544 = vmatpush1.msra.mxu0 %v609
    %2545 = vmatprep.subr.mxu0 0.0
    %2546 = vmatpush1.msra.mxu0 %v610
    %2547 = vmatprep.subr.mxu0 0.0
    %2548 = vmatpush1.msra.mxu0 %v611
    %2549 = vmatprep.subr.mxu0 0.0
    %2550 = vmatpush1.msra.mxu0 %v612
    %2551 = vmatprep.subr.mxu0 0.0
    %2552 = vmatpush1.msra.mxu0 %v613
    %2553 = vmatprep.subr.mxu0 0.0
    %2554 = vmatpush1.msra.mxu0 %v614
    %2555 = vmatprep.subr.mxu0 0.0
    %2556 = vmatpush1.msra.mxu0 %v615
    %2557 = vmatprep.subr.mxu0 0.0
    %2558 = vmatpush1.msra.mxu0 %v616
    %2559 = vmatprep.subr.mxu0 0.0
    %2560 = vmatpush1.msra.mxu0 %v617
    %2561 = vmatprep.mubr.f32.mxu0 %v1236
    %2562 = vmatmul.mubr.f32.gmra.mrb[0].mxu0 %v1235
    %v2563 = vpop.f32.mrb[0].mxu0
    %v2564 = vadd.f32 %v2494, %v2563
    %v2565 = vpop.f32.mrb[0].mxu0
    %2566 = vdwg.mxu0
    %2567 = vmatprep.subr.mxu0 0.0
    %2568 = vmatpush1.msra.mxu0 %v618
    %2569 = vmatprep.subr.mxu0 0.0
    %2570 = vmatpush1.msra.mxu0 %v619
    %2571 = vmatprep.subr.mxu0 0.0
    %2572 = vmatpush1.msra.mxu0 %v620
    %2573 = vmatprep.subr.mxu0 0.0
    %2574 = vmatpush1.msra.mxu0 %v621
    %2575 = vmatprep.subr.mxu0 0.0
    %2576 = vmatpush1.msra.mxu0 %v622
    %2577 = vmatprep.subr.mxu0 0.0
    %2578 = vmatpush1.msra.mxu0 %v623
    %2579 = vmatprep.subr.mxu0 0.0
    %2580 = vmatpush1.msra.mxu0 %v624
    %2581 = vmatprep.subr.mxu0 0.0
    %2582 = vmatpush1.msra.mxu0 %v625
    %2583 = vmatprep.subr.mxu0 0.0
    %2584 = vmatpush1.msra.mxu0 %v626
    %2585 = vmatprep.subr.mxu0 0.0
    %2586 = vmatpush1.msra.mxu0 %v627
    %2587 = vmatprep.subr.mxu0 0.0
    %2588 = vmatpush1.msra.mxu0 %v628
    %2589 = vmatprep.subr.mxu0 0.0
    %2590 = vmatpush1.msra.mxu0 %v629
    %2591 = vmatprep.subr.mxu0 0.0
    %2592 = vmatpush1.msra.mxu0 %v630
    %2593 = vmatprep.subr.mxu0 0.0
    %2594 = vmatpush1.msra.mxu0 %v631
    %2595 = vmatprep.subr.mxu0 0.0
    %2596 = vmatpush1.msra.mxu0 %v632
    %2597 = vmatprep.subr.mxu0 0.0
    %2598 = vmatpush1.msra.mxu0 %v633
    %2599 = vmatprep.subr.mxu0 0.0
    %2600 = vmatpush1.msra.mxu0 %v634
    %2601 = vmatprep.subr.mxu0 0.0
    %2602 = vmatpush1.msra.mxu0 %v635
    %2603 = vmatprep.subr.mxu0 0.0
    %2604 = vmatpush1.msra.mxu0 %v636
    %2605 = vmatprep.subr.mxu0 0.0
    %2606 = vmatpush1.msra.mxu0 %v637
    %2607 = vmatprep.subr.mxu0 0.0
    %2608 = vmatpush1.msra.mxu0 %v638
    %2609 = vmatprep.subr.mxu0 0.0
    %2610 = vmatpush1.msra.mxu0 %v639
    %2611 = vmatprep.subr.mxu0 0.0
    %2612 = vmatpush1.msra.mxu0 %v640
    %2613 = vmatprep.subr.mxu0 0.0
    %2614 = vmatpush1.msra.mxu0 %v641
    %2615 = vmatprep.subr.mxu0 0.0
    %2616 = vmatpush1.msra.mxu0 %v642
    %2617 = vmatprep.subr.mxu0 0.0
    %2618 = vmatpush1.msra.mxu0 %v643
    %2619 = vmatprep.subr.mxu0 0.0
    %2620 = vmatpush1.msra.mxu0 %v644
    %2621 = vmatprep.subr.mxu0 0.0
    %2622 = vmatpush1.msra.mxu0 %v645
    %2623 = vmatprep.subr.mxu0 0.0
    %2624 = vmatpush1.msra.mxu0 %v646
    %2625 = vmatprep.subr.mxu0 0.0
    %2626 = vmatpush1.msra.mxu0 %v647
    %2627 = vmatprep.subr.mxu0 0.0
    %2628 = vmatpush1.msra.mxu0 %v648
    %2629 = vmatprep.subr.mxu0 0.0
    %2630 = vmatpush1.msra.mxu0 %v649
    %2631 = vmatprep.mubr.f32.mxu0 %v1270
    %2632 = vmatmul.mubr.f32.gmra.mrb[0].mxu0 %v1269
    %v2633 = vpop.f32.mrb[0].mxu0
    %v2634 = vadd.f32 %v2564, %v2633
    %v2635 = vpop.f32.mrb[0].mxu0
    %2636 = vdwg.mxu0
    %2637 = vmatprep.subr.mxu0 0.0
    %2638 = vmatpush1.msra.mxu0 %v650
    %2639 = vmatprep.subr.mxu0 0.0
    %2640 = vmatpush1.msra.mxu0 %v651
    %2641 = vmatprep.subr.mxu0 0.0
    %2642 = vmatpush1.msra.mxu0 %v652
    %2643 = vmatprep.subr.mxu0 0.0
    %2644 = vmatpush1.msra.mxu0 %v653
    %2645 = vmatprep.subr.mxu0 0.0
    %2646 = vmatpush1.msra.mxu0 %v654
    %2647 = vmatprep.subr.mxu0 0.0
    %2648 = vmatpush1.msra.mxu0 %v655
    %2649 = vmatprep.subr.mxu0 0.0
    %2650 = vmatpush1.msra.mxu0 %v656
    %2651 = vmatprep.subr.mxu0 0.0
    %2652 = vmatpush1.msra.mxu0 %v657
    %2653 = vmatprep.subr.mxu0 0.0
    %2654 = vmatpush1.msra.mxu0 %v658
    %2655 = vmatprep.subr.mxu0 0.0
    %2656 = vmatpush1.msra.mxu0 %v659
    %2657 = vmatprep.subr.mxu0 0.0
    %2658 = vmatpush1.msra.mxu0 %v660
    %2659 = vmatprep.subr.mxu0 0.0
    %2660 = vmatpush1.msra.mxu0 %v661
    %2661 = vmatprep.subr.mxu0 0.0
    %2662 = vmatpush1.msra.mxu0 %v662
    %2663 = vmatprep.subr.mxu0 0.0
    %2664 = vmatpush1.msra.mxu0 %v663
    %2665 = vmatprep.subr.mxu0 0.0
    %2666 = vmatpush1.msra.mxu0 %v664
    %2667 = vmatprep.subr.mxu0 0.0
    %2668 = vmatpush1.msra.mxu0 %v665
    %2669 = vmatprep.subr.mxu0 0.0
    %2670 = vmatpush1.msra.mxu0 %v666
    %2671 = vmatprep.subr.mxu0 0.0
    %2672 = vmatpush1.msra.mxu0 %v667
    %2673 = vmatprep.subr.mxu0 0.0
    %2674 = vmatpush1.msra.mxu0 %v668
    %2675 = vmatprep.subr.mxu0 0.0
    %2676 = vmatpush1.msra.mxu0 %v669
    %2677 = vmatprep.subr.mxu0 0.0
    %2678 = vmatpush1.msra.mxu0 %v670
    %2679 = vmatprep.subr.mxu0 0.0
    %2680 = vmatpush1.msra.mxu0 %v671
    %2681 = vmatprep.subr.mxu0 0.0
    %2682 = vmatpush1.msra.mxu0 %v672
    %2683 = vmatprep.subr.mxu0 0.0
    %2684 = vmatpush1.msra.mxu0 %v673
    %2685 = vmatprep.subr.mxu0 0.0
    %2686 = vmatpush1.msra.mxu0 %v674
    %2687 = vmatprep.subr.mxu0 0.0
    %2688 = vmatpush1.msra.mxu0 %v675
    %2689 = vmatprep.subr.mxu0 0.0
    %2690 = vmatpush1.msra.mxu0 %v676
    %2691 = vmatprep.subr.mxu0 0.0
    %2692 = vmatpush1.msra.mxu0 %v677
    %2693 = vmatprep.subr.mxu0 0.0
    %2694 = vmatpush1.msra.mxu0 %v678
    %2695 = vmatprep.subr.mxu0 0.0
    %2696 = vmatpush1.msra.mxu0 %v679
    %2697 = vmatprep.subr.mxu0 0.0
    %2698 = vmatpush1.msra.mxu0 %v680
    %2699 = vmatprep.subr.mxu0 0.0
    %2700 = vmatpush1.msra.mxu0 %v681
    %2701 = vmatprep.mubr.f32.mxu0 %v1272
    %2702 = vmatmul.mubr.f32.gmra.mrb[0].mxu0 %v1271
    %v2703 = vpop.f32.mrb[0].mxu0
    %v2704 = vadd.f32 %v2634, %v2703
    %v2705 = vpop.f32.mrb[0].mxu0
    %2706 = vdwg.mxu0
    %2707 = vmatprep.subr.mxu0 0.0
    %2708 = vmatpush1.msra.mxu0 %v682
    %2709 = vmatprep.subr.mxu0 0.0
    %2710 = vmatpush1.msra.mxu0 %v683
    %2711 = vmatprep.subr.mxu0 0.0
    %2712 = vmatpush1.msra.mxu0 %v684
    %2713 = vmatprep.subr.mxu0 0.0
    %2714 = vmatpush1.msra.mxu0 %v685
    %2715 = vmatprep.subr.mxu0 0.0
    %2716 = vmatpush1.msra.mxu0 %v686
    %2717 = vmatprep.subr.mxu0 0.0
    %2718 = vmatpush1.msra.mxu0 %v687
    %2719 = vmatprep.subr.mxu0 0.0
    %2720 = vmatpush1.msra.mxu0 %v688
    %2721 = vmatprep.subr.mxu0 0.0
    %2722 = vmatpush1.msra.mxu0 %v689
    %2723 = vmatprep.subr.mxu0 0.0
    %2724 = vmatpush1.msra.mxu0 %v690
    %2725 = vmatprep.subr.mxu0 0.0
    %2726 = vmatpush1.msra.mxu0 %v691
    %2727 = vmatprep.subr.mxu0 0.0
    %2728 = vmatpush1.msra.mxu0 %v692
    %2729 = vmatprep.subr.mxu0 0.0
    %2730 = vmatpush1.msra.mxu0 %v693
    %2731 = vmatprep.subr.mxu0 0.0
    %2732 = vmatpush1.msra.mxu0 %v694
    %2733 = vmatprep.subr.mxu0 0.0
    %2734 = vmatpush1.msra.mxu0 %v695
    %2735 = vmatprep.subr.mxu0 0.0
    %2736 = vmatpush1.msra.mxu0 %v696
    %2737 = vmatprep.subr.mxu0 0.0
    %2738 = vmatpush1.msra.mxu0 %v697
    %2739 = vmatprep.subr.mxu0 0.0
    %2740 = vmatpush1.msra.mxu0 %v698
    %2741 = vmatprep.subr.mxu0 0.0
    %2742 = vmatpush1.msra.mxu0 %v699
    %2743 = vmatprep.subr.mxu0 0.0
    %2744 = vmatpush1.msra.mxu0 %v700
    %2745 = vmatprep.subr.mxu0 0.0
    %2746 = vmatpush1.msra.mxu0 %v701
    %2747 = vmatprep.subr.mxu0 0.0
    %2748 = vmatpush1.msra.mxu0 %v702
    %2749 = vmatprep.subr.mxu0 0.0
    %2750 = vmatpush1.msra.mxu0 %v703
    %2751 = vmatprep.subr.mxu0 0.0
    %2752 = vmatpush1.msra.mxu0 %v704
    %2753 = vmatprep.subr.mxu0 0.0
    %2754 = vmatpush1.msra.mxu0 %v705
    %2755 = vmatprep.subr.mxu0 0.0
    %2756 = vmatpush1.msra.mxu0 %v706
    %2757 = vmatprep.subr.mxu0 0.0
    %2758 = vmatpush1.msra.mxu0 %v707
    %2759 = vmatprep.subr.mxu0 0.0
    %2760 = vmatpush1.msra.mxu0 %v708
    %2761 = vmatprep.subr.mxu0 0.0
    %2762 = vmatpush1.msra.mxu0 %v709
    %2763 = vmatprep.subr.mxu0 0.0
    %2764 = vmatpush1.msra.mxu0 %v710
    %2765 = vmatprep.subr.mxu0 0.0
    %2766 = vmatpush1.msra.mxu0 %v711
    %2767 = vmatprep.subr.mxu0 0.0
    %2768 = vmatpush1.msra.mxu0 %v712
    %2769 = vmatprep.subr.mxu0 0.0
    %2770 = vmatpush1.msra.mxu0 %v713
    %2771 = vmatprep.mubr.f32.mxu0 %v1306
    %2772 = vmatmul.mubr.f32.gmra.mrb[0].mxu0 %v1305
    %v2773 = vpop.f32.mrb[0].mxu0
    %v2774 = vadd.f32 %v2704, %v2773
    %v2775 = vpop.f32.mrb[0].mxu0
    %2776 = vdwg.mxu0
    %2777 = vmatprep.subr.mxu0 0.0
    %2778 = vmatpush1.msra.mxu0 %v714
    %2779 = vmatprep.subr.mxu0 0.0
    %2780 = vmatpush1.msra.mxu0 %v715
    %2781 = vmatprep.subr.mxu0 0.0
    %2782 = vmatpush1.msra.mxu0 %v716
    %2783 = vmatprep.subr.mxu0 0.0
    %2784 = vmatpush1.msra.mxu0 %v717
    %2785 = vmatprep.subr.mxu0 0.0
    %2786 = vmatpush1.msra.mxu0 %v718
    %2787 = vmatprep.subr.mxu0 0.0
    %2788 = vmatpush1.msra.mxu0 %v719
    %2789 = vmatprep.subr.mxu0 0.0
    %2790 = vmatpush1.msra.mxu0 %v720
    %2791 = vmatprep.subr.mxu0 0.0
    %2792 = vmatpush1.msra.mxu0 %v721
    %2793 = vmatprep.subr.mxu0 0.0
    %2794 = vmatpush1.msra.mxu0 %v722
    %2795 = vmatprep.subr.mxu0 0.0
    %2796 = vmatpush1.msra.mxu0 %v723
    %2797 = vmatprep.subr.mxu0 0.0
    %2798 = vmatpush1.msra.mxu0 %v724
    %2799 = vmatprep.subr.mxu0 0.0
    %2800 = vmatpush1.msra.mxu0 %v725
    %2801 = vmatprep.subr.mxu0 0.0
    %2802 = vmatpush1.msra.mxu0 %v726
    %2803 = vmatprep.subr.mxu0 0.0
    %2804 = vmatpush1.msra.mxu0 %v727
    %2805 = vmatprep.subr.mxu0 0.0
    %2806 = vmatpush1.msra.mxu0 %v728
    %2807 = vmatprep.subr.mxu0 0.0
    %2808 = vmatpush1.msra.mxu0 %v729
    %2809 = vmatprep.subr.mxu0 0.0
    %2810 = vmatpush1.msra.mxu0 %v730
    %2811 = vmatprep.subr.mxu0 0.0
    %2812 = vmatpush1.msra.mxu0 %v731
    %2813 = vmatprep.subr.mxu0 0.0
    %2814 = vmatpush1.msra.mxu0 %v732
    %2815 = vmatprep.subr.mxu0 0.0
    %2816 = vmatpush1.msra.mxu0 %v733
    %2817 = vmatprep.subr.mxu0 0.0
    %2818 = vmatpush1.msra.mxu0 %v734
    %2819 = vmatprep.subr.mxu0 0.0
    %2820 = vmatpush1.msra.mxu0 %v735
    %2821 = vmatprep.subr.mxu0 0.0
    %2822 = vmatpush1.msra.mxu0 %v736
    %2823 = vmatprep.subr.mxu0 0.0
    %2824 = vmatpush1.msra.mxu0 %v737
    %2825 = vmatprep.subr.mxu0 0.0
    %2826 = vmatpush1.msra.mxu0 %v738
    %2827 = vmatprep.subr.mxu0 0.0
    %2828 = vmatpush1.msra.mxu0 %v739
    %2829 = vmatprep.subr.mxu0 0.0
    %2830 = vmatpush1.msra.mxu0 %v740
    %2831 = vmatprep.subr.mxu0 0.0
    %2832 = vmatpush1.msra.mxu0 %v741
    %2833 = vmatprep.subr.mxu0 0.0
    %2834 = vmatpush1.msra.mxu0 %v742
    %2835 = vmatprep.subr.mxu0 0.0
    %2836 = vmatpush1.msra.mxu0 %v743
    %2837 = vmatprep.subr.mxu0 0.0
    %2838 = vmatpush1.msra.mxu0 %v744
    %2839 = vmatprep.subr.mxu0 0.0
    %2840 = vmatpush1.msra.mxu0 %v745
    %2841 = vmatprep.mubr.f32.mxu0 %v1308
    %2842 = vmatmul.mubr.f32.gmra.mrb[0].mxu0 %v1307
    %v2843 = vpop.f32.mrb[0].mxu0
    %v2844 = vadd.f32 %v2774, %v2843
    %v2845 = vpop.f32.mrb[0].mxu0
    %2846 = vdwg.mxu0
    %2847 = vmatprep.subr.mxu0 0.0
    %2848 = vmatpush1.msra.mxu0 %v746
    %2849 = vmatprep.subr.mxu0 0.0
    %2850 = vmatpush1.msra.mxu0 %v747
    %2851 = vmatprep.subr.mxu0 0.0
    %2852 = vmatpush1.msra.mxu0 %v748
    %2853 = vmatprep.subr.mxu0 0.0
    %2854 = vmatpush1.msra.mxu0 %v749
    %2855 = vmatprep.subr.mxu0 0.0
    %2856 = vmatpush1.msra.mxu0 %v750
    %2857 = vmatprep.subr.mxu0 0.0
    %2858 = vmatpush1.msra.mxu0 %v751
    %2859 = vmatprep.subr.mxu0 0.0
    %2860 = vmatpush1.msra.mxu0 %v752
    %2861 = vmatprep.subr.mxu0 0.0
    %2862 = vmatpush1.msra.mxu0 %v753
    %2863 = vmatprep.subr.mxu0 0.0
    %2864 = vmatpush1.msra.mxu0 %v754
    %2865 = vmatprep.subr.mxu0 0.0
    %2866 = vmatpush1.msra.mxu0 %v755
    %2867 = vmatprep.subr.mxu0 0.0
    %2868 = vmatpush1.msra.mxu0 %v756
    %2869 = vmatprep.subr.mxu0 0.0
    %2870 = vmatpush1.msra.mxu0 %v757
    %2871 = vmatprep.subr.mxu0 0.0
    %2872 = vmatpush1.msra.mxu0 %v758
    %2873 = vmatprep.subr.mxu0 0.0
    %2874 = vmatpush1.msra.mxu0 %v759
    %2875 = vmatprep.subr.mxu0 0.0
    %2876 = vmatpush1.msra.mxu0 %v760
    %2877 = vmatprep.subr.mxu0 0.0
    %2878 = vmatpush1.msra.mxu0 %v761
    %2879 = vmatprep.subr.mxu0 0.0
    %2880 = vmatpush1.msra.mxu0 %v762
    %2881 = vmatprep.subr.mxu0 0.0
    %2882 = vmatpush1.msra.mxu0 %v763
    %2883 = vmatprep.subr.mxu0 0.0
    %2884 = vmatpush1.msra.mxu0 %v764
    %2885 = vmatprep.subr.mxu0 0.0
    %2886 = vmatpush1.msra.mxu0 %v765
    %2887 = vmatprep.subr.mxu0 0.0
    %2888 = vmatpush1.msra.mxu0 %v766
    %2889 = vmatprep.subr.mxu0 0.0
    %2890 = vmatpush1.msra.mxu0 %v767
    %2891 = vmatprep.subr.mxu0 0.0
    %2892 = vmatpush1.msra.mxu0 %v768
    %2893 = vmatprep.subr.mxu0 0.0
    %2894 = vmatpush1.msra.mxu0 %v769
    %2895 = vmatprep.subr.mxu0 0.0
    %2896 = vmatpush1.msra.mxu0 %v770
    %2897 = vmatprep.subr.mxu0 0.0
    %2898 = vmatpush1.msra.mxu0 %v771
    %2899 = vmatprep.subr.mxu0 0.0
    %2900 = vmatpush1.msra.mxu0 %v772
    %2901 = vmatprep.subr.mxu0 0.0
    %2902 = vmatpush1.msra.mxu0 %v773
    %2903 = vmatprep.subr.mxu0 0.0
    %2904 = vmatpush1.msra.mxu0 %v774
    %2905 = vmatprep.subr.mxu0 0.0
    %2906 = vmatpush1.msra.mxu0 %v775
    %2907 = vmatprep.subr.mxu0 0.0
    %2908 = vmatpush1.msra.mxu0 %v776
    %2909 = vmatprep.subr.mxu0 0.0
    %2910 = vmatpush1.msra.mxu0 %v777
    %2911 = vmatprep.mubr.f32.mxu0 %v1342
    %2912 = vmatmul.mubr.f32.gmra.mrb[0].mxu0 %v1341
    %v2913 = vpop.f32.mrb[0].mxu0
    %v2914 = vadd.f32 %v2844, %v2913
    %v2915 = vpop.f32.mrb[0].mxu0
    %2916 = vdwg.mxu0
    %2917 = vmatprep.subr.mxu0 0.0
    %2918 = vmatpush1.msra.mxu0 %v778
    %2919 = vmatprep.subr.mxu0 0.0
    %2920 = vmatpush1.msra.mxu0 %v779
    %2921 = vmatprep.subr.mxu0 0.0
    %2922 = vmatpush1.msra.mxu0 %v780
    %2923 = vmatprep.subr.mxu0 0.0
    %2924 = vmatpush1.msra.mxu0 %v781
    %2925 = vmatprep.subr.mxu0 0.0
    %2926 = vmatpush1.msra.mxu0 %v782
    %2927 = vmatprep.subr.mxu0 0.0
    %2928 = vmatpush1.msra.mxu0 %v783
    %2929 = vmatprep.subr.mxu0 0.0
    %2930 = vmatpush1.msra.mxu0 %v784
    %2931 = vmatprep.subr.mxu0 0.0
    %2932 = vmatpush1.msra.mxu0 %v785
    %2933 = vmatprep.subr.mxu0 0.0
    %2934 = vmatpush1.msra.mxu0 %v786
    %2935 = vmatprep.subr.mxu0 0.0
    %2936 = vmatpush1.msra.mxu0 %v787
    %2937 = vmatprep.subr.mxu0 0.0
    %2938 = vmatpush1.msra.mxu0 %v788
    %2939 = vmatprep.subr.mxu0 0.0
    %2940 = vmatpush1.msra.mxu0 %v789
    %2941 = vmatprep.subr.mxu0 0.0
    %2942 = vmatpush1.msra.mxu0 %v790
    %2943 = vmatprep.subr.mxu0 0.0
    %2944 = vmatpush1.msra.mxu0 %v791
    %2945 = vmatprep.subr.mxu0 0.0
    %2946 = vmatpush1.msra.mxu0 %v792
    %2947 = vmatprep.subr.mxu0 0.0
    %2948 = vmatpush1.msra.mxu0 %v793
    %2949 = vmatprep.subr.mxu0 0.0
    %2950 = vmatpush1.msra.mxu0 %v794
    %2951 = vmatprep.subr.mxu0 0.0
    %2952 = vmatpush1.msra.mxu0 %v795
    %2953 = vmatprep.subr.mxu0 0.0
    %2954 = vmatpush1.msra.mxu0 %v796
    %2955 = vmatprep.subr.mxu0 0.0
    %2956 = vmatpush1.msra.mxu0 %v797
    %2957 = vmatprep.subr.mxu0 0.0
    %2958 = vmatpush1.msra.mxu0 %v798
    %2959 = vmatprep.subr.mxu0 0.0
    %2960 = vmatpush1.msra.mxu0 %v799
    %2961 = vmatprep.subr.mxu0 0.0
    %2962 = vmatpush1.msra.mxu0 %v800
    %2963 = vmatprep.subr.mxu0 0.0
    %2964 = vmatpush1.msra.mxu0 %v801
    %2965 = vmatprep.subr.mxu0 0.0
    %2966 = vmatpush1.msra.mxu0 %v802
    %2967 = vmatprep.subr.mxu0 0.0
    %2968 = vmatpush1.msra.mxu0 %v803
    %2969 = vmatprep.subr.mxu0 0.0
    %2970 = vmatpush1.msra.mxu0 %v804
    %2971 = vmatprep.subr.mxu0 0.0
    %2972 = vmatpush1.msra.mxu0 %v805
    %2973 = vmatprep.subr.mxu0 0.0
    %2974 = vmatpush1.msra.mxu0 %v806
    %2975 = vmatprep.subr.mxu0 0.0
    %2976 = vmatpush1.msra.mxu0 %v807
    %2977 = vmatprep.subr.mxu0 0.0
    %2978 = vmatpush1.msra.mxu0 %v808
    %2979 = vmatprep.subr.mxu0 0.0
    %2980 = vmatpush1.msra.mxu0 %v809
    %2981 = vmatprep.mubr.f32.mxu0 %v1344
    %2982 = vmatmul.mubr.f32.gmra.mrb[0].mxu0 %v1343
    %v2983 = vpop.f32.mrb[0].mxu0
    %v2984 = vadd.f32 %v2914, %v2983
    %v2985 = vpop.f32.mrb[0].mxu0
    %2986 = vdwg.mxu0
    %2987 = vmatprep.subr.mxu0 0.0
    %2988 = vmatpush1.msra.mxu0 %v810
    %2989 = vmatprep.subr.mxu0 0.0
    %2990 = vmatpush1.msra.mxu0 %v811
    %2991 = vmatprep.subr.mxu0 0.0
    %2992 = vmatpush1.msra.mxu0 %v812
    %2993 = vmatprep.subr.mxu0 0.0
    %2994 = vmatpush1.msra.mxu0 %v813
    %2995 = vmatprep.subr.mxu0 0.0
    %2996 = vmatpush1.msra.mxu0 %v814
    %2997 = vmatprep.subr.mxu0 0.0
    %2998 = vmatpush1.msra.mxu0 %v815
    %2999 = vmatprep.subr.mxu0 0.0
    %3000 = vmatpush1.msra.mxu0 %v816
    %3001 = vmatprep.subr.mxu0 0.0
    %3002 = vmatpush1.msra.mxu0 %v817
    %3003 = vmatprep.subr.mxu0 0.0
    %3004 = vmatpush1.msra.mxu0 %v818
    %3005 = vmatprep.subr.mxu0 0.0
    %3006 = vmatpush1.msra.mxu0 %v819
    %3007 = vmatprep.subr.mxu0 0.0
    %3008 = vmatpush1.msra.mxu0 %v820
    %3009 = vmatprep.subr.mxu0 0.0
    %3010 = vmatpush1.msra.mxu0 %v821
    %3011 = vmatprep.subr.mxu0 0.0
    %3012 = vmatpush1.msra.mxu0 %v822
    %3013 = vmatprep.subr.mxu0 0.0
    %3014 = vmatpush1.msra.mxu0 %v823
    %3015 = vmatprep.subr.mxu0 0.0
    %3016 = vmatpush1.msra.mxu0 %v824
    %3017 = vmatprep.subr.mxu0 0.0
    %3018 = vmatpush1.msra.mxu0 %v825
    %3019 = vmatprep.subr.mxu0 0.0
    %3020 = vmatpush1.msra.mxu0 %v826
    %3021 = vmatprep.subr.mxu0 0.0
    %3022 = vmatpush1.msra.mxu0 %v827
    %3023 = vmatprep.subr.mxu0 0.0
    %3024 = vmatpush1.msra.mxu0 %v828
    %3025 = vmatprep.subr.mxu0 0.0
    %3026 = vmatpush1.msra.mxu0 %v829
    %3027 = vmatprep.subr.mxu0 0.0
    %3028 = vmatpush1.msra.mxu0 %v830
    %3029 = vmatprep.subr.mxu0 0.0
    %3030 = vmatpush1.msra.mxu0 %v831
    %3031 = vmatprep.subr.mxu0 0.0
    %3032 = vmatpush1.msra.mxu0 %v832
    %3033 = vmatprep.subr.mxu0 0.0
    %3034 = vmatpush1.msra.mxu0 %v833
    %3035 = vmatprep.subr.mxu0 0.0
    %3036 = vmatpush1.msra.mxu0 %v834
    %3037 = vmatprep.subr.mxu0 0.0
    %3038 = vmatpush1.msra.mxu0 %v835
    %3039 = vmatprep.subr.mxu0 0.0
    %3040 = vmatpush1.msra.mxu0 %v836
    %3041 = vmatprep.subr.mxu0 0.0
    %3042 = vmatpush1.msra.mxu0 %v837
    %3043 = vmatprep.subr.mxu0 0.0
    %3044 = vmatpush1.msra.mxu0 %v838
    %3045 = vmatprep.subr.mxu0 0.0
    %3046 = vmatpush1.msra.mxu0 %v839
    %3047 = vmatprep.subr.mxu0 0.0
    %3048 = vmatpush1.msra.mxu0 %v840
    %3049 = vmatprep.subr.mxu0 0.0
    %3050 = vmatpush1.msra.mxu0 %v841
    %3051 = vmatprep.mubr.f32.mxu0 %v1378
    %3052 = vmatmul.mubr.f32.gmra.mrb[0].mxu0 %v1377
    %v3053 = vpop.f32.mrb[0].mxu0
    %v3054 = vadd.f32 %v2984, %v3053
    %v3055 = vpop.f32.mrb[0].mxu0
    %3056 = vdwg.mxu0
    %3057 = vmatprep.subr.mxu0 0.0
    %3058 = vmatpush1.msra.mxu0 %v842
    %3059 = vmatprep.subr.mxu0 0.0
    %3060 = vmatpush1.msra.mxu0 %v843
    %3061 = vmatprep.subr.mxu0 0.0
    %3062 = vmatpush1.msra.mxu0 %v844
    %3063 = vmatprep.subr.mxu0 0.0
    %3064 = vmatpush1.msra.mxu0 %v845
    %3065 = vmatprep.subr.mxu0 0.0
    %3066 = vmatpush1.msra.mxu0 %v846
    %3067 = vmatprep.subr.mxu0 0.0
    %3068 = vmatpush1.msra.mxu0 %v847
    %3069 = vmatprep.subr.mxu0 0.0
    %3070 = vmatpush1.msra.mxu0 %v848
    %3071 = vmatprep.subr.mxu0 0.0
    %3072 = vmatpush1.msra.mxu0 %v849
    %3073 = vmatprep.subr.mxu0 0.0
    %3074 = vmatpush1.msra.mxu0 %v850
    %3075 = vmatprep.subr.mxu0 0.0
    %3076 = vmatpush1.msra.mxu0 %v851
    %3077 = vmatprep.subr.mxu0 0.0
    %3078 = vmatpush1.msra.mxu0 %v852
    %3079 = vmatprep.subr.mxu0 0.0
    %3080 = vmatpush1.msra.mxu0 %v853
    %3081 = vmatprep.subr.mxu0 0.0
    %3082 = vmatpush1.msra.mxu0 %v854
    %3083 = vmatprep.subr.mxu0 0.0
    %3084 = vmatpush1.msra.mxu0 %v855
    %3085 = vmatprep.subr.mxu0 0.0
    %3086 = vmatpush1.msra.mxu0 %v856
    %3087 = vmatprep.subr.mxu0 0.0
    %3088 = vmatpush1.msra.mxu0 %v857
    %3089 = vmatprep.subr.mxu0 0.0
    %3090 = vmatpush1.msra.mxu0 %v858
    %3091 = vmatprep.subr.mxu0 0.0
    %3092 = vmatpush1.msra.mxu0 %v859
    %3093 = vmatprep.subr.mxu0 0.0
    %3094 = vmatpush1.msra.mxu0 %v860
    %3095 = vmatprep.subr.mxu0 0.0
    %3096 = vmatpush1.msra.mxu0 %v861
    %3097 = vmatprep.subr.mxu0 0.0
    %3098 = vmatpush1.msra.mxu0 %v862
    %3099 = vmatprep.subr.mxu0 0.0
    %3100 = vmatpush1.msra.mxu0 %v863
    %3101 = vmatprep.subr.mxu0 0.0
    %3102 = vmatpush1.msra.mxu0 %v864
    %3103 = vmatprep.subr.mxu0 0.0
    %3104 = vmatpush1.msra.mxu0 %v865
    %3105 = vmatprep.subr.mxu0 0.0
    %3106 = vmatpush1.msra.mxu0 %v866
    %3107 = vmatprep.subr.mxu0 0.0
    %3108 = vmatpush1.msra.mxu0 %v867
    %3109 = vmatprep.subr.mxu0 0.0
    %3110 = vmatpush1.msra.mxu0 %v868
    %3111 = vmatprep.subr.mxu0 0.0
    %3112 = vmatpush1.msra.mxu0 %v869
    %3113 = vmatprep.subr.mxu0 0.0
    %3114 = vmatpush1.msra.mxu0 %v870
    %3115 = vmatprep.subr.mxu0 0.0
    %3116 = vmatpush1.msra.mxu0 %v871
    %3117 = vmatprep.subr.mxu0 0.0
    %3118 = vmatpush1.msra.mxu0 %v872
    %3119 = vmatprep.subr.mxu0 0.0
    %3120 = vmatpush1.msra.mxu0 %v873
    %3121 = vmatprep.mubr.f32.mxu0 %v1380
    %3122 = vmatmul.mubr.f32.gmra.mrb[0].mxu0 %v1379
    %v3123 = vpop.f32.mrb[0].mxu0
    %v3124 = vadd.f32 %v3054, %v3123
    %v3125 = vpop.f32.mrb[0].mxu0
    %3126 = vdwg.mxu0
    %3127 = vmatprep.subr.mxu0 0.0
    %3128 = vmatpush1.msra.mxu0 %v874
    %3129 = vmatprep.subr.mxu0 0.0
    %3130 = vmatpush1.msra.mxu0 %v875
    %3131 = vmatprep.subr.mxu0 0.0
    %3132 = vmatpush1.msra.mxu0 %v876
    %3133 = vmatprep.subr.mxu0 0.0
    %3134 = vmatpush1.msra.mxu0 %v877
    %3135 = vmatprep.subr.mxu0 0.0
    %3136 = vmatpush1.msra.mxu0 %v878
    %3137 = vmatprep.subr.mxu0 0.0
    %3138 = vmatpush1.msra.mxu0 %v879
    %3139 = vmatprep.subr.mxu0 0.0
    %3140 = vmatpush1.msra.mxu0 %v880
    %3141 = vmatprep.subr.mxu0 0.0
    %3142 = vmatpush1.msra.mxu0 %v881
    %3143 = vmatprep.subr.mxu0 0.0
    %3144 = vmatpush1.msra.mxu0 %v882
    %3145 = vmatprep.subr.mxu0 0.0
    %3146 = vmatpush1.msra.mxu0 %v883
    %3147 = vmatprep.subr.mxu0 0.0
    %3148 = vmatpush1.msra.mxu0 %v884
    %3149 = vmatprep.subr.mxu0 0.0
    %3150 = vmatpush1.msra.mxu0 %v885
    %3151 = vmatprep.subr.mxu0 0.0
    %3152 = vmatpush1.msra.mxu0 %v886
    %3153 = vmatprep.subr.mxu0 0.0
    %3154 = vmatpush1.msra.mxu0 %v887
    %3155 = vmatprep.subr.mxu0 0.0
    %3156 = vmatpush1.msra.mxu0 %v888
    %3157 = vmatprep.subr.mxu0 0.0
    %3158 = vmatpush1.msra.mxu0 %v889
    %3159 = vmatprep.subr.mxu0 0.0
    %3160 = vmatpush1.msra.mxu0 0.0
    %3161 = vmatprep.subr.mxu0 0.0
    %3162 = vmatpush1.msra.mxu0 0.0
    %3163 = vmatprep.subr.mxu0 0.0
    %3164 = vmatpush1.msra.mxu0 0.0
    %3165 = vmatprep.subr.mxu0 0.0
    %3166 = vmatpush1.msra.mxu0 0.0
    %3167 = vmatprep.subr.mxu0 0.0
    %3168 = vmatpush1.msra.mxu0 0.0
    %3169 = vmatprep.subr.mxu0 0.0
    %3170 = vmatpush1.msra.mxu0 0.0
    %3171 = vmatprep.subr.mxu0 0.0
    %3172 = vmatpush1.msra.mxu0 0.0
    %3173 = vmatprep.subr.mxu0 0.0
    %3174 = vmatpush1.msra.mxu0 0.0
    %3175 = vmatprep.subr.mxu0 0.0
    %3176 = vmatpush1.msra.mxu0 0.0
    %3177 = vmatprep.subr.mxu0 0.0
    %3178 = vmatpush1.msra.mxu0 0.0
    %3179 = vmatprep.subr.mxu0 0.0
    %3180 = vmatpush1.msra.mxu0 0.0
    %3181 = vmatprep.subr.mxu0 0.0
    %3182 = vmatpush1.msra.mxu0 0.0
    %3183 = vmatprep.subr.mxu0 0.0
    %3184 = vmatpush1.msra.mxu0 0.0
    %3185 = vmatprep.subr.mxu0 0.0
    %3186 = vmatpush1.msra.mxu0 0.0
    %3187 = vmatprep.subr.mxu0 0.0
    %3188 = vmatpush1.msra.mxu0 0.0
    %3189 = vmatprep.subr.mxu0 0.0
    %3190 = vmatpush1.msra.mxu0 0.0
    %3191 = vmatprep.mubr.f32.mxu0 0.0
    %3192 = vmatmul.mubr.f32.gmra.mrb[0].mxu0 %v1397
    %v3193 = vpop.f32.mrb[0].mxu0
    %v3194 = vadd.f32 %v3124, %v3193
    %v3195 = vpop.f32.mrb[0].mxu0
    %3196 = vdwg.mxu0
    %3197 = vst [vmem:[#allocation8] sm:$0xff] %v3194
    // Predicated region
    $region26: #{tpu_custom_call.1} parent=1 // pred_check
      _
    $region27: #{tpu_custom_call.1} parent=1 // pred_check_branch
      %3199 = sbr.rel (0) target = $region29
    $region28: #{tpu_custom_call.1} parent=1 // pred_region
      %s3201 = ssub.s32 128, 32
      %3202 = vsyncadd [#allocation4], %s3201
      %s3203 = sshll.u32 [#allocation8], 4
      %s3204 = int_to_ptr.vmem [resolvable:$true] %s3203
      %3209 = dma.vmem_to_hbm [thread:$0]  %s3204, 32, %s3, [#allocation4], 32, 32, 2
    $region29: #{tpu_custom_call.1} parent=1 // pred_fallthru
      _
    // Predicated region
    $region30: #{tpu_custom_call.1} parent=1 // pred_check
      _
    $region31: #{tpu_custom_call.1} parent=1 // pred_check_branch
      %3211 = sbr.rel (0) target = $region33
    $region32: #{tpu_custom_call.1} parent=1 // pred_region
      %3212 = dma.done [#allocation4], 128
    $region33: #{tpu_custom_call.1} parent=1 // pred_fallthru
      _
    %3213 = vsyncpa [#allocation3], 1
    %3214 = vsyncpa [#allocation6], 1
    %3215 = vsyncpa [#allocation4], 1

</llo_original>
